<compile_context>
chip_gen: v6e
topology: v6e:2x2x1
jax: 0.10.0
libtpu: 0.0.40
codegen_flags: <defaults>
</compile_context>

<pallas_src>
import math

import jax
import jax.numpy as jnp
from jax.experimental import pallas as pl
from jax.experimental.pallas import tpu as pltpu

_EPS = 1e-5
_LANE = 128
_VMEM_LIMIT = 32 * 1024 * 1024  # explicit scoped-VMEM budget; safe on v5e / v6e / v7x


def _round_up(x, m):
    return ((x + m - 1) // m) * m


# ----------------------------- Pallas kernels ---------------------------------------


def _make_support_kernel(n_seg):
    """S_tile = sum_j seg_j_tile @ W_j  (weights resident in VMEM, rows streamed)."""

    def kernel(*refs):
        # refs = seg_0..seg_{n-1}, w_0..w_{n-1}, s_out
        s_ref = refs[-1]
        acc = jnp.dot(refs[0][...], refs[n_seg][...], preferred_element_type=jnp.float32)
        for j in range(1, n_seg):
            acc += jnp.dot(refs[j][...], refs[n_seg + j][...],
                           preferred_element_type=jnp.float32)
        s_ref[...] = acc.astype(s_ref.dtype)

    return kernel


def _propagate_stats_kernel(a_ref, s_ref, y_ref, stat_ref):
    """Y_tile = A_tile @ S (K-tiled, accumulate in the f32 output block) + partial BN stats."""
    k = pl.program_id(1)

    @pl.when(k == 0)
    def _init():
        y_ref[...] = jnp.zeros_like(y_ref)

    y_ref[...] += jnp.dot(a_ref[...], s_ref[...], preferred_element_type=jnp.float32)

    @pl.when(k == pl.num_programs(1) - 1)
    def _finalize():
        y = y_ref[...]
        ssum = jnp.sum(y, axis=0, keepdims=True)        # (1, Cp)
        ssq = jnp.sum(y * y, axis=0, keepdims=True)     # (1, Cp)
        stat_ref[0] = jnp.concatenate([ssum, ssq], axis=0)


def _make_bnrelu_support_kernel(n_prev):
    """H_tile = relu(Y_tile*scale+shift);  S_next_tile = sum_j seg_j@W_j + H@W_last (fused)."""
    n_w = n_prev + 1

    def kernel(*refs):
        # refs = seg_0..seg_{n_prev-1}, y, scale, shift, w_0..w_{n_prev}, h_out, s_out
        seg_refs = refs[:n_prev]
        y_ref = refs[n_prev]
        scale_ref = refs[n_prev + 1]
        shift_ref = refs[n_prev + 2]
        w_refs = refs[n_prev + 3:n_prev + 3 + n_w]
        h_ref, s_ref = refs[-2], refs[-1]

        h = jnp.maximum(y_ref[...] * scale_ref[...] + shift_ref[...], 0.0)
        h_act = h.astype(h_ref.dtype)
        h_ref[...] = h_act

        acc = jnp.dot(h_act, w_refs[n_prev][...], preferred_element_type=jnp.float32)
        for j in range(n_prev):
            acc += jnp.dot(seg_refs[j][...], w_refs[j][...],
                           preferred_element_type=jnp.float32)
        s_ref[...] = acc.astype(s_ref.dtype)

    return kernel


def _scale_shift_relu_kernel(y_ref, scale_ref, shift_ref, o_ref):
    o_ref[...] = jnp.maximum(
        y_ref[...] * scale_ref[...] + shift_ref[...], 0.0
    ).astype(o_ref.dtype)


# ----------------------------- pallas_call wrappers ----------------------------------


def _support(segments, w_segs, tile_r, act_dtype):
    r_pad = segments[0].shape[0]
    cp_out = w_segs[0].shape[1]
    n_seg = len(segments)
    in_specs = [pl.BlockSpec((tile_r, seg.shape[1]), lambda i: (i, 0)) for seg in segments]
    in_specs += [pl.BlockSpec(w.shape, lambda i: (0, 0)) for w in w_segs]
    return pl.pallas_call(
        _make_support_kernel(n_seg),
        out_shape=jax.ShapeDtypeStruct((r_pad, cp_out), act_dtype),
        grid=(r_pad // tile_r,),
        in_specs=in_specs,
        out_specs=pl.BlockSpec((tile_r, cp_out), lambda i: (i, 0)),
        compiler_params=pltpu.CompilerParams(
            dimension_semantics=("parallel",), vmem_limit_bytes=_VMEM_LIMIT),
    )(*segments, *w_segs)


def _propagate(adj, s, tile_r, tile_k):
    r_pad, cp_out = s.shape
    nr, nk = r_pad // tile_r, r_pad // tile_k
    y, pstats = pl.pallas_call(
        _propagate_stats_kernel,
        out_shape=(
            jax.ShapeDtypeStruct((r_pad, cp_out), jnp.float32),
            jax.ShapeDtypeStruct((nr, 2, cp_out), jnp.float32),
        ),
        grid=(nr, nk),
        in_specs=[
            pl.BlockSpec((tile_r, tile_k), lambda i, k: (i, k)),
            pl.BlockSpec((tile_k, cp_out), lambda i, k: (k, 0)),
        ],
        out_specs=(
            pl.BlockSpec((tile_r, cp_out), lambda i, k: (i, 0)),
            pl.BlockSpec((1, 2, cp_out), lambda i, k: (i, 0, 0)),
        ),
        compiler_params=pltpu.CompilerParams(
            dimension_semantics=("parallel", "arbitrary"),
            vmem_limit_bytes=_VMEM_LIMIT),
        cost_estimate=pl.CostEstimate(
            flops=2 * r_pad * r_pad * cp_out,
            transcendentals=0,
            bytes_accessed=int(adj.dtype.itemsize) * r_pad * r_pad
            + int(s.dtype.itemsize) * r_pad * cp_out
            + 4 * r_pad * cp_out),
    )(adj, s)
    return y, pstats


def _bnrelu_support(segments, y, scale, shift, w_segs, tile_r, act_dtype):
    r_pad, cp_l = y.shape
    cp_next = w_segs[0].shape[1]
    n_prev = len(segments)
    in_specs = [pl.BlockSpec((tile_r, seg.shape[1]), lambda i: (i, 0)) for seg in segments]
    in_specs += [
        pl.BlockSpec((tile_r, cp_l), lambda i: (i, 0)),
        pl.BlockSpec((1, cp_l), lambda i: (0, 0)),
        pl.BlockSpec((1, cp_l), lambda i: (0, 0)),
    ]
    in_specs += [pl.BlockSpec(w.shape, lambda i: (0, 0)) for w in w_segs]
    h, s_next = pl.pallas_call(
        _make_bnrelu_support_kernel(n_prev),
        out_shape=(
            jax.ShapeDtypeStruct((r_pad, cp_l), act_dtype),
            jax.ShapeDtypeStruct((r_pad, cp_next), act_dtype),
        ),
        grid=(r_pad // tile_r,),
        in_specs=in_specs,
        out_specs=(
            pl.BlockSpec((tile_r, cp_l), lambda i: (i, 0)),
            pl.BlockSpec((tile_r, cp_next), lambda i: (i, 0)),
        ),
        compiler_params=pltpu.CompilerParams(
            dimension_semantics=("parallel",), vmem_limit_bytes=_VMEM_LIMIT),
    )(*segments, y, scale, shift, *w_segs)
    return h, s_next


def _scale_shift_relu(y, scale, shift, tile_r, act_dtype):
    r_pad, cp_out = y.shape
    return pl.pallas_call(
        _scale_shift_relu_kernel,
        out_shape=jax.ShapeDtypeStruct((r_pad, cp_out), act_dtype),
        grid=(r_pad // tile_r,),
        in_specs=[
            pl.BlockSpec((tile_r, cp_out), lambda i: (i, 0)),
            pl.BlockSpec((1, cp_out), lambda i: (0, 0)),
            pl.BlockSpec((1, cp_out), lambda i: (0, 0)),
        ],
        out_specs=pl.BlockSpec((tile_r, cp_out), lambda i: (i, 0)),
        compiler_params=pltpu.CompilerParams(
            dimension_semantics=("parallel",), vmem_limit_bytes=_VMEM_LIMIT),
    )(y, scale, shift)


# ----------------------------- Parameters --------------------------------------------


def init_gcn_params(key, n_in, n_hid1, n_hid2, n_out):
    """GraphConvolution init: uniform(+-1/sqrt(out_features)); BN gamma=1, beta=0.
    Weights are pre-split per input segment and zero-padded to 128-lane multiples once.
    All metadata (real widths) is recovered from array shapes so params stay jit-friendly."""
    seg_widths = [n_in, n_hid1, n_hid2]
    out_dims = [n_hid1, n_hid2, n_out]
    layers = []
    for l in range(3):
        in_f = sum(seg_widths[: l + 1])
        out_f = out_dims[l]
        stdv = 1.0 / math.sqrt(out_f)
        key, kw = jax.random.split(key)
        w = jax.random.uniform(kw, (in_f, out_f), jnp.float32, -stdv, stdv)
        # GraphConvolution bias omitted: exactly cancelled by train-mode BN mean subtraction.
        cp_out = _round_up(out_f, _LANE)
        w_segs, off = [], 0
        for sw in seg_widths[: l + 1]:
            cp_seg = _round_up(sw, _LANE)
            wp = jnp.zeros((cp_seg, cp_out), jnp.float32).at[:sw, :out_f].set(w[off:off + sw])
            w_segs.append(wp)
            off += sw
        layers.append({
            "w_full": w,                                  # (in_f, out_f): reference + real out width
            "w_segs": w_segs,                             # lane-padded per-segment blocks
            "gamma": jnp.ones((1, cp_out), jnp.float32),
            "beta": jnp.zeros((1, cp_out), jnp.float32),
        })
    return layers


# ----------------------------- Forward ------------------------------------------------


def gcn_forward(params, xs, adj, *, row_tile=512, act_dtype=jnp.float32):
    """xs: (B, N, n_in) f32, adj: (B*N, B*N) dense f32. Returns (B, N, n_in+h1+h2+out)."""
    B, N, n_in = xs.shape
    R = B * N
    tile = min(row_tile, _round_up(R, _LANE))
    r_pad = _round_up(R, tile)

    # Pad rows to a multiple of the row tile and features to multiples of 128 lanes.
    cp_in = _round_up(n_in, _LANE)
    x_flat = xs.reshape(R, n_in).astype(act_dtype)          # torch.cat(tuple(xs), dim=0)
    x_pad = jnp.zeros((r_pad, cp_in), act_dtype).at[:R, :n_in].set(x_flat)
    adj_pad = jnp.zeros((r_pad, r_pad), act_dtype).at[:R, :R].set(adj.astype(act_dtype))

    n_layers = len(params)
    segments, seg_real = [x_pad], [n_in]

    # First layer's support (S1 = X @ W1); subsequent supports are fused into the bn+relu pass.
    s = _support(segments, [w.astype(act_dtype) for w in params[0]["w_segs"]], tile, act_dtype)

    for l, p in enumerate(params):
        y, pstats = _propagate(adj_pad, s, tile, tile)              # Y = A @ S (+ partial stats)
        stats = jnp.sum(pstats, axis=0)                             # exact sums over all rows
        mean = stats[0] / R
        var = jnp.maximum(stats[1] / R - mean * mean, 0.0)          # biased variance, clamped
        scale = p["gamma"] * jax.lax.rsqrt(var + _EPS)              # folded BN scale
        shift = p["beta"] - mean * scale                            # folded BN shift

        if l + 1 < n_layers:
            w_next = [w.astype(act_dtype) for w in params[l + 1]["w_segs"]]
            h, s = _bnrelu_support(segments, y, scale, shift, w_next, tile, act_dtype)
        else:
            h = _scale_shift_relu(y, scale, shift, tile, act_dtype)

        segments.append(h)
        seg_real.append(p["w_full"].shape[1])

    feats = jnp.concatenate([seg[:R, :w] for seg, w in zip(segments, seg_real)], axis=1)
    return feats.reshape(B, N, -1).astype(jnp.float32)


# ----------------------------- Pure-JAX reference & demo -------------------------------


def _reference_forward(params, xs, adj):
    B, N, _ = xs.shape
    h = xs.reshape(B * N, -1)
    for p in params:
        y = adj @ (h @ p["w_full"])
        mean = jnp.mean(y, axis=0)
        var = jnp.mean((y - mean) ** 2, axis=0)
        yhat = (y - mean) * jax.lax.rsqrt(var + _EPS)
        h = jnp.concatenate([h, jnp.maximum(yhat, 0.0)], axis=1)
    return h.reshape(B, N, -1)


def _make_block_diag_adj(key, B, N):
    adj = jnp.zeros((B * N, B * N), jnp.float32)
    for b in range(B):
        kb = jax.random.fold_in(key, b)
        m = (jax.random.uniform(kb, (N, N)) < 0.1).astype(jnp.float32)
        m = jnp.maximum(m, m.T) + jnp.eye(N, dtype=jnp.float32)
        m = m / jnp.sum(m, axis=1, keepdims=True)
        adj = adj.at[b * N:(b + 1) * N, b * N:(b + 1) * N].set(m)
    return adj


if __name__ == "__main__":
    key = jax.random.PRNGKey(0)
    k_param, k_x, k_adj = jax.random.split(key, 3)

    B, N = 2, 128                              # num_points = 128 in the original script
    n_in, n_hid1, n_hid2, n_out = 3, 32, 32, 64

    xs = jax.random.normal(k_x, (B, N, n_in), jnp.float32)
    adj = _make_block_diag_adj(k_adj, B, N)
    params = init_gcn_params(k_param, n_in, n_hid1, n_hid2, n_out)

    forward = jax.jit(gcn_forward)
    out = forward(params, xs, adj)
    out = jax.block_until_ready(out)

    assert out.shape == (B, N, n_in + n_hid1 + n_hid2 + n_out)
    assert bool(jnp.all(jnp.isfinite(out)))

    ref = _reference_forward(params, xs, adj)
    assert bool(jnp.allclose(out, ref, rtol=3e-2, atol=3e-2)), "mismatch vs pure-JAX reference"

    print("KERNEL_OK")
</pallas_src>

<mosaic_0001>
module attributes {stable_mosaic.version = 11 : i64} {
  func.func @kernel(%arg0: i32, %arg1: memref<256x128xf32, #tpu.memory_space<vmem>>, %arg2: memref<128x128xf32, #tpu.memory_space<vmem>>, %arg3: memref<256x128xf32, #tpu.memory_space<vmem>>) attributes {dimension_semantics = [#tpu.dimension_semantics<parallel>], iteration_bounds = array<i64: 1>, scalar_prefetch = 0 : i64, scratch_operands = 0 : i64, tpu.core_type = #tpu.core_type<tc>, window_params = [{transform_indices = @transform_0, window_bounds = array<i64: 256, 128>}, {pipeline_mode = #tpu.pipeline_mode<synchronous>, transform_indices = @transform_1, window_bounds = array<i64: 128, 128>}, {transform_indices = @transform_2, window_bounds = array<i64: 256, 128>}]} {
    %c0 = arith.constant 0 : index
    %c0_0 = arith.constant 0 : index
    %0 = vector.load %arg1[%c0, %c0_0] : memref<256x128xf32, #tpu.memory_space<vmem>>, vector<256x128xf32>
    %c0_1 = arith.constant 0 : index
    %c0_2 = arith.constant 0 : index
    %1 = vector.load %arg2[%c0_1, %c0_2] : memref<128x128xf32, #tpu.memory_space<vmem>>, vector<128x128xf32>
    %cst = arith.constant dense<0.000000e+00> : vector<256x128xf32>
    %2 = tpu.matmul %0, %1, %cst {dimension_numbers = #tpu.dot_dimension_numbers<[1], [0], [0], [1], [0, 0, 1, 1], [], []>} : vector<256x128xf32>, vector<128x128xf32>, vector<256x128xf32> -> vector<256x128xf32>
    %c0_3 = arith.constant 0 : index
    %c0_4 = arith.constant 0 : index
    %3 = vector.load %arg3[%c0_3, %c0_4] : memref<256x128xf32, #tpu.memory_space<vmem>>, vector<256x128xf32>
    tpu.vector_store %arg3[%c0_3, %c0_4], %2 {strides = array<i32>} : memref<256x128xf32, #tpu.memory_space<vmem>>, vector<256x128xf32>,
    return
  }
  func.func @transform_0(%arg0: i32) -> (i32, i32) {
    %c0_i32 = arith.constant 0 : i32
    %c0_i32_0 = arith.constant 0 : i32
    return %arg0, %c0_i32 : i32, i32
  }
  func.func @transform_1(%arg0: i32) -> (i32, i32) {
    %c0_i32 = arith.constant 0 : i32
    %c0_i32_0 = arith.constant 0 : i32
    %c0_i32_1 = arith.constant 0 : i32
    return %c0_i32, %c0_i32_0 : i32, i32
  }
  func.func @transform_2(%arg0: i32) -> (i32, i32) {
    %c0_i32 = arith.constant 0 : i32
    %c0_i32_0 = arith.constant 0 : i32
    return %arg0, %c0_i32 : i32, i32
  }
}

module attributes {stable_mosaic.version = 11 : i64} {
  func.func @_propagate_stats_kernel(%arg0: i32, %arg1: i32, %arg2: memref<256x256xf32, #tpu.memory_space<vmem>>, %arg3: memref<256x128xf32, #tpu.memory_space<vmem>>, %arg4: memref<256x128xf32, #tpu.memory_space<vmem>>, %arg5: memref<1x2x128xf32, #tpu.memory_space<vmem>>) attributes {dimension_semantics = [#tpu.dimension_semantics<parallel>, #tpu.dimension_semantics<arbitrary>], iteration_bounds = array<i64: 1, 1>, scalar_prefetch = 0 : i64, scratch_operands = 0 : i64, tpu.core_type = #tpu.core_type<tc>, window_params = [{transform_indices = @transform_0, window_bounds = array<i64: 256, 256>}, {transform_indices = @transform_1, window_bounds = array<i64: 256, 128>}, {transform_indices = @transform_2, window_bounds = array<i64: 256, 128>}, {transform_indices = @transform_3, window_bounds = array<i64: 1, 2, 128>}]} {
    %c0_i32 = arith.constant 0 : i32
    %0 = arith.cmpi eq, %arg1, %c0_i32 : i32
    %1 = arith.extui %0 : i1 to i32
    %c0_i32_0 = arith.constant 0 : i32
    %2 = arith.cmpi ne, %1, %c0_i32_0 : i32
    scf.if %2 {
      %cst_10 = arith.constant 0.000000e+00 : f32
      %12 = vector.broadcast %cst_10 : f32 to vector<256x128xf32>
      %c0_11 = arith.constant 0 : index
      %c0_12 = arith.constant 0 : index
      %13 = vector.load %arg4[%c0_11, %c0_12] : memref<256x128xf32, #tpu.memory_space<vmem>>, vector<256x128xf32>
      tpu.vector_store %arg4[%c0_11, %c0_12], %12 {strides = array<i32>} : memref<256x128xf32, #tpu.memory_space<vmem>>, vector<256x128xf32>,
    } else {
    }
    %c0 = arith.constant 0 : index
    %c0_1 = arith.constant 0 : index
    %3 = vector.load %arg4[%c0, %c0_1] : memref<256x128xf32, #tpu.memory_space<vmem>>, vector<256x128xf32>
    %c0_2 = arith.constant 0 : index
    %c0_3 = arith.constant 0 : index
    %4 = vector.load %arg2[%c0_2, %c0_3] : memref<256x256xf32, #tpu.memory_space<vmem>>, vector<256x256xf32>
    %c0_4 = arith.constant 0 : index
    %c0_5 = arith.constant 0 : index
    %5 = vector.load %arg3[%c0_4, %c0_5] : memref<256x128xf32, #tpu.memory_space<vmem>>, vector<256x128xf32>
    %cst = arith.constant dense<0.000000e+00> : vector<256x128xf32>
    %6 = tpu.matmul %4, %5, %cst {dimension_numbers = #tpu.dot_dimension_numbers<[1], [0], [0], [1], [0, 0, 1, 1], [], []>} : vector<256x256xf32>, vector<256x128xf32>, vector<256x128xf32> -> vector<256x128xf32>
    %7 = arith.addf %3, %6 : vector<256x128xf32>
    %c0_6 = arith.constant 0 : index
    %c0_7 = arith.constant 0 : index
    %8 = vector.load %arg4[%c0_6, %c0_7] : memref<256x128xf32, #tpu.memory_space<vmem>>, vector<256x128xf32>
    tpu.vector_store %arg4[%c0_6, %c0_7], %7 {strides = array<i32>} : memref<256x128xf32, #tpu.memory_space<vmem>>, vector<256x128xf32>,
    %c0_i32_8 = arith.constant 0 : i32
    %9 = arith.cmpi eq, %arg1, %c0_i32_8 : i32
    %10 = arith.extui %9 : i1 to i32
    %c0_i32_9 = arith.constant 0 : i32
    %11 = arith.cmpi ne, %10, %c0_i32_9 : i32
    scf.if %11 {
      %c0_10 = arith.constant 0 : index
      %c0_11 = arith.constant 0 : index
      %12 = vector.load %arg4[%c0_10, %c0_11] : memref<256x128xf32, #tpu.memory_space<vmem>>, vector<256x128xf32>
      %cst_12 = arith.constant dense<0.000000e+00> : vector<128xf32>
      %13 = vector.multi_reduction <add>, %12, %cst_12 [0] : vector<256x128xf32> to vector<128xf32>
      %14 = vector.shape_cast %13 : vector<128xf32> to vector<1x128xf32>
      %15 = arith.mulf %12, %12 : vector<256x128xf32>
      %cst_13 = arith.constant dense<0.000000e+00> : vector<128xf32>
      %16 = vector.multi_reduction <add>, %15, %cst_13 [0] : vector<256x128xf32> to vector<128xf32>
      %17 = vector.shape_cast %16 : vector<128xf32> to vector<1x128xf32>
      %18 = tpu.concatenate %14, %17 in 0 : vector<1x128xf32>, vector<1x128xf32> -> vector<2x128xf32>
      %c0_14 = arith.constant 0 : index
      %c0_15 = arith.constant 0 : index
      %c0_16 = arith.constant 0 : index
      %19 = vector.load %arg5[%c0_14, %c0_15, %c0_16] : memref<1x2x128xf32, #tpu.memory_space<vmem>>, vector<1x2x128xf32>
      %20 = vector.shape_cast %19 : vector<1x2x128xf32> to vector<2x128xf32>
      %21 = vector.shape_cast %18 : vector<2x128xf32> to vector<1x2x128xf32>
      tpu.vector_store %arg5[%c0_14, %c0_15, %c0_16], %21 {strides = array<i32>} : memref<1x2x128xf32, #tpu.memory_space<vmem>>, vector<1x2x128xf32>,
    } else {
    }
    return
  }
  func.func @transform_0(%arg0: i32, %arg1: i32) -> (i32, i32) {
    %c0_i32 = arith.constant 0 : i32
    return %arg0, %arg1 : i32, i32
  }
  func.func @transform_1(%arg0: i32, %arg1: i32) -> (i32, i32) {
    %c0_i32 = arith.constant 0 : i32
    %c0_i32_0 = arith.constant 0 : i32
    return %arg1, %c0_i32 : i32, i32
  }
  func.func @transform_2(%arg0: i32, %arg1: i32) -> (i32, i32) {
    %c0_i32 = arith.constant 0 : i32
    %c0_i32_0 = arith.constant 0 : i32
    return %arg0, %c0_i32 : i32, i32
  }
  func.func @transform_3(%arg0: i32, %arg1: i32) -> (i32, i32, i32) {
    %c0_i32 = arith.constant 0 : i32
    %c0_i32_0 = arith.constant 0 : i32
    %c0_i32_1 = arith.constant 0 : i32
    return %arg0, %c0_i32, %c0_i32_0 : i32, i32, i32
  }
}

module attributes {stable_mosaic.version = 11 : i64} {
  func.func @kernel(%arg0: i32, %arg1: memref<256x128xf32, #tpu.memory_space<vmem>>, %arg2: memref<256x128xf32, #tpu.memory_space<vmem>>, %arg3: memref<1x128xf32, #tpu.memory_space<vmem>>, %arg4: memref<1x128xf32, #tpu.memory_space<vmem>>, %arg5: memref<128x128xf32, #tpu.memory_space<vmem>>, %arg6: memref<128x128xf32, #tpu.memory_space<vmem>>, %arg7: memref<256x128xf32, #tpu.memory_space<vmem>>, %arg8: memref<256x128xf32, #tpu.memory_space<vmem>>) attributes {dimension_semantics = [#tpu.dimension_semantics<parallel>], iteration_bounds = array<i64: 1>, scalar_prefetch = 0 : i64, scratch_operands = 0 : i64, tpu.core_type = #tpu.core_type<tc>, window_params = [{transform_indices = @transform_0, window_bounds = array<i64: 256, 128>}, {transform_indices = @transform_1, window_bounds = array<i64: 256, 128>}, {pipeline_mode = #tpu.pipeline_mode<synchronous>, transform_indices = @transform_2, window_bounds = array<i64: 1, 128>}, {pipeline_mode = #tpu.pipeline_mode<synchronous>, transform_indices = @transform_3, window_bounds = array<i64: 1, 128>}, {pipeline_mode = #tpu.pipeline_mode<synchronous>, transform_indices = @transform_4, window_bounds = array<i64: 128, 128>}, {pipeline_mode = #tpu.pipeline_mode<synchronous>, transform_indices = @transform_5, window_bounds = array<i64: 128, 128>}, {transform_indices = @transform_6, window_bounds = array<i64: 256, 128>}, {transform_indices = @transform_7, window_bounds = array<i64: 256, 128>}]} {
    %c0 = arith.constant 0 : index
    %c0_0 = arith.constant 0 : index
    %0 = vector.load %arg2[%c0, %c0_0] : memref<256x128xf32, #tpu.memory_space<vmem>>, vector<256x128xf32>
    %c0_1 = arith.constant 0 : index
    %c0_2 = arith.constant 0 : index
    %1 = vector.load %arg3[%c0_1, %c0_2] : memref<1x128xf32, #tpu.memory_space<vmem>>, vector<1x128xf32>
    %2 = vector.broadcast %1 : vector<1x128xf32> to vector<256x128xf32>
    %3 = arith.mulf %0, %2 : vector<256x128xf32>
    %c0_3 = arith.constant 0 : index
    %c0_4 = arith.constant 0 : index
    %4 = vector.load %arg4[%c0_3, %c0_4] : memref<1x128xf32, #tpu.memory_space<vmem>>, vector<1x128xf32>
    %5 = vector.broadcast %4 : vector<1x128xf32> to vector<256x128xf32>
    %6 = arith.addf %3, %5 : vector<256x128xf32>
    %cst = arith.constant 0.000000e+00 : f32
    %7 = vector.broadcast %cst : f32 to vector<256x128xf32>
    %8 = arith.maximumf %6, %7 : vector<256x128xf32>
    %c0_5 = arith.constant 0 : index
    %c0_6 = arith.constant 0 : index
    %9 = vector.load %arg7[%c0_5, %c0_6] : memref<256x128xf32, #tpu.memory_space<vmem>>, vector<256x128xf32>
    tpu.vector_store %arg7[%c0_5, %c0_6], %8 {strides = array<i32>} : memref<256x128xf32, #tpu.memory_space<vmem>>, vector<256x128xf32>,
    %c0_7 = arith.constant 0 : index
    %c0_8 = arith.constant 0 : index
    %10 = vector.load %arg6[%c0_7, %c0_8] : memref<128x128xf32, #tpu.memory_space<vmem>>, vector<128x128xf32>
    %cst_9 = arith.constant dense<0.000000e+00> : vector<256x128xf32>
    %11 = tpu.matmul %8, %10, %cst_9 {dimension_numbers = #tpu.dot_dimension_numbers<[1], [0], [0], [1], [0, 0, 1, 1], [], []>} : vector<256x128xf32>, vector<128x128xf32>, vector<256x128xf32> -> vector<256x128xf32>
    %c0_10 = arith.constant 0 : index
    %c0_11 = arith.constant 0 : index
    %12 = vector.load %arg1[%c0_10, %c0_11] : memref<256x128xf32, #tpu.memory_space<vmem>>, vector<256x128xf32>
    %c0_12 = arith.constant 0 : index
    %c0_13 = arith.constant 0 : index
    %13 = vector.load %arg5[%c0_12, %c0_13] : memref<128x128xf32, #tpu.memory_space<vmem>>, vector<128x128xf32>
    %cst_14 = arith.constant dense<0.000000e+00> : vector<256x128xf32>
    %14 = tpu.matmul %12, %13, %cst_14 {dimension_numbers = #tpu.dot_dimension_numbers<[1], [0], [0], [1], [0, 0, 1, 1], [], []>} : vector<256x128xf32>, vector<128x128xf32>, vector<256x128xf32> -> vector<256x128xf32>
    %15 = arith.addf %11, %14 : vector<256x128xf32>
    %c0_15 = arith.constant 0 : index
    %c0_16 = arith.constant 0 : index
    %16 = vector.load %arg8[%c0_15, %c0_16] : memref<256x128xf32, #tpu.memory_space<vmem>>, vector<256x128xf32>
    tpu.vector_store %arg8[%c0_15, %c0_16], %15 {strides = array<i32>} : memref<256x128xf32, #tpu.memory_space<vmem>>, vector<256x128xf32>,
    return
  }
  func.func @transform_0(%arg0: i32) -> (i32, i32) {
    %c0_i32 = arith.constant 0 : i32
    %c0_i32_0 = arith.constant 0 : i32
    return %arg0, %c0_i32 : i32, i32
  }
  func.func @transform_1(%arg0: i32) -> (i32, i32) {
    %c0_i32 = arith.constant 0 : i32
    %c0_i32_0 = arith.constant 0 : i32
    return %arg0, %c0_i32 : i32, i32
  }
  func.func @transform_2(%arg0: i32) -> (i32, i32) {
    %c0_i32 = arith.constant 0 : i32
    %c0_i32_0 = arith.constant 0 : i32
    %c0_i32_1 = arith.constant 0 : i32
    return %c0_i32, %c0_i32_0 : i32, i32
  }
  func.func @transform_3(%arg0: i32) -> (i32, i32) {
    %c0_i32 = arith.constant 0 : i32
    %c0_i32_0 = arith.constant 0 : i32
    %c0_i32_1 = arith.constant 0 : i32
    return %c0_i32, %c0_i32_0 : i32, i32
  }
  func.func @transform_4(%arg0: i32) -> (i32, i32) {
    %c0_i32 = arith.constant 0 : i32
    %c0_i32_0 = arith.constant 0 : i32
    %c0_i32_1 = arith.constant 0 : i32
    return %c0_i32, %c0_i32_0 : i32, i32
  }
  func.func @transform_5(%arg0: i32) -> (i32, i32) {
    %c0_i32 = arith.constant 0 : i32
    %c0_i32_0 = arith.constant 0 : i32
    %c0_i32_1 = arith.constant 0 : i32
    return %c0_i32, %c0_i32_0 : i32, i32
  }
  func.func @transform_6(%arg0: i32) -> (i32, i32) {
    %c0_i32 = arith.constant 0 : i32
    %c0_i32_0 = arith.constant 0 : i32
    return %arg0, %c0_i32 : i32, i32
  }
  func.func @transform_7(%arg0: i32) -> (i32, i32) {
    %c0_i32 = arith.constant 0 : i32
    %c0_i32_0 = arith.constant 0 : i32
    return %arg0, %c0_i32 : i32, i32
  }
}

module attributes {stable_mosaic.version = 11 : i64} {
  func.func @kernel(%arg0: i32, %arg1: memref<256x128xf32, #tpu.memory_space<vmem>>, %arg2: memref<256x128xf32, #tpu.memory_space<vmem>>, %arg3: memref<256x128xf32, #tpu.memory_space<vmem>>, %arg4: memref<1x128xf32, #tpu.memory_space<vmem>>, %arg5: memref<1x128xf32, #tpu.memory_space<vmem>>, %arg6: memref<128x128xf32, #tpu.memory_space<vmem>>, %arg7: memref<128x128xf32, #tpu.memory_space<vmem>>, %arg8: memref<128x128xf32, #tpu.memory_space<vmem>>, %arg9: memref<256x128xf32, #tpu.memory_space<vmem>>, %arg10: memref<256x128xf32, #tpu.memory_space<vmem>>) attributes {dimension_semantics = [#tpu.dimension_semantics<parallel>], iteration_bounds = array<i64: 1>, scalar_prefetch = 0 : i64, scratch_operands = 0 : i64, tpu.core_type = #tpu.core_type<tc>, window_params = [{transform_indices = @transform_0, window_bounds = array<i64: 256, 128>}, {transform_indices = @transform_1, window_bounds = array<i64: 256, 128>}, {transform_indices = @transform_2, window_bounds = array<i64: 256, 128>}, {pipeline_mode = #tpu.pipeline_mode<synchronous>, transform_indices = @transform_3, window_bounds = array<i64: 1, 128>}, {pipeline_mode = #tpu.pipeline_mode<synchronous>, transform_indices = @transform_4, window_bounds = array<i64: 1, 128>}, {pipeline_mode = #tpu.pipeline_mode<synchronous>, transform_indices = @transform_5, window_bounds = array<i64: 128, 128>}, {pipeline_mode = #tpu.pipeline_mode<synchronous>, transform_indices = @transform_6, window_bounds = array<i64: 128, 128>}, {pipeline_mode = #tpu.pipeline_mode<synchronous>, transform_indices = @transform_7, window_bounds = array<i64: 128, 128>}, {transform_indices = @transform_8, window_bounds = array<i64: 256, 128>}, {transform_indices = @transform_9, window_bounds = array<i64: 256, 128>}]} {
    %c0 = arith.constant 0 : index
    %c0_0 = arith.constant 0 : index
    %0 = vector.load %arg3[%c0, %c0_0] : memref<256x128xf32, #tpu.memory_space<vmem>>, vector<256x128xf32>
    %c0_1 = arith.constant 0 : index
    %c0_2 = arith.constant 0 : index
    %1 = vector.load %arg4[%c0_1, %c0_2] : memref<1x128xf32, #tpu.memory_space<vmem>>, vector<1x128xf32>
    %2 = vector.broadcast %1 : vector<1x128xf32> to vector<256x128xf32>
    %3 = arith.mulf %0, %2 : vector<256x128xf32>
    %c0_3 = arith.constant 0 : index
    %c0_4 = arith.constant 0 : index
    %4 = vector.load %arg5[%c0_3, %c0_4] : memref<1x128xf32, #tpu.memory_space<vmem>>, vector<1x128xf32>
    %5 = vector.broadcast %4 : vector<1x128xf32> to vector<256x128xf32>
    %6 = arith.addf %3, %5 : vector<256x128xf32>
    %cst = arith.constant 0.000000e+00 : f32
    %7 = vector.broadcast %cst : f32 to vector<256x128xf32>
    %8 = arith.maximumf %6, %7 : vector<256x128xf32>
    %c0_5 = arith.constant 0 : index
    %c0_6 = arith.constant 0 : index
    %9 = vector.load %arg9[%c0_5, %c0_6] : memref<256x128xf32, #tpu.memory_space<vmem>>, vector<256x128xf32>
    tpu.vector_store %arg9[%c0_5, %c0_6], %8 {strides = array<i32>} : memref<256x128xf32, #tpu.memory_space<vmem>>, vector<256x128xf32>,
    %c0_7 = arith.constant 0 : index
    %c0_8 = arith.constant 0 : index
    %10 = vector.load %arg8[%c0_7, %c0_8] : memref<128x128xf32, #tpu.memory_space<vmem>>, vector<128x128xf32>
    %cst_9 = arith.constant dense<0.000000e+00> : vector<256x128xf32>
    %11 = tpu.matmul %8, %10, %cst_9 {dimension_numbers = #tpu.dot_dimension_numbers<[1], [0], [0], [1], [0, 0, 1, 1], [], []>} : vector<256x128xf32>, vector<128x128xf32>, vector<256x128xf32> -> vector<256x128xf32>
    %c0_10 = arith.constant 0 : index
    %c0_11 = arith.constant 0 : index
    %12 = vector.load %arg1[%c0_10, %c0_11] : memref<256x128xf32, #tpu.memory_space<vmem>>, vector<256x128xf32>
    %c0_12 = arith.constant 0 : index
    %c0_13 = arith.constant 0 : index
    %13 = vector.load %arg6[%c0_12, %c0_13] : memref<128x128xf32, #tpu.memory_space<vmem>>, vector<128x128xf32>
    %cst_14 = arith.constant dense<0.000000e+00> : vector<256x128xf32>
    %14 = tpu.matmul %12, %13, %cst_14 {dimension_numbers = #tpu.dot_dimension_numbers<[1], [0], [0], [1], [0, 0, 1, 1], [], []>} : vector<256x128xf32>, vector<128x128xf32>, vector<256x128xf32> -> vector<256x128xf32>
    %15 = arith.addf %11, %14 : vector<256x128xf32>
    %c0_15 = arith.constant 0 : index
    %c0_16 = arith.constant 0 : index
    %16 = vector.load %arg2[%c0_15, %c0_16] : memref<256x128xf32, #tpu.memory_space<vmem>>, vector<256x128xf32>
    %c0_17 = arith.constant 0 : index
    %c0_18 = arith.constant 0 : index
    %17 = vector.load %arg7[%c0_17, %c0_18] : memref<128x128xf32, #tpu.memory_space<vmem>>, vector<128x128xf32>
    %cst_19 = arith.constant dense<0.000000e+00> : vector<256x128xf32>
    %18 = tpu.matmul %16, %17, %cst_19 {dimension_numbers = #tpu.dot_dimension_numbers<[1], [0], [0], [1], [0, 0, 1, 1], [], []>} : vector<256x128xf32>, vector<128x128xf32>, vector<256x128xf32> -> vector<256x128xf32>
    %19 = arith.addf %15, %18 : vector<256x128xf32>
    %c0_20 = arith.constant 0 : index
    %c0_21 = arith.constant 0 : index
    %20 = vector.load %arg10[%c0_20, %c0_21] : memref<256x128xf32, #tpu.memory_space<vmem>>, vector<256x128xf32>
    tpu.vector_store %arg10[%c0_20, %c0_21], %19 {strides = array<i32>} : memref<256x128xf32, #tpu.memory_space<vmem>>, vector<256x128xf32>,
    return
  }
  func.func @transform_0(%arg0: i32) -> (i32, i32) {
    %c0_i32 = arith.constant 0 : i32
    %c0_i32_0 = arith.constant 0 : i32
    return %arg0, %c0_i32 : i32, i32
  }
  func.func @transform_1(%arg0: i32) -> (i32, i32) {
    %c0_i32 = arith.constant 0 : i32
    %c0_i32_0 = arith.constant 0 : i32
    return %arg0, %c0_i32 : i32, i32
  }
  func.func @transform_2(%arg0: i32) -> (i32, i32) {
    %c0_i32 = arith.constant 0 : i32
    %c0_i32_0 = arith.constant 0 : i32
    return %arg0, %c0_i32 : i32, i32
  }
  func.func @transform_3(%arg0: i32) -> (i32, i32) {
    %c0_i32 = arith.constant 0 : i32
    %c0_i32_0 = arith.constant 0 : i32
    %c0_i32_1 = arith.constant 0 : i32
    return %c0_i32, %c0_i32_0 : i32, i32
  }
  func.func @transform_4(%arg0: i32) -> (i32, i32) {
    %c0_i32 = arith.constant 0 : i32
    %c0_i32_0 = arith.constant 0 : i32
    %c0_i32_1 = arith.constant 0 : i32
    return %c0_i32, %c0_i32_0 : i32, i32
  }
  func.func @transform_5(%arg0: i32) -> (i32, i32) {
    %c0_i32 = arith.constant 0 : i32
    %c0_i32_0 = arith.constant 0 : i32
    %c0_i32_1 = arith.constant 0 : i32
    return %c0_i32, %c0_i32_0 : i32, i32
  }
  func.func @transform_6(%arg0: i32) -> (i32, i32) {
    %c0_i32 = arith.constant 0 : i32
    %c0_i32_0 = arith.constant 0 : i32
    %c0_i32_1 = arith.constant 0 : i32
    return %c0_i32, %c0_i32_0 : i32, i32
  }
  func.func @transform_7(%arg0: i32) -> (i32, i32) {
    %c0_i32 = arith.constant 0 : i32
    %c0_i32_0 = arith.constant 0 : i32
    %c0_i32_1 = arith.constant 0 : i32
    return %c0_i32, %c0_i32_0 : i32, i32
  }
  func.func @transform_8(%arg0: i32) -> (i32, i32) {
    %c0_i32 = arith.constant 0 : i32
    %c0_i32_0 = arith.constant 0 : i32
    return %arg0, %c0_i32 : i32, i32
  }
  func.func @transform_9(%arg0: i32) -> (i32, i32) {
    %c0_i32 = arith.constant 0 : i32
    %c0_i32_0 = arith.constant 0 : i32
    return %arg0, %c0_i32 : i32, i32
  }
}

module attributes {stable_mosaic.version = 11 : i64} {
  func.func @_scale_shift_relu_kernel(%arg0: i32, %arg1: memref<256x128xf32, #tpu.memory_space<vmem>>, %arg2: memref<1x128xf32, #tpu.memory_space<vmem>>, %arg3: memref<1x128xf32, #tpu.memory_space<vmem>>, %arg4: memref<256x128xf32, #tpu.memory_space<vmem>>) attributes {dimension_semantics = [#tpu.dimension_semantics<parallel>], iteration_bounds = array<i64: 1>, scalar_prefetch = 0 : i64, scratch_operands = 0 : i64, tpu.core_type = #tpu.core_type<tc>, window_params = [{transform_indices = @transform_0, window_bounds = array<i64: 256, 128>}, {pipeline_mode = #tpu.pipeline_mode<synchronous>, transform_indices = @transform_1, window_bounds = array<i64: 1, 128>}, {pipeline_mode = #tpu.pipeline_mode<synchronous>, transform_indices = @transform_2, window_bounds = array<i64: 1, 128>}, {transform_indices = @transform_3, window_bounds = array<i64: 256, 128>}]} {
    %c0 = arith.constant 0 : index
    %c0_0 = arith.constant 0 : index
    %0 = vector.load %arg1[%c0, %c0_0] : memref<256x128xf32, #tpu.memory_space<vmem>>, vector<256x128xf32>
    %c0_1 = arith.constant 0 : index
    %c0_2 = arith.constant 0 : index
    %1 = vector.load %arg2[%c0_1, %c0_2] : memref<1x128xf32, #tpu.memory_space<vmem>>, vector<1x128xf32>
    %2 = vector.broadcast %1 : vector<1x128xf32> to vector<256x128xf32>
    %3 = arith.mulf %0, %2 : vector<256x128xf32>
    %c0_3 = arith.constant 0 : index
    %c0_4 = arith.constant 0 : index
    %4 = vector.load %arg3[%c0_3, %c0_4] : memref<1x128xf32, #tpu.memory_space<vmem>>, vector<1x128xf32>
    %5 = vector.broadcast %4 : vector<1x128xf32> to vector<256x128xf32>
    %6 = arith.addf %3, %5 : vector<256x128xf32>
    %cst = arith.constant 0.000000e+00 : f32
    %7 = vector.broadcast %cst : f32 to vector<256x128xf32>
    %8 = arith.maximumf %6, %7 : vector<256x128xf32>
    %c0_5 = arith.constant 0 : index
    %c0_6 = arith.constant 0 : index
    %9 = vector.load %arg4[%c0_5, %c0_6] : memref<256x128xf32, #tpu.memory_space<vmem>>, vector<256x128xf32>
    tpu.vector_store %arg4[%c0_5, %c0_6], %8 {strides = array<i32>} : memref<256x128xf32, #tpu.memory_space<vmem>>, vector<256x128xf32>,
    return
  }
  func.func @transform_0(%arg0: i32) -> (i32, i32) {
    %c0_i32 = arith.constant 0 : i32
    %c0_i32_0 = arith.constant 0 : i32
    return %arg0, %c0_i32 : i32, i32
  }
  func.func @transform_1(%arg0: i32) -> (i32, i32) {
    %c0_i32 = arith.constant 0 : i32
    %c0_i32_0 = arith.constant 0 : i32
    %c0_i32_1 = arith.constant 0 : i32
    return %c0_i32, %c0_i32_0 : i32, i32
  }
  func.func @transform_2(%arg0: i32) -> (i32, i32) {
    %c0_i32 = arith.constant 0 : i32
    %c0_i32_0 = arith.constant 0 : i32
    %c0_i32_1 = arith.constant 0 : i32
    return %c0_i32, %c0_i32_0 : i32, i32
  }
  func.func @transform_3(%arg0: i32) -> (i32, i32) {
    %c0_i32 = arith.constant 0 : i32
    %c0_i32_0 = arith.constant 0 : i32
    return %arg0, %c0_i32 : i32, i32
  }
}

</mosaic_0001>

<llo_original>
// kernel: gcn_forward.7
$region0: #{gcn_forward.7}
  #allocation0 [shape = 'u32[]', space=smem, size = 0x4, offset = 0x4, fixed_abs, tag = 'smem constant byte address 0x4 - core index']
  #allocation1 [shape = 'u32[144,128]{1,0:T(1,128)}', space=vmem, size = 0x12000, scoped, tag = 'internal scratch']
  %s0 = inlined_call_operand.vmem [shape: f32[256,128], index: 0, kind: input, shape index: {}]
  %s1 = inlined_call_operand.vmem [shape: f32[128,128], index: 1, kind: input, shape index: {}]
  %s2 = inlined_call_operand.vmem [shape: f32[256,128], index: 2, kind: output, shape index: {}]
  %s3 = sld [smem:[#allocation0]]
  $region18: #{gcn_forward.7} parent=0
    _
  %s5 = ssub.s32 1, %s3
  %s6 = scalar_select 0, %s5, %s3
  // Predicated region
  $region2: #{gcn_forward.7} parent=0 // pred_check
    _
  $region3: #{gcn_forward.7} parent=0 // pred_check_branch
    %8 = sbr.rel (0) target = $region5
  $region4: #{gcn_forward.7} parent=0 // pred_region
    _
  $region5: #{gcn_forward.7} parent=0 // pred_fallthru
    _
  // Predicated region
  $region6: #{gcn_forward.7} parent=0 // pred_check
    _
  $region7: #{gcn_forward.7} parent=0 // pred_check_branch
    %10 = sbr.rel (0) target = $region9
  $region8: #{gcn_forward.7} parent=0 // pred_region
    _
  $region9: #{gcn_forward.7} parent=0 // pred_fallthru
    _
  %v11 = vld [vmem:[%s0] sm:$0xff]
  %v12 = vld [vmem:[%s0 + $0x8] sm:$0xff]
  %v13 = vld [vmem:[%s0 + $0x10] sm:$0xff]
  %v14 = vld [vmem:[%s0 + $0x18] sm:$0xff]
  %v15 = vld [vmem:[%s0 + $0x20] sm:$0xff]
  %v16 = vld [vmem:[%s0 + $0x28] sm:$0xff]
  %v17 = vld [vmem:[%s0 + $0x30] sm:$0xff]
  %v18 = vld [vmem:[%s0 + $0x38] sm:$0xff]
  %v19 = vld [vmem:[%s0 + $0x40] sm:$0xff]
  %v20 = vld [vmem:[%s0 + $0x48] sm:$0xff]
  %v21 = vld [vmem:[%s0 + $0x50] sm:$0xff]
  %v22 = vld [vmem:[%s0 + $0x58] sm:$0xff]
  %v23 = vld [vmem:[%s0 + $0x60] sm:$0xff]
  %v24 = vld [vmem:[%s0 + $0x68] sm:$0xff]
  %v25 = vld [vmem:[%s0 + $0x70] sm:$0xff]
  %v26 = vld [vmem:[%s0 + $0x78] sm:$0xff]
  %v27 = vld [vmem:[%s0 + $0x80] sm:$0xff]
  %v28 = vld [vmem:[%s0 + $0x88] sm:$0xff]
  %v29 = vld [vmem:[%s0 + $0x90] sm:$0xff]
  %v30 = vld [vmem:[%s0 + $0x98] sm:$0xff]
  %v31 = vld [vmem:[%s0 + $0xa0] sm:$0xff]
  %v32 = vld [vmem:[%s0 + $0xa8] sm:$0xff]
  %v33 = vld [vmem:[%s0 + $0xb0] sm:$0xff]
  %v34 = vld [vmem:[%s0 + $0xb8] sm:$0xff]
  %v35 = vld [vmem:[%s0 + $0xc0] sm:$0xff]
  %v36 = vld [vmem:[%s0 + $0xc8] sm:$0xff]
  %v37 = vld [vmem:[%s0 + $0xd0] sm:$0xff]
  %v38 = vld [vmem:[%s0 + $0xd8] sm:$0xff]
  %v39 = vld [vmem:[%s0 + $0xe0] sm:$0xff]
  %v40 = vld [vmem:[%s0 + $0xe8] sm:$0xff]
  %v41 = vld [vmem:[%s0 + $0xf0] sm:$0xff]
  %v42 = vld [vmem:[%s0 + $0xf8] sm:$0xff]
  %v43 = vld [vmem:[%s1] sm:$0xff]
  %v44 = vld [vmem:[%s1 + $0x8] sm:$0xff]
  %v45 = vld [vmem:[%s1 + $0x10] sm:$0xff]
  %v46 = vld [vmem:[%s1 + $0x18] sm:$0xff]
  %v47 = vld [vmem:[%s1 + $0x20] sm:$0xff]
  %v48 = vld [vmem:[%s1 + $0x28] sm:$0xff]
  %v49 = vld [vmem:[%s1 + $0x30] sm:$0xff]
  %v50 = vld [vmem:[%s1 + $0x38] sm:$0xff]
  %v51 = vld [vmem:[%s1 + $0x40] sm:$0xff]
  %v52 = vld [vmem:[%s1 + $0x48] sm:$0xff]
  %v53 = vld [vmem:[%s1 + $0x50] sm:$0xff]
  %v54 = vld [vmem:[%s1 + $0x58] sm:$0xff]
  %v55 = vld [vmem:[%s1 + $0x60] sm:$0xff]
  %v56 = vld [vmem:[%s1 + $0x68] sm:$0xff]
  %v57 = vld [vmem:[%s1 + $0x70] sm:$0xff]
  %v58 = vld [vmem:[%s1 + $0x78] sm:$0xff]
  %59 = vmatprep.subr.mxu0 0.0
  %60 = vmatpush1.msra.mxu0 %v58
  %61 = vmatprep.subr.mxu0 0.0
  %62 = vmatpush1.msra.mxu0 %v57
  %63 = vmatprep.subr.mxu0 0.0
  %64 = vmatpush1.msra.mxu0 %v56
  %65 = vmatprep.subr.mxu0 0.0
  %66 = vmatpush1.msra.mxu0 %v55
  %67 = vmatprep.subr.mxu0 0.0
  %68 = vmatpush1.msra.mxu0 %v54
  %69 = vmatprep.subr.mxu0 0.0
  %70 = vmatpush1.msra.mxu0 %v53
  %71 = vmatprep.subr.mxu0 0.0
  %72 = vmatpush1.msra.mxu0 %v52
  %73 = vmatprep.subr.mxu0 0.0
  %74 = vmatpush1.msra.mxu0 %v51
  %75 = vmatprep.subr.mxu0 0.0
  %76 = vmatpush1.msra.mxu0 %v50
  %77 = vmatprep.subr.mxu0 0.0
  %78 = vmatpush1.msra.mxu0 %v49
  %79 = vmatprep.subr.mxu0 0.0
  %80 = vmatpush1.msra.mxu0 %v48
  %81 = vmatprep.subr.mxu0 0.0
  %82 = vmatpush1.msra.mxu0 %v47
  %83 = vmatprep.subr.mxu0 0.0
  %84 = vmatpush1.msra.mxu0 %v46
  %85 = vmatprep.subr.mxu0 0.0
  %86 = vmatpush1.msra.mxu0 %v45
  %87 = vmatprep.subr.mxu0 0.0
  %88 = vmatpush1.msra.mxu0 %v44
  %89 = vmatprep.subr.mxu0 0.0
  %90 = vmatpush1.msra.mxu0 %v43
  %91 = vmatprep.subr.mxu0 0.0
  %92 = vmatpush2.msra.mxu0 0.0
  %93 = vmatprep.subr.mxu0 0.0
  %94 = vmatpush2.msra.mxu0 0.0
  %95 = vmatprep.subr.mxu0 0.0
  %96 = vmatpush2.msra.mxu0 0.0
  %97 = vmatprep.subr.mxu0 0.0
  %98 = vmatpush2.msra.mxu0 0.0
  %99 = vmatprep.subr.mxu0 0.0
  %100 = vmatpush2.msra.mxu0 0.0
  %101 = vmatprep.subr.mxu0 0.0
  %102 = vmatpush2.msra.mxu0 0.0
  %103 = vmatprep.subr.mxu0 0.0
  %104 = vmatpush2.msra.mxu0 0.0
  %105 = vmatprep.subr.mxu0 0.0
  %106 = vmatpush2.msra.mxu0 0.0
  %107 = vmatprep.subr.mxu0 0.0
  %108 = vmatpush2.msra.mxu0 0.0
  %109 = vmatprep.subr.mxu0 0.0
  %110 = vmatpush2.msra.mxu0 0.0
  %111 = vmatprep.subr.mxu0 0.0
  %112 = vmatpush2.msra.mxu0 0.0
  %113 = vmatprep.subr.mxu0 0.0
  %114 = vmatpush2.msra.mxu0 0.0
  %115 = vmatprep.subr.mxu0 0.0
  %116 = vmatpush2.msra.mxu0 0.0
  %117 = vmatprep.subr.mxu0 0.0
  %118 = vmatpush2.msra.mxu0 0.0
  %119 = vmatprep.subr.mxu0 0.0
  %120 = vmatpush2.msra.mxu0 0.0
  %121 = vmatprep.subr.mxu0 0.0
  %122 = vmatpush2.msra.mxu0 0.0
  %123 = vmatprep.mubr.f32.mxu0 0.0
  %124 = vmatmul.mubr.f32.gmra.mxu0 %v11
  %v125 = vpop.f32.mrf.mxu0
  %v126 = vadd.f32 0.0, %v125
  %v127 = vpop.f32.mrf.mxu0
  %128 = vmatprep.mubr.f32.mxu0 0.0
  %129 = vmatmul.mubr.f32.gmra.mxu0 %v12
  %v130 = vpop.f32.mrf.mxu0
  %v131 = vadd.f32 0.0, %v130
  %v132 = vpop.f32.mrf.mxu0
  %133 = vmatprep.mubr.f32.mxu0 0.0
  %134 = vmatmul.mubr.f32.gmra.mxu0 %v13
  %v135 = vpop.f32.mrf.mxu0
  %v136 = vadd.f32 0.0, %v135
  %v137 = vpop.f32.mrf.mxu0
  %138 = vmatprep.mubr.f32.mxu0 0.0
  %139 = vmatmul.mubr.f32.gmra.mxu0 %v14
  %v140 = vpop.f32.mrf.mxu0
  %v141 = vadd.f32 0.0, %v140
  %v142 = vpop.f32.mrf.mxu0
  %143 = vmatprep.mubr.f32.mxu0 0.0
  %144 = vmatmul.mubr.f32.gmra.mxu0 %v15
  %v145 = vpop.f32.mrf.mxu0
  %v146 = vadd.f32 0.0, %v145
  %v147 = vpop.f32.mrf.mxu0
  %148 = vmatprep.mubr.f32.mxu0 0.0
  %149 = vmatmul.mubr.f32.gmra.mxu0 %v16
  %v150 = vpop.f32.mrf.mxu0
  %v151 = vadd.f32 0.0, %v150
  %v152 = vpop.f32.mrf.mxu0
  %153 = vmatprep.mubr.f32.mxu0 0.0
  %154 = vmatmul.mubr.f32.gmra.mxu0 %v17
  %v155 = vpop.f32.mrf.mxu0
  %v156 = vadd.f32 0.0, %v155
  %v157 = vpop.f32.mrf.mxu0
  %158 = vmatprep.mubr.f32.mxu0 0.0
  %159 = vmatmul.mubr.f32.gmra.mxu0 %v18
  %v160 = vpop.f32.mrf.mxu0
  %v161 = vadd.f32 0.0, %v160
  %v162 = vpop.f32.mrf.mxu0
  %163 = vmatprep.mubr.f32.mxu0 0.0
  %164 = vmatmul.mubr.f32.gmra.mxu0 %v19
  %v165 = vpop.f32.mrf.mxu0
  %v166 = vadd.f32 0.0, %v165
  %v167 = vpop.f32.mrf.mxu0
  %168 = vmatprep.mubr.f32.mxu0 0.0
  %169 = vmatmul.mubr.f32.gmra.mxu0 %v20
  %v170 = vpop.f32.mrf.mxu0
  %v171 = vadd.f32 0.0, %v170
  %v172 = vpop.f32.mrf.mxu0
  %173 = vmatprep.mubr.f32.mxu0 0.0
  %174 = vmatmul.mubr.f32.gmra.mxu0 %v21
  %v175 = vpop.f32.mrf.mxu0
  %v176 = vadd.f32 0.0, %v175
  %v177 = vpop.f32.mrf.mxu0
  %178 = vmatprep.mubr.f32.mxu0 0.0
  %179 = vmatmul.mubr.f32.gmra.mxu0 %v22
  %v180 = vpop.f32.mrf.mxu0
  %v181 = vadd.f32 0.0, %v180
  %v182 = vpop.f32.mrf.mxu0
  %183 = vmatprep.mubr.f32.mxu0 0.0
  %184 = vmatmul.mubr.f32.gmra.mxu0 %v23
  %v185 = vpop.f32.mrf.mxu0
  %v186 = vadd.f32 0.0, %v185
  %v187 = vpop.f32.mrf.mxu0
  %188 = vmatprep.mubr.f32.mxu0 0.0
  %189 = vmatmul.mubr.f32.gmra.mxu0 %v24
  %v190 = vpop.f32.mrf.mxu0
  %v191 = vadd.f32 0.0, %v190
  %v192 = vpop.f32.mrf.mxu0
  %193 = vmatprep.mubr.f32.mxu0 0.0
  %194 = vmatmul.mubr.f32.gmra.mxu0 %v25
  %v195 = vpop.f32.mrf.mxu0
  %v196 = vadd.f32 0.0, %v195
  %v197 = vpop.f32.mrf.mxu0
  %198 = vmatprep.mubr.f32.mxu0 0.0
  %199 = vmatmul.mubr.f32.gmra.mxu0 %v26
  %v200 = vpop.f32.mrf.mxu0
  %v201 = vadd.f32 0.0, %v200
  %v202 = vpop.f32.mrf.mxu0
  %203 = vmatprep.mubr.f32.mxu0 0.0
  %204 = vmatmul.mubr.f32.gmra.mxu0 %v27
  %v205 = vpop.f32.mrf.mxu0
  %v206 = vadd.f32 0.0, %v205
  %v207 = vpop.f32.mrf.mxu0
  %208 = vmatprep.mubr.f32.mxu0 0.0
  %209 = vmatmul.mubr.f32.gmra.mxu0 %v28
  %v210 = vpop.f32.mrf.mxu0
  %v211 = vadd.f32 0.0, %v210
  %v212 = vpop.f32.mrf.mxu0
  %213 = vmatprep.mubr.f32.mxu0 0.0
  %214 = vmatmul.mubr.f32.gmra.mxu0 %v29
  %v215 = vpop.f32.mrf.mxu0
  %v216 = vadd.f32 0.0, %v215
  %v217 = vpop.f32.mrf.mxu0
  %218 = vmatprep.mubr.f32.mxu0 0.0
  %219 = vmatmul.mubr.f32.gmra.mxu0 %v30
  %v220 = vpop.f32.mrf.mxu0
  %v221 = vadd.f32 0.0, %v220
  %v222 = vpop.f32.mrf.mxu0
  %223 = vmatprep.mubr.f32.mxu0 0.0
  %224 = vmatmul.mubr.f32.gmra.mxu0 %v31
  %v225 = vpop.f32.mrf.mxu0
  %v226 = vadd.f32 0.0, %v225
  %v227 = vpop.f32.mrf.mxu0
  %228 = vmatprep.mubr.f32.mxu0 0.0
  %229 = vmatmul.mubr.f32.gmra.mxu0 %v32
  %v230 = vpop.f32.mrf.mxu0
  %v231 = vadd.f32 0.0, %v230
  %v232 = vpop.f32.mrf.mxu0
  %233 = vmatprep.mubr.f32.mxu0 0.0
  %234 = vmatmul.mubr.f32.gmra.mxu0 %v33
  %v235 = vpop.f32.mrf.mxu0
  %v236 = vadd.f32 0.0, %v235
  %v237 = vpop.f32.mrf.mxu0
  %238 = vmatprep.mubr.f32.mxu0 0.0
  %239 = vmatmul.mubr.f32.gmra.mxu0 %v34
  %v240 = vpop.f32.mrf.mxu0
  %v241 = vadd.f32 0.0, %v240
  %v242 = vpop.f32.mrf.mxu0
  %243 = vmatprep.mubr.f32.mxu0 0.0
  %244 = vmatmul.mubr.f32.gmra.mxu0 %v35
  %v245 = vpop.f32.mrf.mxu0
  %v246 = vadd.f32 0.0, %v245
  %v247 = vpop.f32.mrf.mxu0
  %248 = vmatprep.mubr.f32.mxu0 0.0
  %249 = vmatmul.mubr.f32.gmra.mxu0 %v36
  %v250 = vpop.f32.mrf.mxu0
  %v251 = vadd.f32 0.0, %v250
  %v252 = vpop.f32.mrf.mxu0
  %253 = vmatprep.mubr.f32.mxu0 0.0
  %254 = vmatmul.mubr.f32.gmra.mxu0 %v37
  %v255 = vpop.f32.mrf.mxu0
  %v256 = vadd.f32 0.0, %v255
  %v257 = vpop.f32.mrf.mxu0
  %258 = vmatprep.mubr.f32.mxu0 0.0
  %259 = vmatmul.mubr.f32.gmra.mxu0 %v38
  %v260 = vpop.f32.mrf.mxu0
  %v261 = vadd.f32 0.0, %v260
  %v262 = vpop.f32.mrf.mxu0
  %263 = vmatprep.mubr.f32.mxu0 0.0
  %264 = vmatmul.mubr.f32.gmra.mxu0 %v39
  %v265 = vpop.f32.mrf.mxu0
  %v266 = vadd.f32 0.0, %v265
  %v267 = vpop.f32.mrf.mxu0
  %268 = vmatprep.mubr.f32.mxu0 0.0
  %269 = vmatmul.mubr.f32.gmra.mxu0 %v40
  %v270 = vpop.f32.mrf.mxu0
  %v271 = vadd.f32 0.0, %v270
  %v272 = vpop.f32.mrf.mxu0
  %273 = vmatprep.mubr.f32.mxu0 0.0
  %274 = vmatmul.mubr.f32.gmra.mxu0 %v41
  %v275 = vpop.f32.mrf.mxu0
  %v276 = vadd.f32 0.0, %v275
  %v277 = vpop.f32.mrf.mxu0
  %278 = vmatprep.mubr.f32.mxu0 0.0
  %279 = vmatmul.mubr.f32.gmra.mxu0 %v42
  %v280 = vpop.f32.mrf.mxu0
  %v281 = vadd.f32 0.0, %v280
  %v282 = vpop.f32.mrf.mxu0
  %283 = vdwg.mxu0
  %284 = vst [vmem:[%s2] sm:$0xff] %v126
  %285 = vst [vmem:[%s2 + $0x8] sm:$0xff] %v131
  %286 = vst [vmem:[%s2 + $0x10] sm:$0xff] %v136
  %287 = vst [vmem:[%s2 + $0x18] sm:$0xff] %v141
  %288 = vst [vmem:[%s2 + $0x20] sm:$0xff] %v146
  %289 = vst [vmem:[%s2 + $0x28] sm:$0xff] %v151
  %290 = vst [vmem:[%s2 + $0x30] sm:$0xff] %v156
  %291 = vst [vmem:[%s2 + $0x38] sm:$0xff] %v161
  %292 = vst [vmem:[%s2 + $0x40] sm:$0xff] %v166
  %293 = vst [vmem:[%s2 + $0x48] sm:$0xff] %v171
  %294 = vst [vmem:[%s2 + $0x50] sm:$0xff] %v176
  %295 = vst [vmem:[%s2 + $0x58] sm:$0xff] %v181
  %296 = vst [vmem:[%s2 + $0x60] sm:$0xff] %v186
  %297 = vst [vmem:[%s2 + $0x68] sm:$0xff] %v191
  %298 = vst [vmem:[%s2 + $0x70] sm:$0xff] %v196
  %299 = vst [vmem:[%s2 + $0x78] sm:$0xff] %v201
  %300 = vst [vmem:[%s2 + $0x80] sm:$0xff] %v206
  %301 = vst [vmem:[%s2 + $0x88] sm:$0xff] %v211
  %302 = vst [vmem:[%s2 + $0x90] sm:$0xff] %v216
  %303 = vst [vmem:[%s2 + $0x98] sm:$0xff] %v221
  %304 = vst [vmem:[%s2 + $0xa0] sm:$0xff] %v226
  %305 = vst [vmem:[%s2 + $0xa8] sm:$0xff] %v231
  %306 = vst [vmem:[%s2 + $0xb0] sm:$0xff] %v236
  %307 = vst [vmem:[%s2 + $0xb8] sm:$0xff] %v241
  %308 = vst [vmem:[%s2 + $0xc0] sm:$0xff] %v246
  %309 = vst [vmem:[%s2 + $0xc8] sm:$0xff] %v251
  %310 = vst [vmem:[%s2 + $0xd0] sm:$0xff] %v256
  %311 = vst [vmem:[%s2 + $0xd8] sm:$0xff] %v261
  %312 = vst [vmem:[%s2 + $0xe0] sm:$0xff] %v266
  %313 = vst [vmem:[%s2 + $0xe8] sm:$0xff] %v271
  %314 = vst [vmem:[%s2 + $0xf0] sm:$0xff] %v276
  %315 = vst [vmem:[%s2 + $0xf8] sm:$0xff] %v281
  // Predicated region
  $region10: #{gcn_forward.7} parent=0 // pred_check
    _
  $region11: #{gcn_forward.7} parent=0 // pred_check_branch
    %317 = sbr.rel (0) target = $region13
  $region12: #{gcn_forward.7} parent=0 // pred_region
    _
  $region13: #{gcn_forward.7} parent=0 // pred_fallthru
    _
  // Predicated region
  $region14: #{gcn_forward.7} parent=0 // pred_check
    _
  $region15: #{gcn_forward.7} parent=0 // pred_check_branch
    %319 = sbr.rel (0) target = $region17
  $region16: #{gcn_forward.7} parent=0 // pred_region
    _
  $region17: #{gcn_forward.7} parent=0 // pred_fallthru
    _

// kernel: gcn_forward.9
$region0: #{gcn_forward.9}
  #allocation0 [shape = 'u32[]', space=smem, size = 0x4, offset = 0x4, fixed_abs, tag = 'smem constant byte address 0x4 - core index']
  #allocation1 [shape = 'u32[144,128]{1,0:T(1,128)}', space=vmem, size = 0x12000, scoped, tag = 'internal scratch']
  %s0 = inlined_call_operand.vmem [shape: f32[256,128], index: 0, kind: input, shape index: {}]
  %s1 = inlined_call_operand.vmem [shape: f32[256,128], index: 1, kind: input, shape index: {}]
  %s2 = inlined_call_operand.vmem [shape: f32[1,128], index: 2, kind: input, shape index: {}]
  %s3 = inlined_call_operand.vmem [shape: f32[1,128], index: 3, kind: input, shape index: {}]
  %s4 = inlined_call_operand.vmem [shape: f32[128,128], index: 4, kind: input, shape index: {}]
  %s5 = inlined_call_operand.vmem [shape: f32[128,128], index: 5, kind: input, shape index: {}]
  %s6 = inlined_call_operand.vmem [shape: f32[256,128], index: 6, kind: output, shape index: {0}]
  %s7 = inlined_call_operand.vmem [shape: f32[256,128], index: 7, kind: output, shape index: {1}]
  %8 = xla_tuple %s6, %s7
  %s9 = sld [smem:[#allocation0]]
  $region42: #{gcn_forward.9} parent=0
    _
  %s11 = ssub.s32 1, %s9
  %s12 = scalar_select 0, %s11, %s9
  // Predicated region
  $region2: #{gcn_forward.9} parent=0 // pred_check
    _
  $region3: #{gcn_forward.9} parent=0 // pred_check_branch
    %14 = sbr.rel (0) target = $region5
  $region4: #{gcn_forward.9} parent=0 // pred_region
    _
  $region5: #{gcn_forward.9} parent=0 // pred_fallthru
    _
  // Predicated region
  $region6: #{gcn_forward.9} parent=0 // pred_check
    _
  $region7: #{gcn_forward.9} parent=0 // pred_check_branch
    %16 = sbr.rel (0) target = $region9
  $region8: #{gcn_forward.9} parent=0 // pred_region
    _
  $region9: #{gcn_forward.9} parent=0 // pred_fallthru
    _
  // Predicated region
  $region10: #{gcn_forward.9} parent=0 // pred_check
    _
  $region11: #{gcn_forward.9} parent=0 // pred_check_branch
    %18 = sbr.rel (0) target = $region13
  $region12: #{gcn_forward.9} parent=0 // pred_region
    _
  $region13: #{gcn_forward.9} parent=0 // pred_fallthru
    _
  // Predicated region
  $region14: #{gcn_forward.9} parent=0 // pred_check
    _
  $region15: #{gcn_forward.9} parent=0 // pred_check_branch
    %20 = sbr.rel (0) target = $region17
  $region16: #{gcn_forward.9} parent=0 // pred_region
    _
  $region17: #{gcn_forward.9} parent=0 // pred_fallthru
    _
  // Predicated region
  $region18: #{gcn_forward.9} parent=0 // pred_check
    _
  $region19: #{gcn_forward.9} parent=0 // pred_check_branch
    %22 = sbr.rel (0) target = $region21
  $region20: #{gcn_forward.9} parent=0 // pred_region
    _
  $region21: #{gcn_forward.9} parent=0 // pred_fallthru
    _
  // Predicated region
  $region22: #{gcn_forward.9} parent=0 // pred_check
    _
  $region23: #{gcn_forward.9} parent=0 // pred_check_branch
    %24 = sbr.rel (0) target = $region25
  $region24: #{gcn_forward.9} parent=0 // pred_region
    _
  $region25: #{gcn_forward.9} parent=0 // pred_fallthru
    _
  %v25 = vld [vmem:[%s1] sm:$0xff]
  %v26 = vld [vmem:[%s1 + $0x8] sm:$0xff]
  %v27 = vld [vmem:[%s1 + $0x10] sm:$0xff]
  %v28 = vld [vmem:[%s1 + $0x18] sm:$0xff]
  %v29 = vld [vmem:[%s1 + $0x20] sm:$0xff]
  %v30 = vld [vmem:[%s1 + $0x28] sm:$0xff]
  %v31 = vld [vmem:[%s1 + $0x30] sm:$0xff]
  %v32 = vld [vmem:[%s1 + $0x38] sm:$0xff]
  %v33 = vld [vmem:[%s1 + $0x40] sm:$0xff]
  %v34 = vld [vmem:[%s1 + $0x48] sm:$0xff]
  %v35 = vld [vmem:[%s1 + $0x50] sm:$0xff]
  %v36 = vld [vmem:[%s1 + $0x58] sm:$0xff]
  %v37 = vld [vmem:[%s1 + $0x60] sm:$0xff]
  %v38 = vld [vmem:[%s1 + $0x68] sm:$0xff]
  %v39 = vld [vmem:[%s1 + $0x70] sm:$0xff]
  %v40 = vld [vmem:[%s1 + $0x78] sm:$0xff]
  %v41 = vld [vmem:[%s1 + $0x80] sm:$0xff]
  %v42 = vld [vmem:[%s1 + $0x88] sm:$0xff]
  %v43 = vld [vmem:[%s1 + $0x90] sm:$0xff]
  %v44 = vld [vmem:[%s1 + $0x98] sm:$0xff]
  %v45 = vld [vmem:[%s1 + $0xa0] sm:$0xff]
  %v46 = vld [vmem:[%s1 + $0xa8] sm:$0xff]
  %v47 = vld [vmem:[%s1 + $0xb0] sm:$0xff]
  %v48 = vld [vmem:[%s1 + $0xb8] sm:$0xff]
  %v49 = vld [vmem:[%s1 + $0xc0] sm:$0xff]
  %v50 = vld [vmem:[%s1 + $0xc8] sm:$0xff]
  %v51 = vld [vmem:[%s1 + $0xd0] sm:$0xff]
  %v52 = vld [vmem:[%s1 + $0xd8] sm:$0xff]
  %v53 = vld [vmem:[%s1 + $0xe0] sm:$0xff]
  %v54 = vld [vmem:[%s1 + $0xe8] sm:$0xff]
  %v55 = vld [vmem:[%s1 + $0xf0] sm:$0xff]
  %v56 = vld [vmem:[%s1 + $0xf8] sm:$0xff]
  %v57 = vld [vmem:[%s2] sm:$0x1]
  %v59 = vlaneseq
  %v60 = vshrl.u32 %v59, 7
  %v61 = vsub.s32 0, %v60
  %v62 = vrot.slane %v57, %v61
  %v64 = vmul.f32 %v25, %v62
  %v65 = vmul.f32 %v26, %v62
  %v66 = vmul.f32 %v27, %v62
  %v67 = vmul.f32 %v28, %v62
  %v68 = vmul.f32 %v29, %v62
  %v69 = vmul.f32 %v30, %v62
  %v70 = vmul.f32 %v31, %v62
  %v71 = vmul.f32 %v32, %v62
  %v72 = vmul.f32 %v33, %v62
  %v73 = vmul.f32 %v34, %v62
  %v74 = vmul.f32 %v35, %v62
  %v75 = vmul.f32 %v36, %v62
  %v76 = vmul.f32 %v37, %v62
  %v77 = vmul.f32 %v38, %v62
  %v78 = vmul.f32 %v39, %v62
  %v79 = vmul.f32 %v40, %v62
  %v80 = vmul.f32 %v41, %v62
  %v81 = vmul.f32 %v42, %v62
  %v82 = vmul.f32 %v43, %v62
  %v83 = vmul.f32 %v44, %v62
  %v84 = vmul.f32 %v45, %v62
  %v85 = vmul.f32 %v46, %v62
  %v86 = vmul.f32 %v47, %v62
  %v87 = vmul.f32 %v48, %v62
  %v88 = vmul.f32 %v49, %v62
  %v89 = vmul.f32 %v50, %v62
  %v90 = vmul.f32 %v51, %v62
  %v91 = vmul.f32 %v52, %v62
  %v92 = vmul.f32 %v53, %v62
  %v93 = vmul.f32 %v54, %v62
  %v94 = vmul.f32 %v55, %v62
  %v95 = vmul.f32 %v56, %v62
  %v96 = vld [vmem:[%s3] sm:$0x1]
  %v98 = vlaneseq
  %v99 = vshrl.u32 %v98, 7
  %v100 = vsub.s32 0, %v99
  %v101 = vrot.slane %v96, %v100
  %v103 = vadd.f32 %v64, %v101
  %v104 = vadd.f32 %v65, %v101
  %v105 = vadd.f32 %v66, %v101
  %v106 = vadd.f32 %v67, %v101
  %v107 = vadd.f32 %v68, %v101
  %v108 = vadd.f32 %v69, %v101
  %v109 = vadd.f32 %v70, %v101
  %v110 = vadd.f32 %v71, %v101
  %v111 = vadd.f32 %v72, %v101
  %v112 = vadd.f32 %v73, %v101
  %v113 = vadd.f32 %v74, %v101
  %v114 = vadd.f32 %v75, %v101
  %v115 = vadd.f32 %v76, %v101
  %v116 = vadd.f32 %v77, %v101
  %v117 = vadd.f32 %v78, %v101
  %v118 = vadd.f32 %v79, %v101
  %v119 = vadd.f32 %v80, %v101
  %v120 = vadd.f32 %v81, %v101
  %v121 = vadd.f32 %v82, %v101
  %v122 = vadd.f32 %v83, %v101
  %v123 = vadd.f32 %v84, %v101
  %v124 = vadd.f32 %v85, %v101
  %v125 = vadd.f32 %v86, %v101
  %v126 = vadd.f32 %v87, %v101
  %v127 = vadd.f32 %v88, %v101
  %v128 = vadd.f32 %v89, %v101
  %v129 = vadd.f32 %v90, %v101
  %v130 = vadd.f32 %v91, %v101
  %v131 = vadd.f32 %v92, %v101
  %v132 = vadd.f32 %v93, %v101
  %v133 = vadd.f32 %v94, %v101
  %v134 = vadd.f32 %v95, %v101
  %v135 = vmax.f32 %v103, 0.0
  %v136 = vmax.f32 %v104, 0.0
  %v137 = vmax.f32 %v105, 0.0
  %v138 = vmax.f32 %v106, 0.0
  %v139 = vmax.f32 %v107, 0.0
  %v140 = vmax.f32 %v108, 0.0
  %v141 = vmax.f32 %v109, 0.0
  %v142 = vmax.f32 %v110, 0.0
  %v143 = vmax.f32 %v111, 0.0
  %v144 = vmax.f32 %v112, 0.0
  %v145 = vmax.f32 %v113, 0.0
  %v146 = vmax.f32 %v114, 0.0
  %v147 = vmax.f32 %v115, 0.0
  %v148 = vmax.f32 %v116, 0.0
  %v149 = vmax.f32 %v117, 0.0
  %v150 = vmax.f32 %v118, 0.0
  %v151 = vmax.f32 %v119, 0.0
  %v152 = vmax.f32 %v120, 0.0
  %v153 = vmax.f32 %v121, 0.0
  %v154 = vmax.f32 %v122, 0.0
  %v155 = vmax.f32 %v123, 0.0
  %v156 = vmax.f32 %v124, 0.0
  %v157 = vmax.f32 %v125, 0.0
  %v158 = vmax.f32 %v126, 0.0
  %v159 = vmax.f32 %v127, 0.0
  %v160 = vmax.f32 %v128, 0.0
  %v161 = vmax.f32 %v129, 0.0
  %v162 = vmax.f32 %v130, 0.0
  %v163 = vmax.f32 %v131, 0.0
  %v164 = vmax.f32 %v132, 0.0
  %v165 = vmax.f32 %v133, 0.0
  %v166 = vmax.f32 %v134, 0.0
  %167 = vst [vmem:[%s6] sm:$0xff] %v135
  %168 = vst [vmem:[%s6 + $0x8] sm:$0xff] %v136
  %169 = vst [vmem:[%s6 + $0x10] sm:$0xff] %v137
  %170 = vst [vmem:[%s6 + $0x18] sm:$0xff] %v138
  %171 = vst [vmem:[%s6 + $0x20] sm:$0xff] %v139
  %172 = vst [vmem:[%s6 + $0x28] sm:$0xff] %v140
  %173 = vst [vmem:[%s6 + $0x30] sm:$0xff] %v141
  %174 = vst [vmem:[%s6 + $0x38] sm:$0xff] %v142
  %175 = vst [vmem:[%s6 + $0x40] sm:$0xff] %v143
  %176 = vst [vmem:[%s6 + $0x48] sm:$0xff] %v144
  %177 = vst [vmem:[%s6 + $0x50] sm:$0xff] %v145
  %178 = vst [vmem:[%s6 + $0x58] sm:$0xff] %v146
  %179 = vst [vmem:[%s6 + $0x60] sm:$0xff] %v147
  %180 = vst [vmem:[%s6 + $0x68] sm:$0xff] %v148
  %181 = vst [vmem:[%s6 + $0x70] sm:$0xff] %v149
  %182 = vst [vmem:[%s6 + $0x78] sm:$0xff] %v150
  %183 = vst [vmem:[%s6 + $0x80] sm:$0xff] %v151
  %184 = vst [vmem:[%s6 + $0x88] sm:$0xff] %v152
  %185 = vst [vmem:[%s6 + $0x90] sm:$0xff] %v153
  %186 = vst [vmem:[%s6 + $0x98] sm:$0xff] %v154
  %187 = vst [vmem:[%s6 + $0xa0] sm:$0xff] %v155
  %188 = vst [vmem:[%s6 + $0xa8] sm:$0xff] %v156
  %189 = vst [vmem:[%s6 + $0xb0] sm:$0xff] %v157
  %190 = vst [vmem:[%s6 + $0xb8] sm:$0xff] %v158
  %191 = vst [vmem:[%s6 + $0xc0] sm:$0xff] %v159
  %192 = vst [vmem:[%s6 + $0xc8] sm:$0xff] %v160
  %193 = vst [vmem:[%s6 + $0xd0] sm:$0xff] %v161
  %194 = vst [vmem:[%s6 + $0xd8] sm:$0xff] %v162
  %195 = vst [vmem:[%s6 + $0xe0] sm:$0xff] %v163
  %196 = vst [vmem:[%s6 + $0xe8] sm:$0xff] %v164
  %197 = vst [vmem:[%s6 + $0xf0] sm:$0xff] %v165
  %198 = vst [vmem:[%s6 + $0xf8] sm:$0xff] %v166
  %v199 = vld [vmem:[%s5] sm:$0xff]
  %v200 = vld [vmem:[%s5 + $0x8] sm:$0xff]
  %v201 = vld [vmem:[%s5 + $0x10] sm:$0xff]
  %v202 = vld [vmem:[%s5 + $0x18] sm:$0xff]
  %v203 = vld [vmem:[%s5 + $0x20] sm:$0xff]
  %v204 = vld [vmem:[%s5 + $0x28] sm:$0xff]
  %v205 = vld [vmem:[%s5 + $0x30] sm:$0xff]
  %v206 = vld [vmem:[%s5 + $0x38] sm:$0xff]
  %v207 = vld [vmem:[%s5 + $0x40] sm:$0xff]
  %v208 = vld [vmem:[%s5 + $0x48] sm:$0xff]
  %v209 = vld [vmem:[%s5 + $0x50] sm:$0xff]
  %v210 = vld [vmem:[%s5 + $0x58] sm:$0xff]
  %v211 = vld [vmem:[%s5 + $0x60] sm:$0xff]
  %v212 = vld [vmem:[%s5 + $0x68] sm:$0xff]
  %v213 = vld [vmem:[%s5 + $0x70] sm:$0xff]
  %v214 = vld [vmem:[%s5 + $0x78] sm:$0xff]
  %v215 = vld [vmem:[%s0] sm:$0xff]
  %v216 = vld [vmem:[%s0 + $0x8] sm:$0xff]
  %v217 = vld [vmem:[%s0 + $0x10] sm:$0xff]
  %v218 = vld [vmem:[%s0 + $0x18] sm:$0xff]
  %v219 = vld [vmem:[%s0 + $0x20] sm:$0xff]
  %v220 = vld [vmem:[%s0 + $0x28] sm:$0xff]
  %v221 = vld [vmem:[%s0 + $0x30] sm:$0xff]
  %v222 = vld [vmem:[%s0 + $0x38] sm:$0xff]
  %v223 = vld [vmem:[%s0 + $0x40] sm:$0xff]
  %v224 = vld [vmem:[%s0 + $0x48] sm:$0xff]
  %v225 = vld [vmem:[%s0 + $0x50] sm:$0xff]
  %v226 = vld [vmem:[%s0 + $0x58] sm:$0xff]
  %v227 = vld [vmem:[%s0 + $0x60] sm:$0xff]
  %v228 = vld [vmem:[%s0 + $0x68] sm:$0xff]
  %v229 = vld [vmem:[%s0 + $0x70] sm:$0xff]
  %v230 = vld [vmem:[%s0 + $0x78] sm:$0xff]
  %v231 = vld [vmem:[%s0 + $0x80] sm:$0xff]
  %v232 = vld [vmem:[%s0 + $0x88] sm:$0xff]
  %v233 = vld [vmem:[%s0 + $0x90] sm:$0xff]
  %v234 = vld [vmem:[%s0 + $0x98] sm:$0xff]
  %v235 = vld [vmem:[%s0 + $0xa0] sm:$0xff]
  %v236 = vld [vmem:[%s0 + $0xa8] sm:$0xff]
  %v237 = vld [vmem:[%s0 + $0xb0] sm:$0xff]
  %v238 = vld [vmem:[%s0 + $0xb8] sm:$0xff]
  %v239 = vld [vmem:[%s0 + $0xc0] sm:$0xff]
  %v240 = vld [vmem:[%s0 + $0xc8] sm:$0xff]
  %v241 = vld [vmem:[%s0 + $0xd0] sm:$0xff]
  %v242 = vld [vmem:[%s0 + $0xd8] sm:$0xff]
  %v243 = vld [vmem:[%s0 + $0xe0] sm:$0xff]
  %v244 = vld [vmem:[%s0 + $0xe8] sm:$0xff]
  %v245 = vld [vmem:[%s0 + $0xf0] sm:$0xff]
  %v246 = vld [vmem:[%s0 + $0xf8] sm:$0xff]
  %v247 = vld [vmem:[%s4] sm:$0xff]
  %v248 = vld [vmem:[%s4 + $0x8] sm:$0xff]
  %v249 = vld [vmem:[%s4 + $0x10] sm:$0xff]
  %v250 = vld [vmem:[%s4 + $0x18] sm:$0xff]
  %v251 = vld [vmem:[%s4 + $0x20] sm:$0xff]
  %v252 = vld [vmem:[%s4 + $0x28] sm:$0xff]
  %v253 = vld [vmem:[%s4 + $0x30] sm:$0xff]
  %v254 = vld [vmem:[%s4 + $0x38] sm:$0xff]
  %v255 = vld [vmem:[%s4 + $0x40] sm:$0xff]
  %v256 = vld [vmem:[%s4 + $0x48] sm:$0xff]
  %v257 = vld [vmem:[%s4 + $0x50] sm:$0xff]
  %v258 = vld [vmem:[%s4 + $0x58] sm:$0xff]
  %v259 = vld [vmem:[%s4 + $0x60] sm:$0xff]
  %v260 = vld [vmem:[%s4 + $0x68] sm:$0xff]
  %v261 = vld [vmem:[%s4 + $0x70] sm:$0xff]
  %v262 = vld [vmem:[%s4 + $0x78] sm:$0xff]
  %263 = vmatprep.subr.mxu0 0.0
  %264 = vmatpush1.msra.mxu0 %v262
  %265 = vmatprep.subr.mxu0 0.0
  %266 = vmatpush1.msra.mxu0 %v261
  %267 = vmatprep.subr.mxu0 0.0
  %268 = vmatpush1.msra.mxu0 %v260
  %269 = vmatprep.subr.mxu0 0.0
  %270 = vmatpush1.msra.mxu0 %v259
  %271 = vmatprep.subr.mxu0 0.0
  %272 = vmatpush1.msra.mxu0 %v258
  %273 = vmatprep.subr.mxu0 0.0
  %274 = vmatpush1.msra.mxu0 %v257
  %275 = vmatprep.subr.mxu0 0.0
  %276 = vmatpush1.msra.mxu0 %v256
  %277 = vmatprep.subr.mxu0 0.0
  %278 = vmatpush1.msra.mxu0 %v255
  %279 = vmatprep.subr.mxu0 0.0
  %280 = vmatpush1.msra.mxu0 %v254
  %281 = vmatprep.subr.mxu0 0.0
  %282 = vmatpush1.msra.mxu0 %v253
  %283 = vmatprep.subr.mxu0 0.0
  %284 = vmatpush1.msra.mxu0 %v252
  %285 = vmatprep.subr.mxu0 0.0
  %286 = vmatpush1.msra.mxu0 %v251
  %287 = vmatprep.subr.mxu0 0.0
  %288 = vmatpush1.msra.mxu0 %v250
  %289 = vmatprep.subr.mxu0 0.0
  %290 = vmatpush1.msra.mxu0 %v249
  %291 = vmatprep.subr.mxu0 0.0
  %292 = vmatpush1.msra.mxu0 %v248
  %293 = vmatprep.subr.mxu0 0.0
  %294 = vmatpush1.msra.mxu0 %v247
  %295 = vmatprep.subr.mxu0 0.0
  %296 = vmatpush2.msra.mxu0 0.0
  %297 = vmatprep.subr.mxu0 0.0
  %298 = vmatpush2.msra.mxu0 0.0
  %299 = vmatprep.subr.mxu0 0.0
  %300 = vmatpush2.msra.mxu0 0.0
  %301 = vmatprep.subr.mxu0 0.0
  %302 = vmatpush2.msra.mxu0 0.0
  %303 = vmatprep.subr.mxu0 0.0
  %304 = vmatpush2.msra.mxu0 0.0
  %305 = vmatprep.subr.mxu0 0.0
  %306 = vmatpush2.msra.mxu0 0.0
  %307 = vmatprep.subr.mxu0 0.0
  %308 = vmatpush2.msra.mxu0 0.0
  %309 = vmatprep.subr.mxu0 0.0
  %310 = vmatpush2.msra.mxu0 0.0
  %311 = vmatprep.subr.mxu0 0.0
  %312 = vmatpush2.msra.mxu0 0.0
  %313 = vmatprep.subr.mxu0 0.0
  %314 = vmatpush2.msra.mxu0 0.0
  %315 = vmatprep.subr.mxu0 0.0
  %316 = vmatpush2.msra.mxu0 0.0
  %317 = vmatprep.subr.mxu0 0.0
  %318 = vmatpush2.msra.mxu0 0.0
  %319 = vmatprep.subr.mxu0 0.0
  %320 = vmatpush2.msra.mxu0 0.0
  %321 = vmatprep.subr.mxu0 0.0
  %322 = vmatpush2.msra.mxu0 0.0
  %323 = vmatprep.subr.mxu0 0.0
  %324 = vmatpush2.msra.mxu0 0.0
  %325 = vmatprep.subr.mxu0 0.0
  %326 = vmatpush2.msra.mxu0 0.0
  %327 = vmatprep.mubr.f32.mxu0 0.0
  %328 = vmatmul.mubr.f32.gmra.mxu0 %v215
  %v329 = vpop.f32.mrf.mxu0
  %v330 = vadd.f32 0.0, %v329
  %v331 = vpop.f32.mrf.mxu0
  %332 = vmatprep.mubr.f32.mxu0 0.0
  %333 = vmatmul.mubr.f32.gmra.mxu0 %v216
  %v334 = vpop.f32.mrf.mxu0
  %v335 = vadd.f32 0.0, %v334
  %v336 = vpop.f32.mrf.mxu0
  %337 = vmatprep.mubr.f32.mxu0 0.0
  %338 = vmatmul.mubr.f32.gmra.mxu0 %v217
  %v339 = vpop.f32.mrf.mxu0
  %v340 = vadd.f32 0.0, %v339
  %v341 = vpop.f32.mrf.mxu0
  %342 = vmatprep.mubr.f32.mxu0 0.0
  %343 = vmatmul.mubr.f32.gmra.mxu0 %v218
  %v344 = vpop.f32.mrf.mxu0
  %v345 = vadd.f32 0.0, %v344
  %v346 = vpop.f32.mrf.mxu0
  %347 = vmatprep.mubr.f32.mxu0 0.0
  %348 = vmatmul.mubr.f32.gmra.mxu0 %v219
  %v349 = vpop.f32.mrf.mxu0
  %v350 = vadd.f32 0.0, %v349
  %v351 = vpop.f32.mrf.mxu0
  %352 = vmatprep.mubr.f32.mxu0 0.0
  %353 = vmatmul.mubr.f32.gmra.mxu0 %v220
  %v354 = vpop.f32.mrf.mxu0
  %v355 = vadd.f32 0.0, %v354
  %v356 = vpop.f32.mrf.mxu0
  %357 = vmatprep.mubr.f32.mxu0 0.0
  %358 = vmatmul.mubr.f32.gmra.mxu0 %v221
  %v359 = vpop.f32.mrf.mxu0
  %v360 = vadd.f32 0.0, %v359
  %v361 = vpop.f32.mrf.mxu0
  %362 = vmatprep.mubr.f32.mxu0 0.0
  %363 = vmatmul.mubr.f32.gmra.mxu0 %v222
  %v364 = vpop.f32.mrf.mxu0
  %v365 = vadd.f32 0.0, %v364
  %v366 = vpop.f32.mrf.mxu0
  %367 = vmatprep.mubr.f32.mxu0 0.0
  %368 = vmatmul.mubr.f32.gmra.mxu0 %v223
  %v369 = vpop.f32.mrf.mxu0
  %v370 = vadd.f32 0.0, %v369
  %v371 = vpop.f32.mrf.mxu0
  %372 = vmatprep.mubr.f32.mxu0 0.0
  %373 = vmatmul.mubr.f32.gmra.mxu0 %v224
  %v374 = vpop.f32.mrf.mxu0
  %v375 = vadd.f32 0.0, %v374
  %v376 = vpop.f32.mrf.mxu0
  %377 = vmatprep.mubr.f32.mxu0 0.0
  %378 = vmatmul.mubr.f32.gmra.mxu0 %v225
  %v379 = vpop.f32.mrf.mxu0
  %v380 = vadd.f32 0.0, %v379
  %v381 = vpop.f32.mrf.mxu0
  %382 = vmatprep.mubr.f32.mxu0 0.0
  %383 = vmatmul.mubr.f32.gmra.mxu0 %v226
  %v384 = vpop.f32.mrf.mxu0
  %v385 = vadd.f32 0.0, %v384
  %v386 = vpop.f32.mrf.mxu0
  %387 = vmatprep.mubr.f32.mxu0 0.0
  %388 = vmatmul.mubr.f32.gmra.mxu0 %v227
  %v389 = vpop.f32.mrf.mxu0
  %v390 = vadd.f32 0.0, %v389
  %v391 = vpop.f32.mrf.mxu0
  %392 = vmatprep.mubr.f32.mxu0 0.0
  %393 = vmatmul.mubr.f32.gmra.mxu0 %v228
  %v394 = vpop.f32.mrf.mxu0
  %v395 = vadd.f32 0.0, %v394
  %v396 = vpop.f32.mrf.mxu0
  %397 = vmatprep.mubr.f32.mxu0 0.0
  %398 = vmatmul.mubr.f32.gmra.mxu0 %v229
  %v399 = vpop.f32.mrf.mxu0
  %v400 = vadd.f32 0.0, %v399
  %v401 = vpop.f32.mrf.mxu0
  %402 = vmatprep.mubr.f32.mxu0 0.0
  %403 = vmatmul.mubr.f32.gmra.mxu0 %v230
  %v404 = vpop.f32.mrf.mxu0
  %v405 = vadd.f32 0.0, %v404
  %v406 = vpop.f32.mrf.mxu0
  %407 = vmatprep.mubr.f32.mxu0 0.0
  %408 = vmatmul.mubr.f32.gmra.mxu0 %v231
  %v409 = vpop.f32.mrf.mxu0
  %v410 = vadd.f32 0.0, %v409
  %v411 = vpop.f32.mrf.mxu0
  %412 = vmatprep.mubr.f32.mxu0 0.0
  %413 = vmatmul.mubr.f32.gmra.mxu0 %v232
  %v414 = vpop.f32.mrf.mxu0
  %v415 = vadd.f32 0.0, %v414
  %v416 = vpop.f32.mrf.mxu0
  %417 = vmatprep.mubr.f32.mxu0 0.0
  %418 = vmatmul.mubr.f32.gmra.mxu0 %v233
  %v419 = vpop.f32.mrf.mxu0
  %v420 = vadd.f32 0.0, %v419
  %v421 = vpop.f32.mrf.mxu0
  %422 = vmatprep.mubr.f32.mxu0 0.0
  %423 = vmatmul.mubr.f32.gmra.mxu0 %v234
  %v424 = vpop.f32.mrf.mxu0
  %v425 = vadd.f32 0.0, %v424
  %v426 = vpop.f32.mrf.mxu0
  %427 = vmatprep.mubr.f32.mxu0 0.0
  %428 = vmatmul.mubr.f32.gmra.mxu0 %v235
  %v429 = vpop.f32.mrf.mxu0
  %v430 = vadd.f32 0.0, %v429
  %v431 = vpop.f32.mrf.mxu0
  %432 = vmatprep.mubr.f32.mxu0 0.0
  %433 = vmatmul.mubr.f32.gmra.mxu0 %v236
  %v434 = vpop.f32.mrf.mxu0
  %v435 = vadd.f32 0.0, %v434
  %v436 = vpop.f32.mrf.mxu0
  %437 = vmatprep.mubr.f32.mxu0 0.0
  %438 = vmatmul.mubr.f32.gmra.mxu0 %v237
  %v439 = vpop.f32.mrf.mxu0
  %v440 = vadd.f32 0.0, %v439
  %v441 = vpop.f32.mrf.mxu0
  %442 = vmatprep.mubr.f32.mxu0 0.0
  %443 = vmatmul.mubr.f32.gmra.mxu0 %v238
  %v444 = vpop.f32.mrf.mxu0
  %v445 = vadd.f32 0.0, %v444
  %v446 = vpop.f32.mrf.mxu0
  %447 = vmatprep.mubr.f32.mxu0 0.0
  %448 = vmatmul.mubr.f32.gmra.mxu0 %v239
  %v449 = vpop.f32.mrf.mxu0
  %v450 = vadd.f32 0.0, %v449
  %v451 = vpop.f32.mrf.mxu0
  %452 = vmatprep.mubr.f32.mxu0 0.0
  %453 = vmatmul.mubr.f32.gmra.mxu0 %v240
  %v454 = vpop.f32.mrf.mxu0
  %v455 = vadd.f32 0.0, %v454
  %v456 = vpop.f32.mrf.mxu0
  %457 = vmatprep.mubr.f32.mxu0 0.0
  %458 = vmatmul.mubr.f32.gmra.mxu0 %v241
  %v459 = vpop.f32.mrf.mxu0
  %v460 = vadd.f32 0.0, %v459
  %v461 = vpop.f32.mrf.mxu0
  %462 = vmatprep.mubr.f32.mxu0 0.0
  %463 = vmatmul.mubr.f32.gmra.mxu0 %v242
  %v464 = vpop.f32.mrf.mxu0
  %v465 = vadd.f32 0.0, %v464
  %v466 = vpop.f32.mrf.mxu0
  %467 = vmatprep.mubr.f32.mxu0 0.0
  %468 = vmatmul.mubr.f32.gmra.mxu0 %v243
  %v469 = vpop.f32.mrf.mxu0
  %v470 = vadd.f32 0.0, %v469
  %v471 = vpop.f32.mrf.mxu0
  %472 = vmatprep.mubr.f32.mxu0 0.0
  %473 = vmatmul.mubr.f32.gmra.mxu0 %v244
  %v474 = vpop.f32.mrf.mxu0
  %v475 = vadd.f32 0.0, %v474
  %v476 = vpop.f32.mrf.mxu0
  %477 = vmatprep.mubr.f32.mxu0 0.0
  %478 = vmatmul.mubr.f32.gmra.mxu0 %v245
  %v479 = vpop.f32.mrf.mxu0
  %v480 = vadd.f32 0.0, %v479
  %v481 = vpop.f32.mrf.mxu0
  %482 = vmatprep.mubr.f32.mxu0 0.0
  %483 = vmatmul.mubr.f32.gmra.mxu0 %v246
  %v484 = vpop.f32.mrf.mxu0
  %v485 = vadd.f32 0.0, %v484
  %v486 = vpop.f32.mrf.mxu0
  %487 = vdwg.mxu0
  %488 = vmatprep.subr.mxu0 0.0
  %489 = vmatpush1.msra.mxu0 %v214
  %490 = vmatprep.subr.mxu0 0.0
  %491 = vmatpush1.msra.mxu0 %v213
  %492 = vmatprep.subr.mxu0 0.0
  %493 = vmatpush1.msra.mxu0 %v212
  %494 = vmatprep.subr.mxu0 0.0
  %495 = vmatpush1.msra.mxu0 %v211
  %496 = vmatprep.subr.mxu0 0.0
  %497 = vmatpush1.msra.mxu0 %v210
  %498 = vmatprep.subr.mxu0 0.0
  %499 = vmatpush1.msra.mxu0 %v209
  %500 = vmatprep.subr.mxu0 0.0
  %501 = vmatpush1.msra.mxu0 %v208
  %502 = vmatprep.subr.mxu0 0.0
  %503 = vmatpush1.msra.mxu0 %v207
  %504 = vmatprep.subr.mxu0 0.0
  %505 = vmatpush1.msra.mxu0 %v206
  %506 = vmatprep.subr.mxu0 0.0
  %507 = vmatpush1.msra.mxu0 %v205
  %508 = vmatprep.subr.mxu0 0.0
  %509 = vmatpush1.msra.mxu0 %v204
  %510 = vmatprep.subr.mxu0 0.0
  %511 = vmatpush1.msra.mxu0 %v203
  %512 = vmatprep.subr.mxu0 0.0
  %513 = vmatpush1.msra.mxu0 %v202
  %514 = vmatprep.subr.mxu0 0.0
  %515 = vmatpush1.msra.mxu0 %v201
  %516 = vmatprep.subr.mxu0 0.0
  %517 = vmatpush1.msra.mxu0 %v200
  %518 = vmatprep.subr.mxu0 0.0
  %519 = vmatpush1.msra.mxu0 %v199
  %520 = vmatprep.subr.mxu0 0.0
  %521 = vmatpush2.msra.mxu0 0.0
  %522 = vmatprep.subr.mxu0 0.0
  %523 = vmatpush2.msra.mxu0 0.0
  %524 = vmatprep.subr.mxu0 0.0
  %525 = vmatpush2.msra.mxu0 0.0
  %526 = vmatprep.subr.mxu0 0.0
  %527 = vmatpush2.msra.mxu0 0.0
  %528 = vmatprep.subr.mxu0 0.0
  %529 = vmatpush2.msra.mxu0 0.0
  %530 = vmatprep.subr.mxu0 0.0
  %531 = vmatpush2.msra.mxu0 0.0
  %532 = vmatprep.subr.mxu0 0.0
  %533 = vmatpush2.msra.mxu0 0.0
  %534 = vmatprep.subr.mxu0 0.0
  %535 = vmatpush2.msra.mxu0 0.0
  %536 = vmatprep.subr.mxu0 0.0
  %537 = vmatpush2.msra.mxu0 0.0
  %538 = vmatprep.subr.mxu0 0.0
  %539 = vmatpush2.msra.mxu0 0.0
  %540 = vmatprep.subr.mxu0 0.0
  %541 = vmatpush2.msra.mxu0 0.0
  %542 = vmatprep.subr.mxu0 0.0
  %543 = vmatpush2.msra.mxu0 0.0
  %544 = vmatprep.subr.mxu0 0.0
  %545 = vmatpush2.msra.mxu0 0.0
  %546 = vmatprep.subr.mxu0 0.0
  %547 = vmatpush2.msra.mxu0 0.0
  %548 = vmatprep.subr.mxu0 0.0
  %549 = vmatpush2.msra.mxu0 0.0
  %550 = vmatprep.subr.mxu0 0.0
  %551 = vmatpush2.msra.mxu0 0.0
  %552 = vmatprep.mubr.f32.mxu0 0.0
  %553 = vmatmul.mubr.f32.gmra.mxu0 %v135
  %v554 = vpop.f32.mrf.mxu0
  %v555 = vadd.f32 %v330, %v554
  %v556 = vpop.f32.mrf.mxu0
  %557 = vmatprep.mubr.f32.mxu0 0.0
  %558 = vmatmul.mubr.f32.gmra.mxu0 %v136
  %v559 = vpop.f32.mrf.mxu0
  %v560 = vadd.f32 %v335, %v559
  %v561 = vpop.f32.mrf.mxu0
  %562 = vmatprep.mubr.f32.mxu0 0.0
  %563 = vmatmul.mubr.f32.gmra.mxu0 %v137
  %v564 = vpop.f32.mrf.mxu0
  %v565 = vadd.f32 %v340, %v564
  %v566 = vpop.f32.mrf.mxu0
  %567 = vmatprep.mubr.f32.mxu0 0.0
  %568 = vmatmul.mubr.f32.gmra.mxu0 %v138
  %v569 = vpop.f32.mrf.mxu0
  %v570 = vadd.f32 %v345, %v569
  %v571 = vpop.f32.mrf.mxu0
  %572 = vmatprep.mubr.f32.mxu0 0.0
  %573 = vmatmul.mubr.f32.gmra.mxu0 %v139
  %v574 = vpop.f32.mrf.mxu0
  %v575 = vadd.f32 %v350, %v574
  %v576 = vpop.f32.mrf.mxu0
  %577 = vmatprep.mubr.f32.mxu0 0.0
  %578 = vmatmul.mubr.f32.gmra.mxu0 %v140
  %v579 = vpop.f32.mrf.mxu0
  %v580 = vadd.f32 %v355, %v579
  %v581 = vpop.f32.mrf.mxu0
  %582 = vmatprep.mubr.f32.mxu0 0.0
  %583 = vmatmul.mubr.f32.gmra.mxu0 %v141
  %v584 = vpop.f32.mrf.mxu0
  %v585 = vadd.f32 %v360, %v584
  %v586 = vpop.f32.mrf.mxu0
  %587 = vmatprep.mubr.f32.mxu0 0.0
  %588 = vmatmul.mubr.f32.gmra.mxu0 %v142
  %v589 = vpop.f32.mrf.mxu0
  %v590 = vadd.f32 %v365, %v589
  %v591 = vpop.f32.mrf.mxu0
  %592 = vmatprep.mubr.f32.mxu0 0.0
  %593 = vmatmul.mubr.f32.gmra.mxu0 %v143
  %v594 = vpop.f32.mrf.mxu0
  %v595 = vadd.f32 %v370, %v594
  %v596 = vpop.f32.mrf.mxu0
  %597 = vmatprep.mubr.f32.mxu0 0.0
  %598 = vmatmul.mubr.f32.gmra.mxu0 %v144
  %v599 = vpop.f32.mrf.mxu0
  %v600 = vadd.f32 %v375, %v599
  %v601 = vpop.f32.mrf.mxu0
  %602 = vmatprep.mubr.f32.mxu0 0.0
  %603 = vmatmul.mubr.f32.gmra.mxu0 %v145
  %v604 = vpop.f32.mrf.mxu0
  %v605 = vadd.f32 %v380, %v604
  %v606 = vpop.f32.mrf.mxu0
  %607 = vmatprep.mubr.f32.mxu0 0.0
  %608 = vmatmul.mubr.f32.gmra.mxu0 %v146
  %v609 = vpop.f32.mrf.mxu0
  %v610 = vadd.f32 %v385, %v609
  %v611 = vpop.f32.mrf.mxu0
  %612 = vmatprep.mubr.f32.mxu0 0.0
  %613 = vmatmul.mubr.f32.gmra.mxu0 %v147
  %v614 = vpop.f32.mrf.mxu0
  %v615 = vadd.f32 %v390, %v614
  %v616 = vpop.f32.mrf.mxu0
  %617 = vmatprep.mubr.f32.mxu0 0.0
  %618 = vmatmul.mubr.f32.gmra.mxu0 %v148
  %v619 = vpop.f32.mrf.mxu0
  %v620 = vadd.f32 %v395, %v619
  %v621 = vpop.f32.mrf.mxu0
  %622 = vmatprep.mubr.f32.mxu0 0.0
  %623 = vmatmul.mubr.f32.gmra.mxu0 %v149
  %v624 = vpop.f32.mrf.mxu0
  %v625 = vadd.f32 %v400, %v624
  %v626 = vpop.f32.mrf.mxu0
  %627 = vmatprep.mubr.f32.mxu0 0.0
  %628 = vmatmul.mubr.f32.gmra.mxu0 %v150
  %v629 = vpop.f32.mrf.mxu0
  %v630 = vadd.f32 %v405, %v629
  %v631 = vpop.f32.mrf.mxu0
  %632 = vmatprep.mubr.f32.mxu0 0.0
  %633 = vmatmul.mubr.f32.gmra.mxu0 %v151
  %v634 = vpop.f32.mrf.mxu0
  %v635 = vadd.f32 %v410, %v634
  %v636 = vpop.f32.mrf.mxu0
  %637 = vmatprep.mubr.f32.mxu0 0.0
  %638 = vmatmul.mubr.f32.gmra.mxu0 %v152
  %v639 = vpop.f32.mrf.mxu0
  %v640 = vadd.f32 %v415, %v639
  %v641 = vpop.f32.mrf.mxu0
  %642 = vmatprep.mubr.f32.mxu0 0.0
  %643 = vmatmul.mubr.f32.gmra.mxu0 %v153
  %v644 = vpop.f32.mrf.mxu0
  %v645 = vadd.f32 %v420, %v644
  %v646 = vpop.f32.mrf.mxu0
  %647 = vmatprep.mubr.f32.mxu0 0.0
  %648 = vmatmul.mubr.f32.gmra.mxu0 %v154
  %v649 = vpop.f32.mrf.mxu0
  %v650 = vadd.f32 %v425, %v649
  %v651 = vpop.f32.mrf.mxu0
  %652 = vmatprep.mubr.f32.mxu0 0.0
  %653 = vmatmul.mubr.f32.gmra.mxu0 %v155
  %v654 = vpop.f32.mrf.mxu0
  %v655 = vadd.f32 %v430, %v654
  %v656 = vpop.f32.mrf.mxu0
  %657 = vmatprep.mubr.f32.mxu0 0.0
  %658 = vmatmul.mubr.f32.gmra.mxu0 %v156
  %v659 = vpop.f32.mrf.mxu0
  %v660 = vadd.f32 %v435, %v659
  %v661 = vpop.f32.mrf.mxu0
  %662 = vmatprep.mubr.f32.mxu0 0.0
  %663 = vmatmul.mubr.f32.gmra.mxu0 %v157
  %v664 = vpop.f32.mrf.mxu0
  %v665 = vadd.f32 %v440, %v664
  %v666 = vpop.f32.mrf.mxu0
  %667 = vmatprep.mubr.f32.mxu0 0.0
  %668 = vmatmul.mubr.f32.gmra.mxu0 %v158
  %v669 = vpop.f32.mrf.mxu0
  %v670 = vadd.f32 %v445, %v669
  %v671 = vpop.f32.mrf.mxu0
  %672 = vmatprep.mubr.f32.mxu0 0.0
  %673 = vmatmul.mubr.f32.gmra.mxu0 %v159
  %v674 = vpop.f32.mrf.mxu0
  %v675 = vadd.f32 %v450, %v674
  %v676 = vpop.f32.mrf.mxu0
  %677 = vmatprep.mubr.f32.mxu0 0.0
  %678 = vmatmul.mubr.f32.gmra.mxu0 %v160
  %v679 = vpop.f32.mrf.mxu0
  %v680 = vadd.f32 %v455, %v679
  %v681 = vpop.f32.mrf.mxu0
  %682 = vmatprep.mubr.f32.mxu0 0.0
  %683 = vmatmul.mubr.f32.gmra.mxu0 %v161
  %v684 = vpop.f32.mrf.mxu0
  %v685 = vadd.f32 %v460, %v684
  %v686 = vpop.f32.mrf.mxu0
  %687 = vmatprep.mubr.f32.mxu0 0.0
  %688 = vmatmul.mubr.f32.gmra.mxu0 %v162
  %v689 = vpop.f32.mrf.mxu0
  %v690 = vadd.f32 %v465, %v689
  %v691 = vpop.f32.mrf.mxu0
  %692 = vmatprep.mubr.f32.mxu0 0.0
  %693 = vmatmul.mubr.f32.gmra.mxu0 %v163
  %v694 = vpop.f32.mrf.mxu0
  %v695 = vadd.f32 %v470, %v694
  %v696 = vpop.f32.mrf.mxu0
  %697 = vmatprep.mubr.f32.mxu0 0.0
  %698 = vmatmul.mubr.f32.gmra.mxu0 %v164
  %v699 = vpop.f32.mrf.mxu0
  %v700 = vadd.f32 %v475, %v699
  %v701 = vpop.f32.mrf.mxu0
  %702 = vmatprep.mubr.f32.mxu0 0.0
  %703 = vmatmul.mubr.f32.gmra.mxu0 %v165
  %v704 = vpop.f32.mrf.mxu0
  %v705 = vadd.f32 %v480, %v704
  %v706 = vpop.f32.mrf.mxu0
  %707 = vmatprep.mubr.f32.mxu0 0.0
  %708 = vmatmul.mubr.f32.gmra.mxu0 %v166
  %v709 = vpop.f32.mrf.mxu0
  %v710 = vadd.f32 %v485, %v709
  %v711 = vpop.f32.mrf.mxu0
  %712 = vdwg.mxu0
  %713 = vst [vmem:[%s7] sm:$0xff] %v555
  %714 = vst [vmem:[%s7 + $0x8] sm:$0xff] %v560
  %715 = vst [vmem:[%s7 + $0x10] sm:$0xff] %v565
  %716 = vst [vmem:[%s7 + $0x18] sm:$0xff] %v570
  %717 = vst [vmem:[%s7 + $0x20] sm:$0xff] %v575
  %718 = vst [vmem:[%s7 + $0x28] sm:$0xff] %v580
  %719 = vst [vmem:[%s7 + $0x30] sm:$0xff] %v585
  %720 = vst [vmem:[%s7 + $0x38] sm:$0xff] %v590
  %721 = vst [vmem:[%s7 + $0x40] sm:$0xff] %v595
  %722 = vst [vmem:[%s7 + $0x48] sm:$0xff] %v600
  %723 = vst [vmem:[%s7 + $0x50] sm:$0xff] %v605
  %724 = vst [vmem:[%s7 + $0x58] sm:$0xff] %v610
  %725 = vst [vmem:[%s7 + $0x60] sm:$0xff] %v615
  %726 = vst [vmem:[%s7 + $0x68] sm:$0xff] %v620
  %727 = vst [vmem:[%s7 + $0x70] sm:$0xff] %v625
  %728 = vst [vmem:[%s7 + $0x78] sm:$0xff] %v630
  %729 = vst [vmem:[%s7 + $0x80] sm:$0xff] %v635
  %730 = vst [vmem:[%s7 + $0x88] sm:$0xff] %v640
  %731 = vst [vmem:[%s7 + $0x90] sm:$0xff] %v645
  %732 = vst [vmem:[%s7 + $0x98] sm:$0xff] %v650
  %733 = vst [vmem:[%s7 + $0xa0] sm:$0xff] %v655
  %734 = vst [vmem:[%s7 + $0xa8] sm:$0xff] %v660
  %735 = vst [vmem:[%s7 + $0xb0] sm:$0xff] %v665
  %736 = vst [vmem:[%s7 + $0xb8] sm:$0xff] %v670
  %737 = vst [vmem:[%s7 + $0xc0] sm:$0xff] %v675
  %738 = vst [vmem:[%s7 + $0xc8] sm:$0xff] %v680
  %739 = vst [vmem:[%s7 + $0xd0] sm:$0xff] %v685
  %740 = vst [vmem:[%s7 + $0xd8] sm:$0xff] %v690
  %741 = vst [vmem:[%s7 + $0xe0] sm:$0xff] %v695
  %742 = vst [vmem:[%s7 + $0xe8] sm:$0xff] %v700
  %743 = vst [vmem:[%s7 + $0xf0] sm:$0xff] %v705
  %744 = vst [vmem:[%s7 + $0xf8] sm:$0xff] %v710
  // Predicated region
  $region26: #{gcn_forward.9} parent=0 // pred_check
    _
  $region27: #{gcn_forward.9} parent=0 // pred_check_branch
    %746 = sbr.rel (0) target = $region29
  $region28: #{gcn_forward.9} parent=0 // pred_region
    _
  $region29: #{gcn_forward.9} parent=0 // pred_fallthru
    _
  // Predicated region
  $region30: #{gcn_forward.9} parent=0 // pred_check
    _
  $region31: #{gcn_forward.9} parent=0 // pred_check_branch
    %748 = sbr.rel (0) target = $region33
  $region32: #{gcn_forward.9} parent=0 // pred_region
    _
  $region33: #{gcn_forward.9} parent=0 // pred_fallthru
    _
  // Predicated region
  $region34: #{gcn_forward.9} parent=0 // pred_check
    _
  $region35: #{gcn_forward.9} parent=0 // pred_check_branch
    %750 = sbr.rel (0) target = $region37
  $region36: #{gcn_forward.9} parent=0 // pred_region
    _
  $region37: #{gcn_forward.9} parent=0 // pred_fallthru
    _
  // Predicated region
  $region38: #{gcn_forward.9} parent=0 // pred_check
    _
  $region39: #{gcn_forward.9} parent=0 // pred_check_branch
    %752 = sbr.rel (0) target = $region41
  $region40: #{gcn_forward.9} parent=0 // pred_region
    _
  $region41: #{gcn_forward.9} parent=0 // pred_fallthru
    _

// kernel: gcn_forward.8
$region0: #{gcn_forward.8}
  #allocation0 [shape = 'u32[]', space=smem, size = 0x4, offset = 0x4, fixed_abs, tag = 'smem constant byte address 0x4 - core index']
  #allocation1 [shape = 'u32[144,128]{1,0:T(1,128)}', space=vmem, size = 0x12000, scoped, tag = 'internal scratch']
  %s0 = inlined_call_operand.vmem [shape: f32[256,256], index: 0, kind: input, shape index: {}]
  %s1 = inlined_call_operand.vmem [shape: f32[256,128], index: 1, kind: input, shape index: {}]
  %s2 = inlined_call_operand.vmem [shape: f32[256,128], index: 2, kind: output, shape index: {0}]
  %s3 = inlined_call_operand.vmem [shape: f32[1,2,128], index: 3, kind: output, shape index: {1}]
  %4 = xla_tuple %s2, %s3
  %s5 = sld [smem:[#allocation0]]
  $region34: #{gcn_forward.8} parent=0
    _
  %s7 = ssub.s32 1, %s5
  %s8 = scalar_select 0, %s7, %s5
  // Predicated region
  $region2: #{gcn_forward.8} parent=0 // pred_check
    _
  $region3: #{gcn_forward.8} parent=0 // pred_check_branch
    %10 = sbr.rel (0) target = $region5
  $region4: #{gcn_forward.8} parent=0 // pred_region
    _
  $region5: #{gcn_forward.8} parent=0 // pred_fallthru
    _
  // Predicated region
  $region6: #{gcn_forward.8} parent=0 // pred_check
    _
  $region7: #{gcn_forward.8} parent=0 // pred_check_branch
    %12 = sbr.rel (0) target = $region9
  $region8: #{gcn_forward.8} parent=0 // pred_region
    _
  $region9: #{gcn_forward.8} parent=0 // pred_fallthru
    _
  %p13 = scmp.eq.s32.totalorder 0, 0
  // Predicated region
  $region10: #{gcn_forward.8} parent=0 // pred_check
    %p14 = pneg %p13
  $region11: #{gcn_forward.8} parent=0 // pred_check_branch
    %16 = sbr.rel (%p14) target = $region13
  $region12: #{gcn_forward.8} parent=0 // pred_region
    %17 = vst [vmem:[%s2] sm:$0xff] 0.0
    %18 = vst [vmem:[%s2 + $0x8] sm:$0xff] 0.0
    %19 = vst [vmem:[%s2 + $0x10] sm:$0xff] 0.0
    %20 = vst [vmem:[%s2 + $0x18] sm:$0xff] 0.0
    %21 = vst [vmem:[%s2 + $0x20] sm:$0xff] 0.0
    %22 = vst [vmem:[%s2 + $0x28] sm:$0xff] 0.0
    %23 = vst [vmem:[%s2 + $0x30] sm:$0xff] 0.0
    %24 = vst [vmem:[%s2 + $0x38] sm:$0xff] 0.0
    %25 = vst [vmem:[%s2 + $0x40] sm:$0xff] 0.0
    %26 = vst [vmem:[%s2 + $0x48] sm:$0xff] 0.0
    %27 = vst [vmem:[%s2 + $0x50] sm:$0xff] 0.0
    %28 = vst [vmem:[%s2 + $0x58] sm:$0xff] 0.0
    %29 = vst [vmem:[%s2 + $0x60] sm:$0xff] 0.0
    %30 = vst [vmem:[%s2 + $0x68] sm:$0xff] 0.0
    %31 = vst [vmem:[%s2 + $0x70] sm:$0xff] 0.0
    %32 = vst [vmem:[%s2 + $0x78] sm:$0xff] 0.0
    %33 = vst [vmem:[%s2 + $0x80] sm:$0xff] 0.0
    %34 = vst [vmem:[%s2 + $0x88] sm:$0xff] 0.0
    %35 = vst [vmem:[%s2 + $0x90] sm:$0xff] 0.0
    %36 = vst [vmem:[%s2 + $0x98] sm:$0xff] 0.0
    %37 = vst [vmem:[%s2 + $0xa0] sm:$0xff] 0.0
    %38 = vst [vmem:[%s2 + $0xa8] sm:$0xff] 0.0
    %39 = vst [vmem:[%s2 + $0xb0] sm:$0xff] 0.0
    %40 = vst [vmem:[%s2 + $0xb8] sm:$0xff] 0.0
    %41 = vst [vmem:[%s2 + $0xc0] sm:$0xff] 0.0
    %42 = vst [vmem:[%s2 + $0xc8] sm:$0xff] 0.0
    %43 = vst [vmem:[%s2 + $0xd0] sm:$0xff] 0.0
    %44 = vst [vmem:[%s2 + $0xd8] sm:$0xff] 0.0
    %45 = vst [vmem:[%s2 + $0xe0] sm:$0xff] 0.0
    %46 = vst [vmem:[%s2 + $0xe8] sm:$0xff] 0.0
    %47 = vst [vmem:[%s2 + $0xf0] sm:$0xff] 0.0
    %48 = vst [vmem:[%s2 + $0xf8] sm:$0xff] 0.0
  $region13: #{gcn_forward.8} parent=0 // pred_fallthru
    _
  %v49 = vld [vmem:[%s2] sm:$0xff]
  %v50 = vld [vmem:[%s2 + $0x8] sm:$0xff]
  %v51 = vld [vmem:[%s2 + $0x10] sm:$0xff]
  %v52 = vld [vmem:[%s2 + $0x18] sm:$0xff]
  %v53 = vld [vmem:[%s2 + $0x20] sm:$0xff]
  %v54 = vld [vmem:[%s2 + $0x28] sm:$0xff]
  %v55 = vld [vmem:[%s2 + $0x30] sm:$0xff]
  %v56 = vld [vmem:[%s2 + $0x38] sm:$0xff]
  %v57 = vld [vmem:[%s2 + $0x40] sm:$0xff]
  %v58 = vld [vmem:[%s2 + $0x48] sm:$0xff]
  %v59 = vld [vmem:[%s2 + $0x50] sm:$0xff]
  %v60 = vld [vmem:[%s2 + $0x58] sm:$0xff]
  %v61 = vld [vmem:[%s2 + $0x60] sm:$0xff]
  %v62 = vld [vmem:[%s2 + $0x68] sm:$0xff]
  %v63 = vld [vmem:[%s2 + $0x70] sm:$0xff]
  %v64 = vld [vmem:[%s2 + $0x78] sm:$0xff]
  %v65 = vld [vmem:[%s2 + $0x80] sm:$0xff]
  %v66 = vld [vmem:[%s2 + $0x88] sm:$0xff]
  %v67 = vld [vmem:[%s2 + $0x90] sm:$0xff]
  %v68 = vld [vmem:[%s2 + $0x98] sm:$0xff]
  %v69 = vld [vmem:[%s2 + $0xa0] sm:$0xff]
  %v70 = vld [vmem:[%s2 + $0xa8] sm:$0xff]
  %v71 = vld [vmem:[%s2 + $0xb0] sm:$0xff]
  %v72 = vld [vmem:[%s2 + $0xb8] sm:$0xff]
  %v73 = vld [vmem:[%s2 + $0xc0] sm:$0xff]
  %v74 = vld [vmem:[%s2 + $0xc8] sm:$0xff]
  %v75 = vld [vmem:[%s2 + $0xd0] sm:$0xff]
  %v76 = vld [vmem:[%s2 + $0xd8] sm:$0xff]
  %v77 = vld [vmem:[%s2 + $0xe0] sm:$0xff]
  %v78 = vld [vmem:[%s2 + $0xe8] sm:$0xff]
  %v79 = vld [vmem:[%s2 + $0xf0] sm:$0xff]
  %v80 = vld [vmem:[%s2 + $0xf8] sm:$0xff]
  %v81 = vld [vmem:[%s0] sm:$0xff]
  %v82 = vld [vmem:[%s0 + $0x8] sm:$0xff]
  %v83 = vld [vmem:[%s0 + $0x10] sm:$0xff]
  %v84 = vld [vmem:[%s0 + $0x18] sm:$0xff]
  %v85 = vld [vmem:[%s0 + $0x20] sm:$0xff]
  %v86 = vld [vmem:[%s0 + $0x28] sm:$0xff]
  %v87 = vld [vmem:[%s0 + $0x30] sm:$0xff]
  %v88 = vld [vmem:[%s0 + $0x38] sm:$0xff]
  %v89 = vld [vmem:[%s0 + $0x40] sm:$0xff]
  %v90 = vld [vmem:[%s0 + $0x48] sm:$0xff]
  %v91 = vld [vmem:[%s0 + $0x50] sm:$0xff]
  %v92 = vld [vmem:[%s0 + $0x58] sm:$0xff]
  %v93 = vld [vmem:[%s0 + $0x60] sm:$0xff]
  %v94 = vld [vmem:[%s0 + $0x68] sm:$0xff]
  %v95 = vld [vmem:[%s0 + $0x70] sm:$0xff]
  %v96 = vld [vmem:[%s0 + $0x78] sm:$0xff]
  %v97 = vld [vmem:[%s0 + $0x80] sm:$0xff]
  %v98 = vld [vmem:[%s0 + $0x88] sm:$0xff]
  %v99 = vld [vmem:[%s0 + $0x90] sm:$0xff]
  %v100 = vld [vmem:[%s0 + $0x98] sm:$0xff]
  %v101 = vld [vmem:[%s0 + $0xa0] sm:$0xff]
  %v102 = vld [vmem:[%s0 + $0xa8] sm:$0xff]
  %v103 = vld [vmem:[%s0 + $0xb0] sm:$0xff]
  %v104 = vld [vmem:[%s0 + $0xb8] sm:$0xff]
  %v105 = vld [vmem:[%s0 + $0xc0] sm:$0xff]
  %v106 = vld [vmem:[%s0 + $0xc8] sm:$0xff]
  %v107 = vld [vmem:[%s0 + $0xd0] sm:$0xff]
  %v108 = vld [vmem:[%s0 + $0xd8] sm:$0xff]
  %v109 = vld [vmem:[%s0 + $0xe0] sm:$0xff]
  %v110 = vld [vmem:[%s0 + $0xe8] sm:$0xff]
  %v111 = vld [vmem:[%s0 + $0xf0] sm:$0xff]
  %v112 = vld [vmem:[%s0 + $0xf8] sm:$0xff]
  %v113 = vld [vmem:[%s0 + $0x100] sm:$0xff]
  %v114 = vld [vmem:[%s0 + $0x108] sm:$0xff]
  %v115 = vld [vmem:[%s0 + $0x110] sm:$0xff]
  %v116 = vld [vmem:[%s0 + $0x118] sm:$0xff]
  %v117 = vld [vmem:[%s0 + $0x120] sm:$0xff]
  %v118 = vld [vmem:[%s0 + $0x128] sm:$0xff]
  %v119 = vld [vmem:[%s0 + $0x130] sm:$0xff]
  %v120 = vld [vmem:[%s0 + $0x138] sm:$0xff]
  %v121 = vld [vmem:[%s0 + $0x140] sm:$0xff]
  %v122 = vld [vmem:[%s0 + $0x148] sm:$0xff]
  %v123 = vld [vmem:[%s0 + $0x150] sm:$0xff]
  %v124 = vld [vmem:[%s0 + $0x158] sm:$0xff]
  %v125 = vld [vmem:[%s0 + $0x160] sm:$0xff]
  %v126 = vld [vmem:[%s0 + $0x168] sm:$0xff]
  %v127 = vld [vmem:[%s0 + $0x170] sm:$0xff]
  %v128 = vld [vmem:[%s0 + $0x178] sm:$0xff]
  %v129 = vld [vmem:[%s0 + $0x180] sm:$0xff]
  %v130 = vld [vmem:[%s0 + $0x188] sm:$0xff]
  %v131 = vld [vmem:[%s0 + $0x190] sm:$0xff]
  %v132 = vld [vmem:[%s0 + $0x198] sm:$0xff]
  %v133 = vld [vmem:[%s0 + $0x1a0] sm:$0xff]
  %v134 = vld [vmem:[%s0 + $0x1a8] sm:$0xff]
  %v135 = vld [vmem:[%s0 + $0x1b0] sm:$0xff]
  %v136 = vld [vmem:[%s0 + $0x1b8] sm:$0xff]
  %v137 = vld [vmem:[%s0 + $0x1c0] sm:$0xff]
  %v138 = vld [vmem:[%s0 + $0x1c8] sm:$0xff]
  %v139 = vld [vmem:[%s0 + $0x1d0] sm:$0xff]
  %v140 = vld [vmem:[%s0 + $0x1d8] sm:$0xff]
  %v141 = vld [vmem:[%s0 + $0x1e0] sm:$0xff]
  %v142 = vld [vmem:[%s0 + $0x1e8] sm:$0xff]
  %v143 = vld [vmem:[%s0 + $0x1f0] sm:$0xff]
  %v144 = vld [vmem:[%s0 + $0x1f8] sm:$0xff]
  %v145 = vld [vmem:[%s1] sm:$0xff]
  %v146 = vld [vmem:[%s1 + $0x8] sm:$0xff]
  %v147 = vld [vmem:[%s1 + $0x10] sm:$0xff]
  %v148 = vld [vmem:[%s1 + $0x18] sm:$0xff]
  %v149 = vld [vmem:[%s1 + $0x20] sm:$0xff]
  %v150 = vld [vmem:[%s1 + $0x28] sm:$0xff]
  %v151 = vld [vmem:[%s1 + $0x30] sm:$0xff]
  %v152 = vld [vmem:[%s1 + $0x38] sm:$0xff]
  %v153 = vld [vmem:[%s1 + $0x40] sm:$0xff]
  %v154 = vld [vmem:[%s1 + $0x48] sm:$0xff]
  %v155 = vld [vmem:[%s1 + $0x50] sm:$0xff]
  %v156 = vld [vmem:[%s1 + $0x58] sm:$0xff]
  %v157 = vld [vmem:[%s1 + $0x60] sm:$0xff]
  %v158 = vld [vmem:[%s1 + $0x68] sm:$0xff]
  %v159 = vld [vmem:[%s1 + $0x70] sm:$0xff]
  %v160 = vld [vmem:[%s1 + $0x78] sm:$0xff]
  %v161 = vld [vmem:[%s1 + $0x80] sm:$0xff]
  %v162 = vld [vmem:[%s1 + $0x88] sm:$0xff]
  %v163 = vld [vmem:[%s1 + $0x90] sm:$0xff]
  %v164 = vld [vmem:[%s1 + $0x98] sm:$0xff]
  %v165 = vld [vmem:[%s1 + $0xa0] sm:$0xff]
  %v166 = vld [vmem:[%s1 + $0xa8] sm:$0xff]
  %v167 = vld [vmem:[%s1 + $0xb0] sm:$0xff]
  %v168 = vld [vmem:[%s1 + $0xb8] sm:$0xff]
  %v169 = vld [vmem:[%s1 + $0xc0] sm:$0xff]
  %v170 = vld [vmem:[%s1 + $0xc8] sm:$0xff]
  %v171 = vld [vmem:[%s1 + $0xd0] sm:$0xff]
  %v172 = vld [vmem:[%s1 + $0xd8] sm:$0xff]
  %v173 = vld [vmem:[%s1 + $0xe0] sm:$0xff]
  %v174 = vld [vmem:[%s1 + $0xe8] sm:$0xff]
  %v175 = vld [vmem:[%s1 + $0xf0] sm:$0xff]
  %v176 = vld [vmem:[%s1 + $0xf8] sm:$0xff]
  %177 = vmatprep.subr.mxu0 0.0
  %178 = vmatpush1.msra.mxu0 %v160
  %179 = vmatprep.subr.mxu0 0.0
  %180 = vmatpush1.msra.mxu0 %v159
  %181 = vmatprep.subr.mxu0 0.0
  %182 = vmatpush1.msra.mxu0 %v158
  %183 = vmatprep.subr.mxu0 0.0
  %184 = vmatpush1.msra.mxu0 %v157
  %185 = vmatprep.subr.mxu0 0.0
  %186 = vmatpush1.msra.mxu0 %v156
  %187 = vmatprep.subr.mxu0 0.0
  %188 = vmatpush1.msra.mxu0 %v155
  %189 = vmatprep.subr.mxu0 0.0
  %190 = vmatpush1.msra.mxu0 %v154
  %191 = vmatprep.subr.mxu0 0.0
  %192 = vmatpush1.msra.mxu0 %v153
  %193 = vmatprep.subr.mxu0 0.0
  %194 = vmatpush1.msra.mxu0 %v152
  %195 = vmatprep.subr.mxu0 0.0
  %196 = vmatpush1.msra.mxu0 %v151
  %197 = vmatprep.subr.mxu0 0.0
  %198 = vmatpush1.msra.mxu0 %v150
  %199 = vmatprep.subr.mxu0 0.0
  %200 = vmatpush1.msra.mxu0 %v149
  %201 = vmatprep.subr.mxu0 0.0
  %202 = vmatpush1.msra.mxu0 %v148
  %203 = vmatprep.subr.mxu0 0.0
  %204 = vmatpush1.msra.mxu0 %v147
  %205 = vmatprep.subr.mxu0 0.0
  %206 = vmatpush1.msra.mxu0 %v146
  %207 = vmatprep.subr.mxu0 0.0
  %208 = vmatpush1.msra.mxu0 %v145
  %209 = vmatprep.subr.mxu0 0.0
  %210 = vmatpush2.msra.mxu0 %v176
  %211 = vmatprep.subr.mxu0 0.0
  %212 = vmatpush2.msra.mxu0 %v175
  %213 = vmatprep.subr.mxu0 0.0
  %214 = vmatpush2.msra.mxu0 %v174
  %215 = vmatprep.subr.mxu0 0.0
  %216 = vmatpush2.msra.mxu0 %v173
  %217 = vmatprep.subr.mxu0 0.0
  %218 = vmatpush2.msra.mxu0 %v172
  %219 = vmatprep.subr.mxu0 0.0
  %220 = vmatpush2.msra.mxu0 %v171
  %221 = vmatprep.subr.mxu0 0.0
  %222 = vmatpush2.msra.mxu0 %v170
  %223 = vmatprep.subr.mxu0 0.0
  %224 = vmatpush2.msra.mxu0 %v169
  %225 = vmatprep.subr.mxu0 0.0
  %226 = vmatpush2.msra.mxu0 %v168
  %227 = vmatprep.subr.mxu0 0.0
  %228 = vmatpush2.msra.mxu0 %v167
  %229 = vmatprep.subr.mxu0 0.0
  %230 = vmatpush2.msra.mxu0 %v166
  %231 = vmatprep.subr.mxu0 0.0
  %232 = vmatpush2.msra.mxu0 %v165
  %233 = vmatprep.subr.mxu0 0.0
  %234 = vmatpush2.msra.mxu0 %v164
  %235 = vmatprep.subr.mxu0 0.0
  %236 = vmatpush2.msra.mxu0 %v163
  %237 = vmatprep.subr.mxu0 0.0
  %238 = vmatpush2.msra.mxu0 %v162
  %239 = vmatprep.subr.mxu0 0.0
  %240 = vmatpush2.msra.mxu0 %v161
  %241 = vmatprep.mubr.f32.mxu0 %v82
  %242 = vmatmul.mubr.f32.gmra.mxu0 %v81
  %v243 = vpop.f32.mrf.mxu0
  %v244 = vadd.f32 0.0, %v243
  %v245 = vpop.f32.mrf.mxu0
  %246 = vmatprep.mubr.f32.mxu0 %v84
  %247 = vmatmul.mubr.f32.gmra.mxu0 %v83
  %v248 = vpop.f32.mrf.mxu0
  %v249 = vadd.f32 0.0, %v248
  %v250 = vpop.f32.mrf.mxu0
  %251 = vmatprep.mubr.f32.mxu0 %v86
  %252 = vmatmul.mubr.f32.gmra.mxu0 %v85
  %v253 = vpop.f32.mrf.mxu0
  %v254 = vadd.f32 0.0, %v253
  %v255 = vpop.f32.mrf.mxu0
  %256 = vmatprep.mubr.f32.mxu0 %v88
  %257 = vmatmul.mubr.f32.gmra.mxu0 %v87
  %v258 = vpop.f32.mrf.mxu0
  %v259 = vadd.f32 0.0, %v258
  %v260 = vpop.f32.mrf.mxu0
  %261 = vmatprep.mubr.f32.mxu0 %v90
  %262 = vmatmul.mubr.f32.gmra.mxu0 %v89
  %v263 = vpop.f32.mrf.mxu0
  %v264 = vadd.f32 0.0, %v263
  %v265 = vpop.f32.mrf.mxu0
  %266 = vmatprep.mubr.f32.mxu0 %v92
  %267 = vmatmul.mubr.f32.gmra.mxu0 %v91
  %v268 = vpop.f32.mrf.mxu0
  %v269 = vadd.f32 0.0, %v268
  %v270 = vpop.f32.mrf.mxu0
  %271 = vmatprep.mubr.f32.mxu0 %v94
  %272 = vmatmul.mubr.f32.gmra.mxu0 %v93
  %v273 = vpop.f32.mrf.mxu0
  %v274 = vadd.f32 0.0, %v273
  %v275 = vpop.f32.mrf.mxu0
  %276 = vmatprep.mubr.f32.mxu0 %v96
  %277 = vmatmul.mubr.f32.gmra.mxu0 %v95
  %v278 = vpop.f32.mrf.mxu0
  %v279 = vadd.f32 0.0, %v278
  %v280 = vpop.f32.mrf.mxu0
  %281 = vmatprep.mubr.f32.mxu0 %v98
  %282 = vmatmul.mubr.f32.gmra.mxu0 %v97
  %v283 = vpop.f32.mrf.mxu0
  %v284 = vadd.f32 0.0, %v283
  %v285 = vpop.f32.mrf.mxu0
  %286 = vmatprep.mubr.f32.mxu0 %v100
  %287 = vmatmul.mubr.f32.gmra.mxu0 %v99
  %v288 = vpop.f32.mrf.mxu0
  %v289 = vadd.f32 0.0, %v288
  %v290 = vpop.f32.mrf.mxu0
  %291 = vmatprep.mubr.f32.mxu0 %v102
  %292 = vmatmul.mubr.f32.gmra.mxu0 %v101
  %v293 = vpop.f32.mrf.mxu0
  %v294 = vadd.f32 0.0, %v293
  %v295 = vpop.f32.mrf.mxu0
  %296 = vmatprep.mubr.f32.mxu0 %v104
  %297 = vmatmul.mubr.f32.gmra.mxu0 %v103
  %v298 = vpop.f32.mrf.mxu0
  %v299 = vadd.f32 0.0, %v298
  %v300 = vpop.f32.mrf.mxu0
  %301 = vmatprep.mubr.f32.mxu0 %v106
  %302 = vmatmul.mubr.f32.gmra.mxu0 %v105
  %v303 = vpop.f32.mrf.mxu0
  %v304 = vadd.f32 0.0, %v303
  %v305 = vpop.f32.mrf.mxu0
  %306 = vmatprep.mubr.f32.mxu0 %v108
  %307 = vmatmul.mubr.f32.gmra.mxu0 %v107
  %v308 = vpop.f32.mrf.mxu0
  %v309 = vadd.f32 0.0, %v308
  %v310 = vpop.f32.mrf.mxu0
  %311 = vmatprep.mubr.f32.mxu0 %v110
  %312 = vmatmul.mubr.f32.gmra.mxu0 %v109
  %v313 = vpop.f32.mrf.mxu0
  %v314 = vadd.f32 0.0, %v313
  %v315 = vpop.f32.mrf.mxu0
  %316 = vmatprep.mubr.f32.mxu0 %v112
  %317 = vmatmul.mubr.f32.gmra.mxu0 %v111
  %v318 = vpop.f32.mrf.mxu0
  %v319 = vadd.f32 0.0, %v318
  %v320 = vpop.f32.mrf.mxu0
  %321 = vmatprep.mubr.f32.mxu0 %v114
  %322 = vmatmul.mubr.f32.gmra.mxu0 %v113
  %v323 = vpop.f32.mrf.mxu0
  %v324 = vadd.f32 0.0, %v323
  %v325 = vpop.f32.mrf.mxu0
  %326 = vmatprep.mubr.f32.mxu0 %v116
  %327 = vmatmul.mubr.f32.gmra.mxu0 %v115
  %v328 = vpop.f32.mrf.mxu0
  %v329 = vadd.f32 0.0, %v328
  %v330 = vpop.f32.mrf.mxu0
  %331 = vmatprep.mubr.f32.mxu0 %v118
  %332 = vmatmul.mubr.f32.gmra.mxu0 %v117
  %v333 = vpop.f32.mrf.mxu0
  %v334 = vadd.f32 0.0, %v333
  %v335 = vpop.f32.mrf.mxu0
  %336 = vmatprep.mubr.f32.mxu0 %v120
  %337 = vmatmul.mubr.f32.gmra.mxu0 %v119
  %v338 = vpop.f32.mrf.mxu0
  %v339 = vadd.f32 0.0, %v338
  %v340 = vpop.f32.mrf.mxu0
  %341 = vmatprep.mubr.f32.mxu0 %v122
  %342 = vmatmul.mubr.f32.gmra.mxu0 %v121
  %v343 = vpop.f32.mrf.mxu0
  %v344 = vadd.f32 0.0, %v343
  %v345 = vpop.f32.mrf.mxu0
  %346 = vmatprep.mubr.f32.mxu0 %v124
  %347 = vmatmul.mubr.f32.gmra.mxu0 %v123
  %v348 = vpop.f32.mrf.mxu0
  %v349 = vadd.f32 0.0, %v348
  %v350 = vpop.f32.mrf.mxu0
  %351 = vmatprep.mubr.f32.mxu0 %v126
  %352 = vmatmul.mubr.f32.gmra.mxu0 %v125
  %v353 = vpop.f32.mrf.mxu0
  %v354 = vadd.f32 0.0, %v353
  %v355 = vpop.f32.mrf.mxu0
  %356 = vmatprep.mubr.f32.mxu0 %v128
  %357 = vmatmul.mubr.f32.gmra.mxu0 %v127
  %v358 = vpop.f32.mrf.mxu0
  %v359 = vadd.f32 0.0, %v358
  %v360 = vpop.f32.mrf.mxu0
  %361 = vmatprep.mubr.f32.mxu0 %v130
  %362 = vmatmul.mubr.f32.gmra.mxu0 %v129
  %v363 = vpop.f32.mrf.mxu0
  %v364 = vadd.f32 0.0, %v363
  %v365 = vpop.f32.mrf.mxu0
  %366 = vmatprep.mubr.f32.mxu0 %v132
  %367 = vmatmul.mubr.f32.gmra.mxu0 %v131
  %v368 = vpop.f32.mrf.mxu0
  %v369 = vadd.f32 0.0, %v368
  %v370 = vpop.f32.mrf.mxu0
  %371 = vmatprep.mubr.f32.mxu0 %v134
  %372 = vmatmul.mubr.f32.gmra.mxu0 %v133
  %v373 = vpop.f32.mrf.mxu0
  %v374 = vadd.f32 0.0, %v373
  %v375 = vpop.f32.mrf.mxu0
  %376 = vmatprep.mubr.f32.mxu0 %v136
  %377 = vmatmul.mubr.f32.gmra.mxu0 %v135
  %v378 = vpop.f32.mrf.mxu0
  %v379 = vadd.f32 0.0, %v378
  %v380 = vpop.f32.mrf.mxu0
  %381 = vmatprep.mubr.f32.mxu0 %v138
  %382 = vmatmul.mubr.f32.gmra.mxu0 %v137
  %v383 = vpop.f32.mrf.mxu0
  %v384 = vadd.f32 0.0, %v383
  %v385 = vpop.f32.mrf.mxu0
  %386 = vmatprep.mubr.f32.mxu0 %v140
  %387 = vmatmul.mubr.f32.gmra.mxu0 %v139
  %v388 = vpop.f32.mrf.mxu0
  %v389 = vadd.f32 0.0, %v388
  %v390 = vpop.f32.mrf.mxu0
  %391 = vmatprep.mubr.f32.mxu0 %v142
  %392 = vmatmul.mubr.f32.gmra.mxu0 %v141
  %v393 = vpop.f32.mrf.mxu0
  %v394 = vadd.f32 0.0, %v393
  %v395 = vpop.f32.mrf.mxu0
  %396 = vmatprep.mubr.f32.mxu0 %v144
  %397 = vmatmul.mubr.f32.gmra.mxu0 %v143
  %v398 = vpop.f32.mrf.mxu0
  %v399 = vadd.f32 0.0, %v398
  %v400 = vpop.f32.mrf.mxu0
  %401 = vdwg.mxu0
  %v402 = vadd.f32 %v49, %v244
  %v403 = vadd.f32 %v50, %v249
  %v404 = vadd.f32 %v51, %v254
  %v405 = vadd.f32 %v52, %v259
  %v406 = vadd.f32 %v53, %v264
  %v407 = vadd.f32 %v54, %v269
  %v408 = vadd.f32 %v55, %v274
  %v409 = vadd.f32 %v56, %v279
  %v410 = vadd.f32 %v57, %v284
  %v411 = vadd.f32 %v58, %v289
  %v412 = vadd.f32 %v59, %v294
  %v413 = vadd.f32 %v60, %v299
  %v414 = vadd.f32 %v61, %v304
  %v415 = vadd.f32 %v62, %v309
  %v416 = vadd.f32 %v63, %v314
  %v417 = vadd.f32 %v64, %v319
  %v418 = vadd.f32 %v65, %v324
  %v419 = vadd.f32 %v66, %v329
  %v420 = vadd.f32 %v67, %v334
  %v421 = vadd.f32 %v68, %v339
  %v422 = vadd.f32 %v69, %v344
  %v423 = vadd.f32 %v70, %v349
  %v424 = vadd.f32 %v71, %v354
  %v425 = vadd.f32 %v72, %v359
  %v426 = vadd.f32 %v73, %v364
  %v427 = vadd.f32 %v74, %v369
  %v428 = vadd.f32 %v75, %v374
  %v429 = vadd.f32 %v76, %v379
  %v430 = vadd.f32 %v77, %v384
  %v431 = vadd.f32 %v78, %v389
  %v432 = vadd.f32 %v79, %v394
  %v433 = vadd.f32 %v80, %v399
  %434 = vst [vmem:[%s2] sm:$0xff] %v402
  %435 = vst [vmem:[%s2 + $0x8] sm:$0xff] %v403
  %436 = vst [vmem:[%s2 + $0x10] sm:$0xff] %v404
  %437 = vst [vmem:[%s2 + $0x18] sm:$0xff] %v405
  %438 = vst [vmem:[%s2 + $0x20] sm:$0xff] %v406
  %439 = vst [vmem:[%s2 + $0x28] sm:$0xff] %v407
  %440 = vst [vmem:[%s2 + $0x30] sm:$0xff] %v408
  %441 = vst [vmem:[%s2 + $0x38] sm:$0xff] %v409
  %442 = vst [vmem:[%s2 + $0x40] sm:$0xff] %v410
  %443 = vst [vmem:[%s2 + $0x48] sm:$0xff] %v411
  %444 = vst [vmem:[%s2 + $0x50] sm:$0xff] %v412
  %445 = vst [vmem:[%s2 + $0x58] sm:$0xff] %v413
  %446 = vst [vmem:[%s2 + $0x60] sm:$0xff] %v414
  %447 = vst [vmem:[%s2 + $0x68] sm:$0xff] %v415
  %448 = vst [vmem:[%s2 + $0x70] sm:$0xff] %v416
  %449 = vst [vmem:[%s2 + $0x78] sm:$0xff] %v417
  %450 = vst [vmem:[%s2 + $0x80] sm:$0xff] %v418
  %451 = vst [vmem:[%s2 + $0x88] sm:$0xff] %v419
  %452 = vst [vmem:[%s2 + $0x90] sm:$0xff] %v420
  %453 = vst [vmem:[%s2 + $0x98] sm:$0xff] %v421
  %454 = vst [vmem:[%s2 + $0xa0] sm:$0xff] %v422
  %455 = vst [vmem:[%s2 + $0xa8] sm:$0xff] %v423
  %456 = vst [vmem:[%s2 + $0xb0] sm:$0xff] %v424
  %457 = vst [vmem:[%s2 + $0xb8] sm:$0xff] %v425
  %458 = vst [vmem:[%s2 + $0xc0] sm:$0xff] %v426
  %459 = vst [vmem:[%s2 + $0xc8] sm:$0xff] %v427
  %460 = vst [vmem:[%s2 + $0xd0] sm:$0xff] %v428
  %461 = vst [vmem:[%s2 + $0xd8] sm:$0xff] %v429
  %462 = vst [vmem:[%s2 + $0xe0] sm:$0xff] %v430
  %463 = vst [vmem:[%s2 + $0xe8] sm:$0xff] %v431
  %464 = vst [vmem:[%s2 + $0xf0] sm:$0xff] %v432
  %465 = vst [vmem:[%s2 + $0xf8] sm:$0xff] %v433
  // Predicated region
  $region14: #{gcn_forward.8} parent=0 // pred_check
    %p466 = pneg %p13
  $region15: #{gcn_forward.8} parent=0 // pred_check_branch
    %468 = sbr.rel (%p466) target = $region17
  $region16: #{gcn_forward.8} parent=0 // pred_region
    %v469 = vld [vmem:[%s2] sm:$0xff]
    %v470 = vld [vmem:[%s2 + $0x8] sm:$0xff]
    %v471 = vld [vmem:[%s2 + $0x10] sm:$0xff]
    %v472 = vld [vmem:[%s2 + $0x18] sm:$0xff]
    %v473 = vld [vmem:[%s2 + $0x20] sm:$0xff]
    %v474 = vld [vmem:[%s2 + $0x28] sm:$0xff]
    %v475 = vld [vmem:[%s2 + $0x30] sm:$0xff]
    %v476 = vld [vmem:[%s2 + $0x38] sm:$0xff]
    %v477 = vld [vmem:[%s2 + $0x40] sm:$0xff]
    %v478 = vld [vmem:[%s2 + $0x48] sm:$0xff]
    %v479 = vld [vmem:[%s2 + $0x50] sm:$0xff]
    %v480 = vld [vmem:[%s2 + $0x58] sm:$0xff]
    %v481 = vld [vmem:[%s2 + $0x60] sm:$0xff]
    %v482 = vld [vmem:[%s2 + $0x68] sm:$0xff]
    %v483 = vld [vmem:[%s2 + $0x70] sm:$0xff]
    %v484 = vld [vmem:[%s2 + $0x78] sm:$0xff]
    %v485 = vld [vmem:[%s2 + $0x80] sm:$0xff]
    %v486 = vld [vmem:[%s2 + $0x88] sm:$0xff]
    %v487 = vld [vmem:[%s2 + $0x90] sm:$0xff]
    %v488 = vld [vmem:[%s2 + $0x98] sm:$0xff]
    %v489 = vld [vmem:[%s2 + $0xa0] sm:$0xff]
    %v490 = vld [vmem:[%s2 + $0xa8] sm:$0xff]
    %v491 = vld [vmem:[%s2 + $0xb0] sm:$0xff]
    %v492 = vld [vmem:[%s2 + $0xb8] sm:$0xff]
    %v493 = vld [vmem:[%s2 + $0xc0] sm:$0xff]
    %v494 = vld [vmem:[%s2 + $0xc8] sm:$0xff]
    %v495 = vld [vmem:[%s2 + $0xd0] sm:$0xff]
    %v496 = vld [vmem:[%s2 + $0xd8] sm:$0xff]
    %v497 = vld [vmem:[%s2 + $0xe0] sm:$0xff]
    %v498 = vld [vmem:[%s2 + $0xe8] sm:$0xff]
    %v499 = vld [vmem:[%s2 + $0xf0] sm:$0xff]
    %v500 = vld [vmem:[%s2 + $0xf8] sm:$0xff]
    %v501 = vadd.f32 %v469, %v470
    %v502 = vadd.f32 %v501, %v471
    %v503 = vadd.f32 %v502, %v472
    %v504 = vadd.f32 %v503, %v473
    %v505 = vadd.f32 %v504, %v474
    %v506 = vadd.f32 %v505, %v475
    %v507 = vadd.f32 %v506, %v476
    %v508 = vadd.f32 %v507, %v477
    %v509 = vadd.f32 %v508, %v478
    %v510 = vadd.f32 %v509, %v479
    %v511 = vadd.f32 %v510, %v480
    %v512 = vadd.f32 %v511, %v481
    %v513 = vadd.f32 %v512, %v482
    %v514 = vadd.f32 %v513, %v483
    %v515 = vadd.f32 %v514, %v484
    %v516 = vadd.f32 %v515, %v485
    %v517 = vadd.f32 %v516, %v486
    %v518 = vadd.f32 %v517, %v487
    %v519 = vadd.f32 %v518, %v488
    %v520 = vadd.f32 %v519, %v489
    %v521 = vadd.f32 %v520, %v490
    %v522 = vadd.f32 %v521, %v491
    %v523 = vadd.f32 %v522, %v492
    %v524 = vadd.f32 %v523, %v493
    %v525 = vadd.f32 %v524, %v494
    %v526 = vadd.f32 %v525, %v495
    %v527 = vadd.f32 %v526, %v496
    %v528 = vadd.f32 %v527, %v497
    %v529 = vadd.f32 %v528, %v498
    %v530 = vadd.f32 %v529, %v499
    %v531 = vadd.f32 %v530, %v500
    %v532 = vrot.slane %v531, 4
    %v533 = vadd.f32 %v531, %v532
    %v534 = vrot.slane %v533, 2
    %v535 = vadd.f32 %v533, %v534
    %v536 = vrot.slane %v535, 1
    %v537 = vadd.f32 %v535, %v536
    %v538 = vmul.f32 %v469, %v469
    %v539 = vmul.f32 %v470, %v470
    %v540 = vmul.f32 %v471, %v471
    %v541 = vmul.f32 %v472, %v472
    %v542 = vmul.f32 %v473, %v473
    %v543 = vmul.f32 %v474, %v474
    %v544 = vmul.f32 %v475, %v475
    %v545 = vmul.f32 %v476, %v476
    %v546 = vmul.f32 %v477, %v477
    %v547 = vmul.f32 %v478, %v478
    %v548 = vmul.f32 %v479, %v479
    %v549 = vmul.f32 %v480, %v480
    %v550 = vmul.f32 %v481, %v481
    %v551 = vmul.f32 %v482, %v482
    %v552 = vmul.f32 %v483, %v483
    %v553 = vmul.f32 %v484, %v484
    %v554 = vmul.f32 %v485, %v485
    %v555 = vmul.f32 %v486, %v486
    %v556 = vmul.f32 %v487, %v487
    %v557 = vmul.f32 %v488, %v488
    %v558 = vmul.f32 %v489, %v489
    %v559 = vmul.f32 %v490, %v490
    %v560 = vmul.f32 %v491, %v491
    %v561 = vmul.f32 %v492, %v492
    %v562 = vmul.f32 %v493, %v493
    %v563 = vmul.f32 %v494, %v494
    %v564 = vmul.f32 %v495, %v495
    %v565 = vmul.f32 %v496, %v496
    %v566 = vmul.f32 %v497, %v497
    %v567 = vmul.f32 %v498, %v498
    %v568 = vmul.f32 %v499, %v499
    %v569 = vmul.f32 %v500, %v500
    %v570 = vadd.f32 %v538, %v539
    %v571 = vadd.f32 %v570, %v540
    %v572 = vadd.f32 %v571, %v541
    %v573 = vadd.f32 %v572, %v542
    %v574 = vadd.f32 %v573, %v543
    %v575 = vadd.f32 %v574, %v544
    %v576 = vadd.f32 %v575, %v545
    %v577 = vadd.f32 %v576, %v546
    %v578 = vadd.f32 %v577, %v547
    %v579 = vadd.f32 %v578, %v548
    %v580 = vadd.f32 %v579, %v549
    %v581 = vadd.f32 %v580, %v550
    %v582 = vadd.f32 %v581, %v551
    %v583 = vadd.f32 %v582, %v552
    %v584 = vadd.f32 %v583, %v553
    %v585 = vadd.f32 %v584, %v554
    %v586 = vadd.f32 %v585, %v555
    %v587 = vadd.f32 %v586, %v556
    %v588 = vadd.f32 %v587, %v557
    %v589 = vadd.f32 %v588, %v558
    %v590 = vadd.f32 %v589, %v559
    %v591 = vadd.f32 %v590, %v560
    %v592 = vadd.f32 %v591, %v561
    %v593 = vadd.f32 %v592, %v562
    %v594 = vadd.f32 %v593, %v563
    %v595 = vadd.f32 %v594, %v564
    %v596 = vadd.f32 %v595, %v565
    %v597 = vadd.f32 %v596, %v566
    %v598 = vadd.f32 %v597, %v567
    %v599 = vadd.f32 %v598, %v568
    %v600 = vadd.f32 %v599, %v569
    %v601 = vrot.slane %v600, 4
    %v602 = vadd.f32 %v600, %v601
    %v603 = vrot.slane %v602, 2
    %v604 = vadd.f32 %v602, %v603
    %v605 = vrot.slane %v604, 1
    %v606 = vadd.f32 %v604, %v605
    %vm607 = vcmask 1040384
    %v608 = vsel %vm607, %v537, %v606
    %609 = vst [vmem:[%s3] sm:$0x3] %v608
  $region17: #{gcn_forward.8} parent=0 // pred_fallthru
    _
  // Predicated region
  $region18: #{gcn_forward.8} parent=0 // pred_check
    _
  $region19: #{gcn_forward.8} parent=0 // pred_check_branch
    %611 = sbr.rel (0) target = $region21
  $region20: #{gcn_forward.8} parent=0 // pred_region
    _
  $region21: #{gcn_forward.8} parent=0 // pred_fallthru
    _
  // Predicated region
  $region22: #{gcn_forward.8} parent=0 // pred_check
    _
  $region23: #{gcn_forward.8} parent=0 // pred_check_branch
    %613 = sbr.rel (0) target = $region25
  $region24: #{gcn_forward.8} parent=0 // pred_region
    _
  $region25: #{gcn_forward.8} parent=0 // pred_fallthru
    _
  // Predicated region
  $region26: #{gcn_forward.8} parent=0 // pred_check
    _
  $region27: #{gcn_forward.8} parent=0 // pred_check_branch
    %615 = sbr.rel (0) target = $region29
  $region28: #{gcn_forward.8} parent=0 // pred_region
    _
  $region29: #{gcn_forward.8} parent=0 // pred_fallthru
    _
  // Predicated region
  $region30: #{gcn_forward.8} parent=0 // pred_check
    _
  $region31: #{gcn_forward.8} parent=0 // pred_check_branch
    %617 = sbr.rel (0) target = $region33
  $region32: #{gcn_forward.8} parent=0 // pred_region
    _
  $region33: #{gcn_forward.8} parent=0 // pred_fallthru
    _

// kernel: gcn_forward.11
$region0: #{gcn_forward.11}
  #allocation0 [shape = 'u32[]', space=smem, size = 0x4, offset = 0x4, fixed_abs, tag = 'smem constant byte address 0x4 - core index']
  #allocation1 [shape = 'u32[144,128]{1,0:T(1,128)}', space=vmem, size = 0x12000, scoped, tag = 'internal scratch']
  %s0 = inlined_call_operand.vmem [shape: f32[256,128], index: 0, kind: input, shape index: {}]
  %s1 = inlined_call_operand.vmem [shape: f32[256,128], index: 1, kind: input, shape index: {}]
  %s2 = inlined_call_operand.vmem [shape: f32[256,128], index: 2, kind: input, shape index: {}]
  %s3 = inlined_call_operand.vmem [shape: f32[1,128], index: 3, kind: input, shape index: {}]
  %s4 = inlined_call_operand.vmem [shape: f32[1,128], index: 4, kind: input, shape index: {}]
  %s5 = inlined_call_operand.vmem [shape: f32[128,128], index: 5, kind: input, shape index: {}]
  %s6 = inlined_call_operand.vmem [shape: f32[128,128], index: 6, kind: input, shape index: {}]
  %s7 = inlined_call_operand.vmem [shape: f32[128,128], index: 7, kind: input, shape index: {}]
  %s8 = inlined_call_operand.vmem [shape: f32[256,128], index: 8, kind: output, shape index: {0}]
  %s9 = inlined_call_operand.vmem [shape: f32[256,128], index: 9, kind: output, shape index: {1}]
  %10 = xla_tuple %s8, %s9
  %s11 = sld [smem:[#allocation0]]
  $region50: #{gcn_forward.11} parent=0
    _
  %s13 = ssub.s32 1, %s11
  %s14 = scalar_select 0, %s13, %s11
  // Predicated region
  $region2: #{gcn_forward.11} parent=0 // pred_check
    _
  $region3: #{gcn_forward.11} parent=0 // pred_check_branch
    %16 = sbr.rel (0) target = $region5
  $region4: #{gcn_forward.11} parent=0 // pred_region
    _
  $region5: #{gcn_forward.11} parent=0 // pred_fallthru
    _
  // Predicated region
  $region6: #{gcn_forward.11} parent=0 // pred_check
    _
  $region7: #{gcn_forward.11} parent=0 // pred_check_branch
    %18 = sbr.rel (0) target = $region9
  $region8: #{gcn_forward.11} parent=0 // pred_region
    _
  $region9: #{gcn_forward.11} parent=0 // pred_fallthru
    _
  // Predicated region
  $region10: #{gcn_forward.11} parent=0 // pred_check
    _
  $region11: #{gcn_forward.11} parent=0 // pred_check_branch
    %20 = sbr.rel (0) target = $region13
  $region12: #{gcn_forward.11} parent=0 // pred_region
    _
  $region13: #{gcn_forward.11} parent=0 // pred_fallthru
    _
  // Predicated region
  $region14: #{gcn_forward.11} parent=0 // pred_check
    _
  $region15: #{gcn_forward.11} parent=0 // pred_check_branch
    %22 = sbr.rel (0) target = $region17
  $region16: #{gcn_forward.11} parent=0 // pred_region
    _
  $region17: #{gcn_forward.11} parent=0 // pred_fallthru
    _
  // Predicated region
  $region18: #{gcn_forward.11} parent=0 // pred_check
    _
  $region19: #{gcn_forward.11} parent=0 // pred_check_branch
    %24 = sbr.rel (0) target = $region21
  $region20: #{gcn_forward.11} parent=0 // pred_region
    _
  $region21: #{gcn_forward.11} parent=0 // pred_fallthru
    _
  // Predicated region
  $region22: #{gcn_forward.11} parent=0 // pred_check
    _
  $region23: #{gcn_forward.11} parent=0 // pred_check_branch
    %26 = sbr.rel (0) target = $region25
  $region24: #{gcn_forward.11} parent=0 // pred_region
    _
  $region25: #{gcn_forward.11} parent=0 // pred_fallthru
    _
  // Predicated region
  $region26: #{gcn_forward.11} parent=0 // pred_check
    _
  $region27: #{gcn_forward.11} parent=0 // pred_check_branch
    %28 = sbr.rel (0) target = $region29
  $region28: #{gcn_forward.11} parent=0 // pred_region
    _
  $region29: #{gcn_forward.11} parent=0 // pred_fallthru
    _
  // Predicated region
  $region30: #{gcn_forward.11} parent=0 // pred_check
    _
  $region31: #{gcn_forward.11} parent=0 // pred_check_branch
    %30 = sbr.rel (0) target = $region33
  $region32: #{gcn_forward.11} parent=0 // pred_region
    _
  $region33: #{gcn_forward.11} parent=0 // pred_fallthru
    _
  %v31 = vld [vmem:[%s2] sm:$0xff]
  %v32 = vld [vmem:[%s2 + $0x8] sm:$0xff]
  %v33 = vld [vmem:[%s2 + $0x10] sm:$0xff]
  %v34 = vld [vmem:[%s2 + $0x18] sm:$0xff]
  %v35 = vld [vmem:[%s2 + $0x20] sm:$0xff]
  %v36 = vld [vmem:[%s2 + $0x28] sm:$0xff]
  %v37 = vld [vmem:[%s2 + $0x30] sm:$0xff]
  %v38 = vld [vmem:[%s2 + $0x38] sm:$0xff]
  %v39 = vld [vmem:[%s2 + $0x40] sm:$0xff]
  %v40 = vld [vmem:[%s2 + $0x48] sm:$0xff]
  %v41 = vld [vmem:[%s2 + $0x50] sm:$0xff]
  %v42 = vld [vmem:[%s2 + $0x58] sm:$0xff]
  %v43 = vld [vmem:[%s2 + $0x60] sm:$0xff]
  %v44 = vld [vmem:[%s2 + $0x68] sm:$0xff]
  %v45 = vld [vmem:[%s2 + $0x70] sm:$0xff]
  %v46 = vld [vmem:[%s2 + $0x78] sm:$0xff]
  %v47 = vld [vmem:[%s2 + $0x80] sm:$0xff]
  %v48 = vld [vmem:[%s2 + $0x88] sm:$0xff]
  %v49 = vld [vmem:[%s2 + $0x90] sm:$0xff]
  %v50 = vld [vmem:[%s2 + $0x98] sm:$0xff]
  %v51 = vld [vmem:[%s2 + $0xa0] sm:$0xff]
  %v52 = vld [vmem:[%s2 + $0xa8] sm:$0xff]
  %v53 = vld [vmem:[%s2 + $0xb0] sm:$0xff]
  %v54 = vld [vmem:[%s2 + $0xb8] sm:$0xff]
  %v55 = vld [vmem:[%s2 + $0xc0] sm:$0xff]
  %v56 = vld [vmem:[%s2 + $0xc8] sm:$0xff]
  %v57 = vld [vmem:[%s2 + $0xd0] sm:$0xff]
  %v58 = vld [vmem:[%s2 + $0xd8] sm:$0xff]
  %v59 = vld [vmem:[%s2 + $0xe0] sm:$0xff]
  %v60 = vld [vmem:[%s2 + $0xe8] sm:$0xff]
  %v61 = vld [vmem:[%s2 + $0xf0] sm:$0xff]
  %v62 = vld [vmem:[%s2 + $0xf8] sm:$0xff]
  %v63 = vld [vmem:[%s3] sm:$0x1]
  %v65 = vlaneseq
  %v66 = vshrl.u32 %v65, 7
  %v67 = vsub.s32 0, %v66
  %v68 = vrot.slane %v63, %v67
  %v70 = vmul.f32 %v31, %v68
  %v71 = vmul.f32 %v32, %v68
  %v72 = vmul.f32 %v33, %v68
  %v73 = vmul.f32 %v34, %v68
  %v74 = vmul.f32 %v35, %v68
  %v75 = vmul.f32 %v36, %v68
  %v76 = vmul.f32 %v37, %v68
  %v77 = vmul.f32 %v38, %v68
  %v78 = vmul.f32 %v39, %v68
  %v79 = vmul.f32 %v40, %v68
  %v80 = vmul.f32 %v41, %v68
  %v81 = vmul.f32 %v42, %v68
  %v82 = vmul.f32 %v43, %v68
  %v83 = vmul.f32 %v44, %v68
  %v84 = vmul.f32 %v45, %v68
  %v85 = vmul.f32 %v46, %v68
  %v86 = vmul.f32 %v47, %v68
  %v87 = vmul.f32 %v48, %v68
  %v88 = vmul.f32 %v49, %v68
  %v89 = vmul.f32 %v50, %v68
  %v90 = vmul.f32 %v51, %v68
  %v91 = vmul.f32 %v52, %v68
  %v92 = vmul.f32 %v53, %v68
  %v93 = vmul.f32 %v54, %v68
  %v94 = vmul.f32 %v55, %v68
  %v95 = vmul.f32 %v56, %v68
  %v96 = vmul.f32 %v57, %v68
  %v97 = vmul.f32 %v58, %v68
  %v98 = vmul.f32 %v59, %v68
  %v99 = vmul.f32 %v60, %v68
  %v100 = vmul.f32 %v61, %v68
  %v101 = vmul.f32 %v62, %v68
  %v102 = vld [vmem:[%s4] sm:$0x1]
  %v104 = vlaneseq
  %v105 = vshrl.u32 %v104, 7
  %v106 = vsub.s32 0, %v105
  %v107 = vrot.slane %v102, %v106
  %v109 = vadd.f32 %v70, %v107
  %v110 = vadd.f32 %v71, %v107
  %v111 = vadd.f32 %v72, %v107
  %v112 = vadd.f32 %v73, %v107
  %v113 = vadd.f32 %v74, %v107
  %v114 = vadd.f32 %v75, %v107
  %v115 = vadd.f32 %v76, %v107
  %v116 = vadd.f32 %v77, %v107
  %v117 = vadd.f32 %v78, %v107
  %v118 = vadd.f32 %v79, %v107
  %v119 = vadd.f32 %v80, %v107
  %v120 = vadd.f32 %v81, %v107
  %v121 = vadd.f32 %v82, %v107
  %v122 = vadd.f32 %v83, %v107
  %v123 = vadd.f32 %v84, %v107
  %v124 = vadd.f32 %v85, %v107
  %v125 = vadd.f32 %v86, %v107
  %v126 = vadd.f32 %v87, %v107
  %v127 = vadd.f32 %v88, %v107
  %v128 = vadd.f32 %v89, %v107
  %v129 = vadd.f32 %v90, %v107
  %v130 = vadd.f32 %v91, %v107
  %v131 = vadd.f32 %v92, %v107
  %v132 = vadd.f32 %v93, %v107
  %v133 = vadd.f32 %v94, %v107
  %v134 = vadd.f32 %v95, %v107
  %v135 = vadd.f32 %v96, %v107
  %v136 = vadd.f32 %v97, %v107
  %v137 = vadd.f32 %v98, %v107
  %v138 = vadd.f32 %v99, %v107
  %v139 = vadd.f32 %v100, %v107
  %v140 = vadd.f32 %v101, %v107
  %v141 = vmax.f32 %v109, 0.0
  %v142 = vmax.f32 %v110, 0.0
  %v143 = vmax.f32 %v111, 0.0
  %v144 = vmax.f32 %v112, 0.0
  %v145 = vmax.f32 %v113, 0.0
  %v146 = vmax.f32 %v114, 0.0
  %v147 = vmax.f32 %v115, 0.0
  %v148 = vmax.f32 %v116, 0.0
  %v149 = vmax.f32 %v117, 0.0
  %v150 = vmax.f32 %v118, 0.0
  %v151 = vmax.f32 %v119, 0.0
  %v152 = vmax.f32 %v120, 0.0
  %v153 = vmax.f32 %v121, 0.0
  %v154 = vmax.f32 %v122, 0.0
  %v155 = vmax.f32 %v123, 0.0
  %v156 = vmax.f32 %v124, 0.0
  %v157 = vmax.f32 %v125, 0.0
  %v158 = vmax.f32 %v126, 0.0
  %v159 = vmax.f32 %v127, 0.0
  %v160 = vmax.f32 %v128, 0.0
  %v161 = vmax.f32 %v129, 0.0
  %v162 = vmax.f32 %v130, 0.0
  %v163 = vmax.f32 %v131, 0.0
  %v164 = vmax.f32 %v132, 0.0
  %v165 = vmax.f32 %v133, 0.0
  %v166 = vmax.f32 %v134, 0.0
  %v167 = vmax.f32 %v135, 0.0
  %v168 = vmax.f32 %v136, 0.0
  %v169 = vmax.f32 %v137, 0.0
  %v170 = vmax.f32 %v138, 0.0
  %v171 = vmax.f32 %v139, 0.0
  %v172 = vmax.f32 %v140, 0.0
  %173 = vst [vmem:[%s8] sm:$0xff] %v141
  %174 = vst [vmem:[%s8 + $0x8] sm:$0xff] %v142
  %175 = vst [vmem:[%s8 + $0x10] sm:$0xff] %v143
  %176 = vst [vmem:[%s8 + $0x18] sm:$0xff] %v144
  %177 = vst [vmem:[%s8 + $0x20] sm:$0xff] %v145
  %178 = vst [vmem:[%s8 + $0x28] sm:$0xff] %v146
  %179 = vst [vmem:[%s8 + $0x30] sm:$0xff] %v147
  %180 = vst [vmem:[%s8 + $0x38] sm:$0xff] %v148
  %181 = vst [vmem:[%s8 + $0x40] sm:$0xff] %v149
  %182 = vst [vmem:[%s8 + $0x48] sm:$0xff] %v150
  %183 = vst [vmem:[%s8 + $0x50] sm:$0xff] %v151
  %184 = vst [vmem:[%s8 + $0x58] sm:$0xff] %v152
  %185 = vst [vmem:[%s8 + $0x60] sm:$0xff] %v153
  %186 = vst [vmem:[%s8 + $0x68] sm:$0xff] %v154
  %187 = vst [vmem:[%s8 + $0x70] sm:$0xff] %v155
  %188 = vst [vmem:[%s8 + $0x78] sm:$0xff] %v156
  %189 = vst [vmem:[%s8 + $0x80] sm:$0xff] %v157
  %190 = vst [vmem:[%s8 + $0x88] sm:$0xff] %v158
  %191 = vst [vmem:[%s8 + $0x90] sm:$0xff] %v159
  %192 = vst [vmem:[%s8 + $0x98] sm:$0xff] %v160
  %193 = vst [vmem:[%s8 + $0xa0] sm:$0xff] %v161
  %194 = vst [vmem:[%s8 + $0xa8] sm:$0xff] %v162
  %195 = vst [vmem:[%s8 + $0xb0] sm:$0xff] %v163
  %196 = vst [vmem:[%s8 + $0xb8] sm:$0xff] %v164
  %197 = vst [vmem:[%s8 + $0xc0] sm:$0xff] %v165
  %198 = vst [vmem:[%s8 + $0xc8] sm:$0xff] %v166
  %199 = vst [vmem:[%s8 + $0xd0] sm:$0xff] %v167
  %200 = vst [vmem:[%s8 + $0xd8] sm:$0xff] %v168
  %201 = vst [vmem:[%s8 + $0xe0] sm:$0xff] %v169
  %202 = vst [vmem:[%s8 + $0xe8] sm:$0xff] %v170
  %203 = vst [vmem:[%s8 + $0xf0] sm:$0xff] %v171
  %204 = vst [vmem:[%s8 + $0xf8] sm:$0xff] %v172
  %v205 = vld [vmem:[%s7] sm:$0xff]
  %v206 = vld [vmem:[%s7 + $0x8] sm:$0xff]
  %v207 = vld [vmem:[%s7 + $0x10] sm:$0xff]
  %v208 = vld [vmem:[%s7 + $0x18] sm:$0xff]
  %v209 = vld [vmem:[%s7 + $0x20] sm:$0xff]
  %v210 = vld [vmem:[%s7 + $0x28] sm:$0xff]
  %v211 = vld [vmem:[%s7 + $0x30] sm:$0xff]
  %v212 = vld [vmem:[%s7 + $0x38] sm:$0xff]
  %v213 = vld [vmem:[%s7 + $0x40] sm:$0xff]
  %v214 = vld [vmem:[%s7 + $0x48] sm:$0xff]
  %v215 = vld [vmem:[%s7 + $0x50] sm:$0xff]
  %v216 = vld [vmem:[%s7 + $0x58] sm:$0xff]
  %v217 = vld [vmem:[%s7 + $0x60] sm:$0xff]
  %v218 = vld [vmem:[%s7 + $0x68] sm:$0xff]
  %v219 = vld [vmem:[%s7 + $0x70] sm:$0xff]
  %v220 = vld [vmem:[%s7 + $0x78] sm:$0xff]
  %v221 = vld [vmem:[%s0] sm:$0xff]
  %v222 = vld [vmem:[%s0 + $0x8] sm:$0xff]
  %v223 = vld [vmem:[%s0 + $0x10] sm:$0xff]
  %v224 = vld [vmem:[%s0 + $0x18] sm:$0xff]
  %v225 = vld [vmem:[%s0 + $0x20] sm:$0xff]
  %v226 = vld [vmem:[%s0 + $0x28] sm:$0xff]
  %v227 = vld [vmem:[%s0 + $0x30] sm:$0xff]
  %v228 = vld [vmem:[%s0 + $0x38] sm:$0xff]
  %v229 = vld [vmem:[%s0 + $0x40] sm:$0xff]
  %v230 = vld [vmem:[%s0 + $0x48] sm:$0xff]
  %v231 = vld [vmem:[%s0 + $0x50] sm:$0xff]
  %v232 = vld [vmem:[%s0 + $0x58] sm:$0xff]
  %v233 = vld [vmem:[%s0 + $0x60] sm:$0xff]
  %v234 = vld [vmem:[%s0 + $0x68] sm:$0xff]
  %v235 = vld [vmem:[%s0 + $0x70] sm:$0xff]
  %v236 = vld [vmem:[%s0 + $0x78] sm:$0xff]
  %v237 = vld [vmem:[%s0 + $0x80] sm:$0xff]
  %v238 = vld [vmem:[%s0 + $0x88] sm:$0xff]
  %v239 = vld [vmem:[%s0 + $0x90] sm:$0xff]
  %v240 = vld [vmem:[%s0 + $0x98] sm:$0xff]
  %v241 = vld [vmem:[%s0 + $0xa0] sm:$0xff]
  %v242 = vld [vmem:[%s0 + $0xa8] sm:$0xff]
  %v243 = vld [vmem:[%s0 + $0xb0] sm:$0xff]
  %v244 = vld [vmem:[%s0 + $0xb8] sm:$0xff]
  %v245 = vld [vmem:[%s0 + $0xc0] sm:$0xff]
  %v246 = vld [vmem:[%s0 + $0xc8] sm:$0xff]
  %v247 = vld [vmem:[%s0 + $0xd0] sm:$0xff]
  %v248 = vld [vmem:[%s0 + $0xd8] sm:$0xff]
  %v249 = vld [vmem:[%s0 + $0xe0] sm:$0xff]
  %v250 = vld [vmem:[%s0 + $0xe8] sm:$0xff]
  %v251 = vld [vmem:[%s0 + $0xf0] sm:$0xff]
  %v252 = vld [vmem:[%s0 + $0xf8] sm:$0xff]
  %v253 = vld [vmem:[%s5] sm:$0xff]
  %v254 = vld [vmem:[%s5 + $0x8] sm:$0xff]
  %v255 = vld [vmem:[%s5 + $0x10] sm:$0xff]
  %v256 = vld [vmem:[%s5 + $0x18] sm:$0xff]
  %v257 = vld [vmem:[%s5 + $0x20] sm:$0xff]
  %v258 = vld [vmem:[%s5 + $0x28] sm:$0xff]
  %v259 = vld [vmem:[%s5 + $0x30] sm:$0xff]
  %v260 = vld [vmem:[%s5 + $0x38] sm:$0xff]
  %v261 = vld [vmem:[%s5 + $0x40] sm:$0xff]
  %v262 = vld [vmem:[%s5 + $0x48] sm:$0xff]
  %v263 = vld [vmem:[%s5 + $0x50] sm:$0xff]
  %v264 = vld [vmem:[%s5 + $0x58] sm:$0xff]
  %v265 = vld [vmem:[%s5 + $0x60] sm:$0xff]
  %v266 = vld [vmem:[%s5 + $0x68] sm:$0xff]
  %v267 = vld [vmem:[%s5 + $0x70] sm:$0xff]
  %v268 = vld [vmem:[%s5 + $0x78] sm:$0xff]
  %269 = vmatprep.subr.mxu0 0.0
  %270 = vmatpush1.msra.mxu0 %v268
  %271 = vmatprep.subr.mxu0 0.0
  %272 = vmatpush1.msra.mxu0 %v267
  %273 = vmatprep.subr.mxu0 0.0
  %274 = vmatpush1.msra.mxu0 %v266
  %275 = vmatprep.subr.mxu0 0.0
  %276 = vmatpush1.msra.mxu0 %v265
  %277 = vmatprep.subr.mxu0 0.0
  %278 = vmatpush1.msra.mxu0 %v264
  %279 = vmatprep.subr.mxu0 0.0
  %280 = vmatpush1.msra.mxu0 %v263
  %281 = vmatprep.subr.mxu0 0.0
  %282 = vmatpush1.msra.mxu0 %v262
  %283 = vmatprep.subr.mxu0 0.0
  %284 = vmatpush1.msra.mxu0 %v261
  %285 = vmatprep.subr.mxu0 0.0
  %286 = vmatpush1.msra.mxu0 %v260
  %287 = vmatprep.subr.mxu0 0.0
  %288 = vmatpush1.msra.mxu0 %v259
  %289 = vmatprep.subr.mxu0 0.0
  %290 = vmatpush1.msra.mxu0 %v258
  %291 = vmatprep.subr.mxu0 0.0
  %292 = vmatpush1.msra.mxu0 %v257
  %293 = vmatprep.subr.mxu0 0.0
  %294 = vmatpush1.msra.mxu0 %v256
  %295 = vmatprep.subr.mxu0 0.0
  %296 = vmatpush1.msra.mxu0 %v255
  %297 = vmatprep.subr.mxu0 0.0
  %298 = vmatpush1.msra.mxu0 %v254
  %299 = vmatprep.subr.mxu0 0.0
  %300 = vmatpush1.msra.mxu0 %v253
  %301 = vmatprep.subr.mxu0 0.0
  %302 = vmatpush2.msra.mxu0 0.0
  %303 = vmatprep.subr.mxu0 0.0
  %304 = vmatpush2.msra.mxu0 0.0
  %305 = vmatprep.subr.mxu0 0.0
  %306 = vmatpush2.msra.mxu0 0.0
  %307 = vmatprep.subr.mxu0 0.0
  %308 = vmatpush2.msra.mxu0 0.0
  %309 = vmatprep.subr.mxu0 0.0
  %310 = vmatpush2.msra.mxu0 0.0
  %311 = vmatprep.subr.mxu0 0.0
  %312 = vmatpush2.msra.mxu0 0.0
  %313 = vmatprep.subr.mxu0 0.0
  %314 = vmatpush2.msra.mxu0 0.0
  %315 = vmatprep.subr.mxu0 0.0
  %316 = vmatpush2.msra.mxu0 0.0
  %317 = vmatprep.subr.mxu0 0.0
  %318 = vmatpush2.msra.mxu0 0.0
  %319 = vmatprep.subr.mxu0 0.0
  %320 = vmatpush2.msra.mxu0 0.0
  %321 = vmatprep.subr.mxu0 0.0
  %322 = vmatpush2.msra.mxu0 0.0
  %323 = vmatprep.subr.mxu0 0.0
  %324 = vmatpush2.msra.mxu0 0.0
  %325 = vmatprep.subr.mxu0 0.0
  %326 = vmatpush2.msra.mxu0 0.0
  %327 = vmatprep.subr.mxu0 0.0
  %328 = vmatpush2.msra.mxu0 0.0
  %329 = vmatprep.subr.mxu0 0.0
  %330 = vmatpush2.msra.mxu0 0.0
  %331 = vmatprep.subr.mxu0 0.0
  %332 = vmatpush2.msra.mxu0 0.0
  %333 = vmatprep.mubr.f32.mxu0 0.0
  %334 = vmatmul.mubr.f32.gmra.mxu0 %v221
  %v335 = vpop.f32.mrf.mxu0
  %v336 = vadd.f32 0.0, %v335
  %v337 = vpop.f32.mrf.mxu0
  %338 = vmatprep.mubr.f32.mxu0 0.0
  %339 = vmatmul.mubr.f32.gmra.mxu0 %v222
  %v340 = vpop.f32.mrf.mxu0
  %v341 = vadd.f32 0.0, %v340
  %v342 = vpop.f32.mrf.mxu0
  %343 = vmatprep.mubr.f32.mxu0 0.0
  %344 = vmatmul.mubr.f32.gmra.mxu0 %v223
  %v345 = vpop.f32.mrf.mxu0
  %v346 = vadd.f32 0.0, %v345
  %v347 = vpop.f32.mrf.mxu0
  %348 = vmatprep.mubr.f32.mxu0 0.0
  %349 = vmatmul.mubr.f32.gmra.mxu0 %v224
  %v350 = vpop.f32.mrf.mxu0
  %v351 = vadd.f32 0.0, %v350
  %v352 = vpop.f32.mrf.mxu0
  %353 = vmatprep.mubr.f32.mxu0 0.0
  %354 = vmatmul.mubr.f32.gmra.mxu0 %v225
  %v355 = vpop.f32.mrf.mxu0
  %v356 = vadd.f32 0.0, %v355
  %v357 = vpop.f32.mrf.mxu0
  %358 = vmatprep.mubr.f32.mxu0 0.0
  %359 = vmatmul.mubr.f32.gmra.mxu0 %v226
  %v360 = vpop.f32.mrf.mxu0
  %v361 = vadd.f32 0.0, %v360
  %v362 = vpop.f32.mrf.mxu0
  %363 = vmatprep.mubr.f32.mxu0 0.0
  %364 = vmatmul.mubr.f32.gmra.mxu0 %v227
  %v365 = vpop.f32.mrf.mxu0
  %v366 = vadd.f32 0.0, %v365
  %v367 = vpop.f32.mrf.mxu0
  %368 = vmatprep.mubr.f32.mxu0 0.0
  %369 = vmatmul.mubr.f32.gmra.mxu0 %v228
  %v370 = vpop.f32.mrf.mxu0
  %v371 = vadd.f32 0.0, %v370
  %v372 = vpop.f32.mrf.mxu0
  %373 = vmatprep.mubr.f32.mxu0 0.0
  %374 = vmatmul.mubr.f32.gmra.mxu0 %v229
  %v375 = vpop.f32.mrf.mxu0
  %v376 = vadd.f32 0.0, %v375
  %v377 = vpop.f32.mrf.mxu0
  %378 = vmatprep.mubr.f32.mxu0 0.0
  %379 = vmatmul.mubr.f32.gmra.mxu0 %v230
  %v380 = vpop.f32.mrf.mxu0
  %v381 = vadd.f32 0.0, %v380
  %v382 = vpop.f32.mrf.mxu0
  %383 = vmatprep.mubr.f32.mxu0 0.0
  %384 = vmatmul.mubr.f32.gmra.mxu0 %v231
  %v385 = vpop.f32.mrf.mxu0
  %v386 = vadd.f32 0.0, %v385
  %v387 = vpop.f32.mrf.mxu0
  %388 = vmatprep.mubr.f32.mxu0 0.0
  %389 = vmatmul.mubr.f32.gmra.mxu0 %v232
  %v390 = vpop.f32.mrf.mxu0
  %v391 = vadd.f32 0.0, %v390
  %v392 = vpop.f32.mrf.mxu0
  %393 = vmatprep.mubr.f32.mxu0 0.0
  %394 = vmatmul.mubr.f32.gmra.mxu0 %v233
  %v395 = vpop.f32.mrf.mxu0
  %v396 = vadd.f32 0.0, %v395
  %v397 = vpop.f32.mrf.mxu0
  %398 = vmatprep.mubr.f32.mxu0 0.0
  %399 = vmatmul.mubr.f32.gmra.mxu0 %v234
  %v400 = vpop.f32.mrf.mxu0
  %v401 = vadd.f32 0.0, %v400
  %v402 = vpop.f32.mrf.mxu0
  %403 = vmatprep.mubr.f32.mxu0 0.0
  %404 = vmatmul.mubr.f32.gmra.mxu0 %v235
  %v405 = vpop.f32.mrf.mxu0
  %v406 = vadd.f32 0.0, %v405
  %v407 = vpop.f32.mrf.mxu0
  %408 = vmatprep.mubr.f32.mxu0 0.0
  %409 = vmatmul.mubr.f32.gmra.mxu0 %v236
  %v410 = vpop.f32.mrf.mxu0
  %v411 = vadd.f32 0.0, %v410
  %v412 = vpop.f32.mrf.mxu0
  %413 = vmatprep.mubr.f32.mxu0 0.0
  %414 = vmatmul.mubr.f32.gmra.mxu0 %v237
  %v415 = vpop.f32.mrf.mxu0
  %v416 = vadd.f32 0.0, %v415
  %v417 = vpop.f32.mrf.mxu0
  %418 = vmatprep.mubr.f32.mxu0 0.0
  %419 = vmatmul.mubr.f32.gmra.mxu0 %v238
  %v420 = vpop.f32.mrf.mxu0
  %v421 = vadd.f32 0.0, %v420
  %v422 = vpop.f32.mrf.mxu0
  %423 = vmatprep.mubr.f32.mxu0 0.0
  %424 = vmatmul.mubr.f32.gmra.mxu0 %v239
  %v425 = vpop.f32.mrf.mxu0
  %v426 = vadd.f32 0.0, %v425
  %v427 = vpop.f32.mrf.mxu0
  %428 = vmatprep.mubr.f32.mxu0 0.0
  %429 = vmatmul.mubr.f32.gmra.mxu0 %v240
  %v430 = vpop.f32.mrf.mxu0
  %v431 = vadd.f32 0.0, %v430
  %v432 = vpop.f32.mrf.mxu0
  %433 = vmatprep.mubr.f32.mxu0 0.0
  %434 = vmatmul.mubr.f32.gmra.mxu0 %v241
  %v435 = vpop.f32.mrf.mxu0
  %v436 = vadd.f32 0.0, %v435
  %v437 = vpop.f32.mrf.mxu0
  %438 = vmatprep.mubr.f32.mxu0 0.0
  %439 = vmatmul.mubr.f32.gmra.mxu0 %v242
  %v440 = vpop.f32.mrf.mxu0
  %v441 = vadd.f32 0.0, %v440
  %v442 = vpop.f32.mrf.mxu0
  %443 = vmatprep.mubr.f32.mxu0 0.0
  %444 = vmatmul.mubr.f32.gmra.mxu0 %v243
  %v445 = vpop.f32.mrf.mxu0
  %v446 = vadd.f32 0.0, %v445
  %v447 = vpop.f32.mrf.mxu0
  %448 = vmatprep.mubr.f32.mxu0 0.0
  %449 = vmatmul.mubr.f32.gmra.mxu0 %v244
  %v450 = vpop.f32.mrf.mxu0
  %v451 = vadd.f32 0.0, %v450
  %v452 = vpop.f32.mrf.mxu0
  %453 = vmatprep.mubr.f32.mxu0 0.0
  %454 = vmatmul.mubr.f32.gmra.mxu0 %v245
  %v455 = vpop.f32.mrf.mxu0
  %v456 = vadd.f32 0.0, %v455
  %v457 = vpop.f32.mrf.mxu0
  %458 = vmatprep.mubr.f32.mxu0 0.0
  %459 = vmatmul.mubr.f32.gmra.mxu0 %v246
  %v460 = vpop.f32.mrf.mxu0
  %v461 = vadd.f32 0.0, %v460
  %v462 = vpop.f32.mrf.mxu0
  %463 = vmatprep.mubr.f32.mxu0 0.0
  %464 = vmatmul.mubr.f32.gmra.mxu0 %v247
  %v465 = vpop.f32.mrf.mxu0
  %v466 = vadd.f32 0.0, %v465
  %v467 = vpop.f32.mrf.mxu0
  %468 = vmatprep.mubr.f32.mxu0 0.0
  %469 = vmatmul.mubr.f32.gmra.mxu0 %v248
  %v470 = vpop.f32.mrf.mxu0
  %v471 = vadd.f32 0.0, %v470
  %v472 = vpop.f32.mrf.mxu0
  %473 = vmatprep.mubr.f32.mxu0 0.0
  %474 = vmatmul.mubr.f32.gmra.mxu0 %v249
  %v475 = vpop.f32.mrf.mxu0
  %v476 = vadd.f32 0.0, %v475
  %v477 = vpop.f32.mrf.mxu0
  %478 = vmatprep.mubr.f32.mxu0 0.0
  %479 = vmatmul.mubr.f32.gmra.mxu0 %v250
  %v480 = vpop.f32.mrf.mxu0
  %v481 = vadd.f32 0.0, %v480
  %v482 = vpop.f32.mrf.mxu0
  %483 = vmatprep.mubr.f32.mxu0 0.0
  %484 = vmatmul.mubr.f32.gmra.mxu0 %v251
  %v485 = vpop.f32.mrf.mxu0
  %v486 = vadd.f32 0.0, %v485
  %v487 = vpop.f32.mrf.mxu0
  %488 = vmatprep.mubr.f32.mxu0 0.0
  %489 = vmatmul.mubr.f32.gmra.mxu0 %v252
  %v490 = vpop.f32.mrf.mxu0
  %v491 = vadd.f32 0.0, %v490
  %v492 = vpop.f32.mrf.mxu0
  %493 = vdwg.mxu0
  %494 = vmatprep.subr.mxu0 0.0
  %495 = vmatpush1.msra.mxu0 %v220
  %496 = vmatprep.subr.mxu0 0.0
  %497 = vmatpush1.msra.mxu0 %v219
  %498 = vmatprep.subr.mxu0 0.0
  %499 = vmatpush1.msra.mxu0 %v218
  %500 = vmatprep.subr.mxu0 0.0
  %501 = vmatpush1.msra.mxu0 %v217
  %502 = vmatprep.subr.mxu0 0.0
  %503 = vmatpush1.msra.mxu0 %v216
  %504 = vmatprep.subr.mxu0 0.0
  %505 = vmatpush1.msra.mxu0 %v215
  %506 = vmatprep.subr.mxu0 0.0
  %507 = vmatpush1.msra.mxu0 %v214
  %508 = vmatprep.subr.mxu0 0.0
  %509 = vmatpush1.msra.mxu0 %v213
  %510 = vmatprep.subr.mxu0 0.0
  %511 = vmatpush1.msra.mxu0 %v212
  %512 = vmatprep.subr.mxu0 0.0
  %513 = vmatpush1.msra.mxu0 %v211
  %514 = vmatprep.subr.mxu0 0.0
  %515 = vmatpush1.msra.mxu0 %v210
  %516 = vmatprep.subr.mxu0 0.0
  %517 = vmatpush1.msra.mxu0 %v209
  %518 = vmatprep.subr.mxu0 0.0
  %519 = vmatpush1.msra.mxu0 %v208
  %520 = vmatprep.subr.mxu0 0.0
  %521 = vmatpush1.msra.mxu0 %v207
  %522 = vmatprep.subr.mxu0 0.0
  %523 = vmatpush1.msra.mxu0 %v206
  %524 = vmatprep.subr.mxu0 0.0
  %525 = vmatpush1.msra.mxu0 %v205
  %526 = vmatprep.subr.mxu0 0.0
  %527 = vmatpush2.msra.mxu0 0.0
  %528 = vmatprep.subr.mxu0 0.0
  %529 = vmatpush2.msra.mxu0 0.0
  %530 = vmatprep.subr.mxu0 0.0
  %531 = vmatpush2.msra.mxu0 0.0
  %532 = vmatprep.subr.mxu0 0.0
  %533 = vmatpush2.msra.mxu0 0.0
  %534 = vmatprep.subr.mxu0 0.0
  %535 = vmatpush2.msra.mxu0 0.0
  %536 = vmatprep.subr.mxu0 0.0
  %537 = vmatpush2.msra.mxu0 0.0
  %538 = vmatprep.subr.mxu0 0.0
  %539 = vmatpush2.msra.mxu0 0.0
  %540 = vmatprep.subr.mxu0 0.0
  %541 = vmatpush2.msra.mxu0 0.0
  %542 = vmatprep.subr.mxu0 0.0
  %543 = vmatpush2.msra.mxu0 0.0
  %544 = vmatprep.subr.mxu0 0.0
  %545 = vmatpush2.msra.mxu0 0.0
  %546 = vmatprep.subr.mxu0 0.0
  %547 = vmatpush2.msra.mxu0 0.0
  %548 = vmatprep.subr.mxu0 0.0
  %549 = vmatpush2.msra.mxu0 0.0
  %550 = vmatprep.subr.mxu0 0.0
  %551 = vmatpush2.msra.mxu0 0.0
  %552 = vmatprep.subr.mxu0 0.0
  %553 = vmatpush2.msra.mxu0 0.0
  %554 = vmatprep.subr.mxu0 0.0
  %555 = vmatpush2.msra.mxu0 0.0
  %556 = vmatprep.subr.mxu0 0.0
  %557 = vmatpush2.msra.mxu0 0.0
  %558 = vmatprep.mubr.f32.mxu0 0.0
  %559 = vmatmul.mubr.f32.gmra.mxu0 %v141
  %v560 = vpop.f32.mrf.mxu0
  %v561 = vadd.f32 %v336, %v560
  %v562 = vpop.f32.mrf.mxu0
  %563 = vmatprep.mubr.f32.mxu0 0.0
  %564 = vmatmul.mubr.f32.gmra.mxu0 %v142
  %v565 = vpop.f32.mrf.mxu0
  %v566 = vadd.f32 %v341, %v565
  %v567 = vpop.f32.mrf.mxu0
  %568 = vmatprep.mubr.f32.mxu0 0.0
  %569 = vmatmul.mubr.f32.gmra.mxu0 %v143
  %v570 = vpop.f32.mrf.mxu0
  %v571 = vadd.f32 %v346, %v570
  %v572 = vpop.f32.mrf.mxu0
  %573 = vmatprep.mubr.f32.mxu0 0.0
  %574 = vmatmul.mubr.f32.gmra.mxu0 %v144
  %v575 = vpop.f32.mrf.mxu0
  %v576 = vadd.f32 %v351, %v575
  %v577 = vpop.f32.mrf.mxu0
  %578 = vmatprep.mubr.f32.mxu0 0.0
  %579 = vmatmul.mubr.f32.gmra.mxu0 %v145
  %v580 = vpop.f32.mrf.mxu0
  %v581 = vadd.f32 %v356, %v580
  %v582 = vpop.f32.mrf.mxu0
  %583 = vmatprep.mubr.f32.mxu0 0.0
  %584 = vmatmul.mubr.f32.gmra.mxu0 %v146
  %v585 = vpop.f32.mrf.mxu0
  %v586 = vadd.f32 %v361, %v585
  %v587 = vpop.f32.mrf.mxu0
  %588 = vmatprep.mubr.f32.mxu0 0.0
  %589 = vmatmul.mubr.f32.gmra.mxu0 %v147
  %v590 = vpop.f32.mrf.mxu0
  %v591 = vadd.f32 %v366, %v590
  %v592 = vpop.f32.mrf.mxu0
  %593 = vmatprep.mubr.f32.mxu0 0.0
  %594 = vmatmul.mubr.f32.gmra.mxu0 %v148
  %v595 = vpop.f32.mrf.mxu0
  %v596 = vadd.f32 %v371, %v595
  %v597 = vpop.f32.mrf.mxu0
  %598 = vmatprep.mubr.f32.mxu0 0.0
  %599 = vmatmul.mubr.f32.gmra.mxu0 %v149
  %v600 = vpop.f32.mrf.mxu0
  %v601 = vadd.f32 %v376, %v600
  %v602 = vpop.f32.mrf.mxu0
  %603 = vmatprep.mubr.f32.mxu0 0.0
  %604 = vmatmul.mubr.f32.gmra.mxu0 %v150
  %v605 = vpop.f32.mrf.mxu0
  %v606 = vadd.f32 %v381, %v605
  %v607 = vpop.f32.mrf.mxu0
  %608 = vmatprep.mubr.f32.mxu0 0.0
  %609 = vmatmul.mubr.f32.gmra.mxu0 %v151
  %v610 = vpop.f32.mrf.mxu0
  %v611 = vadd.f32 %v386, %v610
  %v612 = vpop.f32.mrf.mxu0
  %613 = vmatprep.mubr.f32.mxu0 0.0
  %614 = vmatmul.mubr.f32.gmra.mxu0 %v152
  %v615 = vpop.f32.mrf.mxu0
  %v616 = vadd.f32 %v391, %v615
  %v617 = vpop.f32.mrf.mxu0
  %618 = vmatprep.mubr.f32.mxu0 0.0
  %619 = vmatmul.mubr.f32.gmra.mxu0 %v153
  %v620 = vpop.f32.mrf.mxu0
  %v621 = vadd.f32 %v396, %v620
  %v622 = vpop.f32.mrf.mxu0
  %623 = vmatprep.mubr.f32.mxu0 0.0
  %624 = vmatmul.mubr.f32.gmra.mxu0 %v154
  %v625 = vpop.f32.mrf.mxu0
  %v626 = vadd.f32 %v401, %v625
  %v627 = vpop.f32.mrf.mxu0
  %628 = vmatprep.mubr.f32.mxu0 0.0
  %629 = vmatmul.mubr.f32.gmra.mxu0 %v155
  %v630 = vpop.f32.mrf.mxu0
  %v631 = vadd.f32 %v406, %v630
  %v632 = vpop.f32.mrf.mxu0
  %633 = vmatprep.mubr.f32.mxu0 0.0
  %634 = vmatmul.mubr.f32.gmra.mxu0 %v156
  %v635 = vpop.f32.mrf.mxu0
  %v636 = vadd.f32 %v411, %v635
  %v637 = vpop.f32.mrf.mxu0
  %638 = vmatprep.mubr.f32.mxu0 0.0
  %639 = vmatmul.mubr.f32.gmra.mxu0 %v157
  %v640 = vpop.f32.mrf.mxu0
  %v641 = vadd.f32 %v416, %v640
  %v642 = vpop.f32.mrf.mxu0
  %643 = vmatprep.mubr.f32.mxu0 0.0
  %644 = vmatmul.mubr.f32.gmra.mxu0 %v158
  %v645 = vpop.f32.mrf.mxu0
  %v646 = vadd.f32 %v421, %v645
  %v647 = vpop.f32.mrf.mxu0
  %648 = vmatprep.mubr.f32.mxu0 0.0
  %649 = vmatmul.mubr.f32.gmra.mxu0 %v159
  %v650 = vpop.f32.mrf.mxu0
  %v651 = vadd.f32 %v426, %v650
  %v652 = vpop.f32.mrf.mxu0
  %653 = vmatprep.mubr.f32.mxu0 0.0
  %654 = vmatmul.mubr.f32.gmra.mxu0 %v160
  %v655 = vpop.f32.mrf.mxu0
  %v656 = vadd.f32 %v431, %v655
  %v657 = vpop.f32.mrf.mxu0
  %658 = vmatprep.mubr.f32.mxu0 0.0
  %659 = vmatmul.mubr.f32.gmra.mxu0 %v161
  %v660 = vpop.f32.mrf.mxu0
  %v661 = vadd.f32 %v436, %v660
  %v662 = vpop.f32.mrf.mxu0
  %663 = vmatprep.mubr.f32.mxu0 0.0
  %664 = vmatmul.mubr.f32.gmra.mxu0 %v162
  %v665 = vpop.f32.mrf.mxu0
  %v666 = vadd.f32 %v441, %v665
  %v667 = vpop.f32.mrf.mxu0
  %668 = vmatprep.mubr.f32.mxu0 0.0
  %669 = vmatmul.mubr.f32.gmra.mxu0 %v163
  %v670 = vpop.f32.mrf.mxu0
  %v671 = vadd.f32 %v446, %v670
  %v672 = vpop.f32.mrf.mxu0
  %673 = vmatprep.mubr.f32.mxu0 0.0
  %674 = vmatmul.mubr.f32.gmra.mxu0 %v164
  %v675 = vpop.f32.mrf.mxu0
  %v676 = vadd.f32 %v451, %v675
  %v677 = vpop.f32.mrf.mxu0
  %678 = vmatprep.mubr.f32.mxu0 0.0
  %679 = vmatmul.mubr.f32.gmra.mxu0 %v165
  %v680 = vpop.f32.mrf.mxu0
  %v681 = vadd.f32 %v456, %v680
  %v682 = vpop.f32.mrf.mxu0
  %683 = vmatprep.mubr.f32.mxu0 0.0
  %684 = vmatmul.mubr.f32.gmra.mxu0 %v166
  %v685 = vpop.f32.mrf.mxu0
  %v686 = vadd.f32 %v461, %v685
  %v687 = vpop.f32.mrf.mxu0
  %688 = vmatprep.mubr.f32.mxu0 0.0
  %689 = vmatmul.mubr.f32.gmra.mxu0 %v167
  %v690 = vpop.f32.mrf.mxu0
  %v691 = vadd.f32 %v466, %v690
  %v692 = vpop.f32.mrf.mxu0
  %693 = vmatprep.mubr.f32.mxu0 0.0
  %694 = vmatmul.mubr.f32.gmra.mxu0 %v168
  %v695 = vpop.f32.mrf.mxu0
  %v696 = vadd.f32 %v471, %v695
  %v697 = vpop.f32.mrf.mxu0
  %698 = vmatprep.mubr.f32.mxu0 0.0
  %699 = vmatmul.mubr.f32.gmra.mxu0 %v169
  %v700 = vpop.f32.mrf.mxu0
  %v701 = vadd.f32 %v476, %v700
  %v702 = vpop.f32.mrf.mxu0
  %703 = vmatprep.mubr.f32.mxu0 0.0
  %704 = vmatmul.mubr.f32.gmra.mxu0 %v170
  %v705 = vpop.f32.mrf.mxu0
  %v706 = vadd.f32 %v481, %v705
  %v707 = vpop.f32.mrf.mxu0
  %708 = vmatprep.mubr.f32.mxu0 0.0
  %709 = vmatmul.mubr.f32.gmra.mxu0 %v171
  %v710 = vpop.f32.mrf.mxu0
  %v711 = vadd.f32 %v486, %v710
  %v712 = vpop.f32.mrf.mxu0
  %713 = vmatprep.mubr.f32.mxu0 0.0
  %714 = vmatmul.mubr.f32.gmra.mxu0 %v172
  %v715 = vpop.f32.mrf.mxu0
  %v716 = vadd.f32 %v491, %v715
  %v717 = vpop.f32.mrf.mxu0
  %718 = vdwg.mxu0
  %v719 = vld [vmem:[%s1] sm:$0xff]
  %v720 = vld [vmem:[%s1 + $0x8] sm:$0xff]
  %v721 = vld [vmem:[%s1 + $0x10] sm:$0xff]
  %v722 = vld [vmem:[%s1 + $0x18] sm:$0xff]
  %v723 = vld [vmem:[%s1 + $0x20] sm:$0xff]
  %v724 = vld [vmem:[%s1 + $0x28] sm:$0xff]
  %v725 = vld [vmem:[%s1 + $0x30] sm:$0xff]
  %v726 = vld [vmem:[%s1 + $0x38] sm:$0xff]
  %v727 = vld [vmem:[%s1 + $0x40] sm:$0xff]
  %v728 = vld [vmem:[%s1 + $0x48] sm:$0xff]
  %v729 = vld [vmem:[%s1 + $0x50] sm:$0xff]
  %v730 = vld [vmem:[%s1 + $0x58] sm:$0xff]
  %v731 = vld [vmem:[%s1 + $0x60] sm:$0xff]
  %v732 = vld [vmem:[%s1 + $0x68] sm:$0xff]
  %v733 = vld [vmem:[%s1 + $0x70] sm:$0xff]
  %v734 = vld [vmem:[%s1 + $0x78] sm:$0xff]
  %v735 = vld [vmem:[%s1 + $0x80] sm:$0xff]
  %v736 = vld [vmem:[%s1 + $0x88] sm:$0xff]
  %v737 = vld [vmem:[%s1 + $0x90] sm:$0xff]
  %v738 = vld [vmem:[%s1 + $0x98] sm:$0xff]
  %v739 = vld [vmem:[%s1 + $0xa0] sm:$0xff]
  %v740 = vld [vmem:[%s1 + $0xa8] sm:$0xff]
  %v741 = vld [vmem:[%s1 + $0xb0] sm:$0xff]
  %v742 = vld [vmem:[%s1 + $0xb8] sm:$0xff]
  %v743 = vld [vmem:[%s1 + $0xc0] sm:$0xff]
  %v744 = vld [vmem:[%s1 + $0xc8] sm:$0xff]
  %v745 = vld [vmem:[%s1 + $0xd0] sm:$0xff]
  %v746 = vld [vmem:[%s1 + $0xd8] sm:$0xff]
  %v747 = vld [vmem:[%s1 + $0xe0] sm:$0xff]
  %v748 = vld [vmem:[%s1 + $0xe8] sm:$0xff]
  %v749 = vld [vmem:[%s1 + $0xf0] sm:$0xff]
  %v750 = vld [vmem:[%s1 + $0xf8] sm:$0xff]
  %v751 = vld [vmem:[%s6] sm:$0xff]
  %v752 = vld [vmem:[%s6 + $0x8] sm:$0xff]
  %v753 = vld [vmem:[%s6 + $0x10] sm:$0xff]
  %v754 = vld [vmem:[%s6 + $0x18] sm:$0xff]
  %v755 = vld [vmem:[%s6 + $0x20] sm:$0xff]
  %v756 = vld [vmem:[%s6 + $0x28] sm:$0xff]
  %v757 = vld [vmem:[%s6 + $0x30] sm:$0xff]
  %v758 = vld [vmem:[%s6 + $0x38] sm:$0xff]
  %v759 = vld [vmem:[%s6 + $0x40] sm:$0xff]
  %v760 = vld [vmem:[%s6 + $0x48] sm:$0xff]
  %v761 = vld [vmem:[%s6 + $0x50] sm:$0xff]
  %v762 = vld [vmem:[%s6 + $0x58] sm:$0xff]
  %v763 = vld [vmem:[%s6 + $0x60] sm:$0xff]
  %v764 = vld [vmem:[%s6 + $0x68] sm:$0xff]
  %v765 = vld [vmem:[%s6 + $0x70] sm:$0xff]
  %v766 = vld [vmem:[%s6 + $0x78] sm:$0xff]
  %767 = vmatprep.subr.mxu0 0.0
  %768 = vmatpush1.msra.mxu0 %v766
  %769 = vmatprep.subr.mxu0 0.0
  %770 = vmatpush1.msra.mxu0 %v765
  %771 = vmatprep.subr.mxu0 0.0
  %772 = vmatpush1.msra.mxu0 %v764
  %773 = vmatprep.subr.mxu0 0.0
  %774 = vmatpush1.msra.mxu0 %v763
  %775 = vmatprep.subr.mxu0 0.0
  %776 = vmatpush1.msra.mxu0 %v762
  %777 = vmatprep.subr.mxu0 0.0
  %778 = vmatpush1.msra.mxu0 %v761
  %779 = vmatprep.subr.mxu0 0.0
  %780 = vmatpush1.msra.mxu0 %v760
  %781 = vmatprep.subr.mxu0 0.0
  %782 = vmatpush1.msra.mxu0 %v759
  %783 = vmatprep.subr.mxu0 0.0
  %784 = vmatpush1.msra.mxu0 %v758
  %785 = vmatprep.subr.mxu0 0.0
  %786 = vmatpush1.msra.mxu0 %v757
  %787 = vmatprep.subr.mxu0 0.0
  %788 = vmatpush1.msra.mxu0 %v756
  %789 = vmatprep.subr.mxu0 0.0
  %790 = vmatpush1.msra.mxu0 %v755
  %791 = vmatprep.subr.mxu0 0.0
  %792 = vmatpush1.msra.mxu0 %v754
  %793 = vmatprep.subr.mxu0 0.0
  %794 = vmatpush1.msra.mxu0 %v753
  %795 = vmatprep.subr.mxu0 0.0
  %796 = vmatpush1.msra.mxu0 %v752
  %797 = vmatprep.subr.mxu0 0.0
  %798 = vmatpush1.msra.mxu0 %v751
  %799 = vmatprep.subr.mxu0 0.0
  %800 = vmatpush2.msra.mxu0 0.0
  %801 = vmatprep.subr.mxu0 0.0
  %802 = vmatpush2.msra.mxu0 0.0
  %803 = vmatprep.subr.mxu0 0.0
  %804 = vmatpush2.msra.mxu0 0.0
  %805 = vmatprep.subr.mxu0 0.0
  %806 = vmatpush2.msra.mxu0 0.0
  %807 = vmatprep.subr.mxu0 0.0
  %808 = vmatpush2.msra.mxu0 0.0
  %809 = vmatprep.subr.mxu0 0.0
  %810 = vmatpush2.msra.mxu0 0.0
  %811 = vmatprep.subr.mxu0 0.0
  %812 = vmatpush2.msra.mxu0 0.0
  %813 = vmatprep.subr.mxu0 0.0
  %814 = vmatpush2.msra.mxu0 0.0
  %815 = vmatprep.subr.mxu0 0.0
  %816 = vmatpush2.msra.mxu0 0.0
  %817 = vmatprep.subr.mxu0 0.0
  %818 = vmatpush2.msra.mxu0 0.0
  %819 = vmatprep.subr.mxu0 0.0
  %820 = vmatpush2.msra.mxu0 0.0
  %821 = vmatprep.subr.mxu0 0.0
  %822 = vmatpush2.msra.mxu0 0.0
  %823 = vmatprep.subr.mxu0 0.0
  %824 = vmatpush2.msra.mxu0 0.0
  %825 = vmatprep.subr.mxu0 0.0
  %826 = vmatpush2.msra.mxu0 0.0
  %827 = vmatprep.subr.mxu0 0.0
  %828 = vmatpush2.msra.mxu0 0.0
  %829 = vmatprep.subr.mxu0 0.0
  %830 = vmatpush2.msra.mxu0 0.0
  %831 = vmatprep.mubr.f32.mxu0 0.0
  %832 = vmatmul.mubr.f32.gmra.mxu0 %v719
  %v833 = vpop.f32.mrf.mxu0
  %v834 = vadd.f32 0.0, %v833
  %v835 = vpop.f32.mrf.mxu0
  %836 = vmatprep.mubr.f32.mxu0 0.0
  %837 = vmatmul.mubr.f32.gmra.mxu0 %v720
  %v838 = vpop.f32.mrf.mxu0
  %v839 = vadd.f32 0.0, %v838
  %v840 = vpop.f32.mrf.mxu0
  %841 = vmatprep.mubr.f32.mxu0 0.0
  %842 = vmatmul.mubr.f32.gmra.mxu0 %v721
  %v843 = vpop.f32.mrf.mxu0
  %v844 = vadd.f32 0.0, %v843
  %v845 = vpop.f32.mrf.mxu0
  %846 = vmatprep.mubr.f32.mxu0 0.0
  %847 = vmatmul.mubr.f32.gmra.mxu0 %v722
  %v848 = vpop.f32.mrf.mxu0
  %v849 = vadd.f32 0.0, %v848
  %v850 = vpop.f32.mrf.mxu0
  %851 = vmatprep.mubr.f32.mxu0 0.0
  %852 = vmatmul.mubr.f32.gmra.mxu0 %v723
  %v853 = vpop.f32.mrf.mxu0
  %v854 = vadd.f32 0.0, %v853
  %v855 = vpop.f32.mrf.mxu0
  %856 = vmatprep.mubr.f32.mxu0 0.0
  %857 = vmatmul.mubr.f32.gmra.mxu0 %v724
  %v858 = vpop.f32.mrf.mxu0
  %v859 = vadd.f32 0.0, %v858
  %v860 = vpop.f32.mrf.mxu0
  %861 = vmatprep.mubr.f32.mxu0 0.0
  %862 = vmatmul.mubr.f32.gmra.mxu0 %v725
  %v863 = vpop.f32.mrf.mxu0
  %v864 = vadd.f32 0.0, %v863
  %v865 = vpop.f32.mrf.mxu0
  %866 = vmatprep.mubr.f32.mxu0 0.0
  %867 = vmatmul.mubr.f32.gmra.mxu0 %v726
  %v868 = vpop.f32.mrf.mxu0
  %v869 = vadd.f32 0.0, %v868
  %v870 = vpop.f32.mrf.mxu0
  %871 = vmatprep.mubr.f32.mxu0 0.0
  %872 = vmatmul.mubr.f32.gmra.mxu0 %v727
  %v873 = vpop.f32.mrf.mxu0
  %v874 = vadd.f32 0.0, %v873
  %v875 = vpop.f32.mrf.mxu0
  %876 = vmatprep.mubr.f32.mxu0 0.0
  %877 = vmatmul.mubr.f32.gmra.mxu0 %v728
  %v878 = vpop.f32.mrf.mxu0
  %v879 = vadd.f32 0.0, %v878
  %v880 = vpop.f32.mrf.mxu0
  %881 = vmatprep.mubr.f32.mxu0 0.0
  %882 = vmatmul.mubr.f32.gmra.mxu0 %v729
  %v883 = vpop.f32.mrf.mxu0
  %v884 = vadd.f32 0.0, %v883
  %v885 = vpop.f32.mrf.mxu0
  %886 = vmatprep.mubr.f32.mxu0 0.0
  %887 = vmatmul.mubr.f32.gmra.mxu0 %v730
  %v888 = vpop.f32.mrf.mxu0
  %v889 = vadd.f32 0.0, %v888
  %v890 = vpop.f32.mrf.mxu0
  %891 = vmatprep.mubr.f32.mxu0 0.0
  %892 = vmatmul.mubr.f32.gmra.mxu0 %v731
  %v893 = vpop.f32.mrf.mxu0
  %v894 = vadd.f32 0.0, %v893
  %v895 = vpop.f32.mrf.mxu0
  %896 = vmatprep.mubr.f32.mxu0 0.0
  %897 = vmatmul.mubr.f32.gmra.mxu0 %v732
  %v898 = vpop.f32.mrf.mxu0
  %v899 = vadd.f32 0.0, %v898
  %v900 = vpop.f32.mrf.mxu0
  %901 = vmatprep.mubr.f32.mxu0 0.0
  %902 = vmatmul.mubr.f32.gmra.mxu0 %v733
  %v903 = vpop.f32.mrf.mxu0
  %v904 = vadd.f32 0.0, %v903
  %v905 = vpop.f32.mrf.mxu0
  %906 = vmatprep.mubr.f32.mxu0 0.0
  %907 = vmatmul.mubr.f32.gmra.mxu0 %v734
  %v908 = vpop.f32.mrf.mxu0
  %v909 = vadd.f32 0.0, %v908
  %v910 = vpop.f32.mrf.mxu0
  %911 = vmatprep.mubr.f32.mxu0 0.0
  %912 = vmatmul.mubr.f32.gmra.mxu0 %v735
  %v913 = vpop.f32.mrf.mxu0
  %v914 = vadd.f32 0.0, %v913
  %v915 = vpop.f32.mrf.mxu0
  %916 = vmatprep.mubr.f32.mxu0 0.0
  %917 = vmatmul.mubr.f32.gmra.mxu0 %v736
  %v918 = vpop.f32.mrf.mxu0
  %v919 = vadd.f32 0.0, %v918
  %v920 = vpop.f32.mrf.mxu0
  %921 = vmatprep.mubr.f32.mxu0 0.0
  %922 = vmatmul.mubr.f32.gmra.mxu0 %v737
  %v923 = vpop.f32.mrf.mxu0
  %v924 = vadd.f32 0.0, %v923
  %v925 = vpop.f32.mrf.mxu0
  %926 = vmatprep.mubr.f32.mxu0 0.0
  %927 = vmatmul.mubr.f32.gmra.mxu0 %v738
  %v928 = vpop.f32.mrf.mxu0
  %v929 = vadd.f32 0.0, %v928
  %v930 = vpop.f32.mrf.mxu0
  %931 = vmatprep.mubr.f32.mxu0 0.0
  %932 = vmatmul.mubr.f32.gmra.mxu0 %v739
  %v933 = vpop.f32.mrf.mxu0
  %v934 = vadd.f32 0.0, %v933
  %v935 = vpop.f32.mrf.mxu0
  %936 = vmatprep.mubr.f32.mxu0 0.0
  %937 = vmatmul.mubr.f32.gmra.mxu0 %v740
  %v938 = vpop.f32.mrf.mxu0
  %v939 = vadd.f32 0.0, %v938
  %v940 = vpop.f32.mrf.mxu0
  %941 = vmatprep.mubr.f32.mxu0 0.0
  %942 = vmatmul.mubr.f32.gmra.mxu0 %v741
  %v943 = vpop.f32.mrf.mxu0
  %v944 = vadd.f32 0.0, %v943
  %v945 = vpop.f32.mrf.mxu0
  %946 = vmatprep.mubr.f32.mxu0 0.0
  %947 = vmatmul.mubr.f32.gmra.mxu0 %v742
  %v948 = vpop.f32.mrf.mxu0
  %v949 = vadd.f32 0.0, %v948
  %v950 = vpop.f32.mrf.mxu0
  %951 = vmatprep.mubr.f32.mxu0 0.0
  %952 = vmatmul.mubr.f32.gmra.mxu0 %v743
  %v953 = vpop.f32.mrf.mxu0
  %v954 = vadd.f32 0.0, %v953
  %v955 = vpop.f32.mrf.mxu0
  %956 = vmatprep.mubr.f32.mxu0 0.0
  %957 = vmatmul.mubr.f32.gmra.mxu0 %v744
  %v958 = vpop.f32.mrf.mxu0
  %v959 = vadd.f32 0.0, %v958
  %v960 = vpop.f32.mrf.mxu0
  %961 = vmatprep.mubr.f32.mxu0 0.0
  %962 = vmatmul.mubr.f32.gmra.mxu0 %v745
  %v963 = vpop.f32.mrf.mxu0
  %v964 = vadd.f32 0.0, %v963
  %v965 = vpop.f32.mrf.mxu0
  %966 = vmatprep.mubr.f32.mxu0 0.0
  %967 = vmatmul.mubr.f32.gmra.mxu0 %v746
  %v968 = vpop.f32.mrf.mxu0
  %v969 = vadd.f32 0.0, %v968
  %v970 = vpop.f32.mrf.mxu0
  %971 = vmatprep.mubr.f32.mxu0 0.0
  %972 = vmatmul.mubr.f32.gmra.mxu0 %v747
  %v973 = vpop.f32.mrf.mxu0
  %v974 = vadd.f32 0.0, %v973
  %v975 = vpop.f32.mrf.mxu0
  %976 = vmatprep.mubr.f32.mxu0 0.0
  %977 = vmatmul.mubr.f32.gmra.mxu0 %v748
  %v978 = vpop.f32.mrf.mxu0
  %v979 = vadd.f32 0.0, %v978
  %v980 = vpop.f32.mrf.mxu0
  %981 = vmatprep.mubr.f32.mxu0 0.0
  %982 = vmatmul.mubr.f32.gmra.mxu0 %v749
  %v983 = vpop.f32.mrf.mxu0
  %v984 = vadd.f32 0.0, %v983
  %v985 = vpop.f32.mrf.mxu0
  %986 = vmatprep.mubr.f32.mxu0 0.0
  %987 = vmatmul.mubr.f32.gmra.mxu0 %v750
  %v988 = vpop.f32.mrf.mxu0
  %v989 = vadd.f32 0.0, %v988
  %v990 = vpop.f32.mrf.mxu0
  %991 = vdwg.mxu0
  %v992 = vadd.f32 %v561, %v834
  %v993 = vadd.f32 %v566, %v839
  %v994 = vadd.f32 %v571, %v844
  %v995 = vadd.f32 %v576, %v849
  %v996 = vadd.f32 %v581, %v854
  %v997 = vadd.f32 %v586, %v859
  %v998 = vadd.f32 %v591, %v864
  %v999 = vadd.f32 %v596, %v869
  %v1000 = vadd.f32 %v601, %v874
  %v1001 = vadd.f32 %v606, %v879
  %v1002 = vadd.f32 %v611, %v884
  %v1003 = vadd.f32 %v616, %v889
  %v1004 = vadd.f32 %v621, %v894
  %v1005 = vadd.f32 %v626, %v899
  %v1006 = vadd.f32 %v631, %v904
  %v1007 = vadd.f32 %v636, %v909
  %v1008 = vadd.f32 %v641, %v914
  %v1009 = vadd.f32 %v646, %v919
  %v1010 = vadd.f32 %v651, %v924
  %v1011 = vadd.f32 %v656, %v929
  %v1012 = vadd.f32 %v661, %v934
  %v1013 = vadd.f32 %v666, %v939
  %v1014 = vadd.f32 %v671, %v944
  %v1015 = vadd.f32 %v676, %v949
  %v1016 = vadd.f32 %v681, %v954
  %v1017 = vadd.f32 %v686, %v959
  %v1018 = vadd.f32 %v691, %v964
  %v1019 = vadd.f32 %v696, %v969
  %v1020 = vadd.f32 %v701, %v974
  %v1021 = vadd.f32 %v706, %v979
  %v1022 = vadd.f32 %v711, %v984
  %v1023 = vadd.f32 %v716, %v989
  %1024 = vst [vmem:[%s9] sm:$0xff] %v992
  %1025 = vst [vmem:[%s9 + $0x8] sm:$0xff] %v993
  %1026 = vst [vmem:[%s9 + $0x10] sm:$0xff] %v994
  %1027 = vst [vmem:[%s9 + $0x18] sm:$0xff] %v995
  %1028 = vst [vmem:[%s9 + $0x20] sm:$0xff] %v996
  %1029 = vst [vmem:[%s9 + $0x28] sm:$0xff] %v997
  %1030 = vst [vmem:[%s9 + $0x30] sm:$0xff] %v998
  %1031 = vst [vmem:[%s9 + $0x38] sm:$0xff] %v999
  %1032 = vst [vmem:[%s9 + $0x40] sm:$0xff] %v1000
  %1033 = vst [vmem:[%s9 + $0x48] sm:$0xff] %v1001
  %1034 = vst [vmem:[%s9 + $0x50] sm:$0xff] %v1002
  %1035 = vst [vmem:[%s9 + $0x58] sm:$0xff] %v1003
  %1036 = vst [vmem:[%s9 + $0x60] sm:$0xff] %v1004
  %1037 = vst [vmem:[%s9 + $0x68] sm:$0xff] %v1005
  %1038 = vst [vmem:[%s9 + $0x70] sm:$0xff] %v1006
  %1039 = vst [vmem:[%s9 + $0x78] sm:$0xff] %v1007
  %1040 = vst [vmem:[%s9 + $0x80] sm:$0xff] %v1008
  %1041 = vst [vmem:[%s9 + $0x88] sm:$0xff] %v1009
  %1042 = vst [vmem:[%s9 + $0x90] sm:$0xff] %v1010
  %1043 = vst [vmem:[%s9 + $0x98] sm:$0xff] %v1011
  %1044 = vst [vmem:[%s9 + $0xa0] sm:$0xff] %v1012
  %1045 = vst [vmem:[%s9 + $0xa8] sm:$0xff] %v1013
  %1046 = vst [vmem:[%s9 + $0xb0] sm:$0xff] %v1014
  %1047 = vst [vmem:[%s9 + $0xb8] sm:$0xff] %v1015
  %1048 = vst [vmem:[%s9 + $0xc0] sm:$0xff] %v1016
  %1049 = vst [vmem:[%s9 + $0xc8] sm:$0xff] %v1017
  %1050 = vst [vmem:[%s9 + $0xd0] sm:$0xff] %v1018
  %1051 = vst [vmem:[%s9 + $0xd8] sm:$0xff] %v1019
  %1052 = vst [vmem:[%s9 + $0xe0] sm:$0xff] %v1020
  %1053 = vst [vmem:[%s9 + $0xe8] sm:$0xff] %v1021
  %1054 = vst [vmem:[%s9 + $0xf0] sm:$0xff] %v1022
  %1055 = vst [vmem:[%s9 + $0xf8] sm:$0xff] %v1023
  // Predicated region
  $region34: #{gcn_forward.11} parent=0 // pred_check
    _
  $region35: #{gcn_forward.11} parent=0 // pred_check_branch
    %1057 = sbr.rel (0) target = $region37
  $region36: #{gcn_forward.11} parent=0 // pred_region
    _
  $region37: #{gcn_forward.11} parent=0 // pred_fallthru
    _
  // Predicated region
  $region38: #{gcn_forward.11} parent=0 // pred_check
    _
  $region39: #{gcn_forward.11} parent=0 // pred_check_branch
    %1059 = sbr.rel (0) target = $region41
  $region40: #{gcn_forward.11} parent=0 // pred_region
    _
  $region41: #{gcn_forward.11} parent=0 // pred_fallthru
    _
  // Predicated region
  $region42: #{gcn_forward.11} parent=0 // pred_check
    _
  $region43: #{gcn_forward.11} parent=0 // pred_check_branch
    %1061 = sbr.rel (0) target = $region45
  $region44: #{gcn_forward.11} parent=0 // pred_region
    _
  $region45: #{gcn_forward.11} parent=0 // pred_fallthru
    _
  // Predicated region
  $region46: #{gcn_forward.11} parent=0 // pred_check
    _
  $region47: #{gcn_forward.11} parent=0 // pred_check_branch
    %1063 = sbr.rel (0) target = $region49
  $region48: #{gcn_forward.11} parent=0 // pred_region
    _
  $region49: #{gcn_forward.11} parent=0 // pred_fallthru
    _

// kernel: gcn_forward.13
$region0: #{gcn_forward.13}
  #allocation0 [shape = 'u32[]', space=smem, size = 0x4, offset = 0x4, fixed_abs, tag = 'smem constant byte address 0x4 - core index']
  #allocation1 [shape = 'u32[144,128]{1,0:T(1,128)}', space=vmem, size = 0x12000, scoped, tag = 'internal scratch']
  %s0 = inlined_call_operand.vmem [shape: f32[256,128], index: 0, kind: input, shape index: {}]
  %s1 = inlined_call_operand.vmem [shape: f32[1,128], index: 1, kind: input, shape index: {}]
  %s2 = inlined_call_operand.vmem [shape: f32[1,128], index: 2, kind: input, shape index: {}]
  %s3 = inlined_call_operand.vmem [shape: f32[256,128], index: 3, kind: output, shape index: {}]
  %s4 = sld [smem:[#allocation0]]
  $region22: #{gcn_forward.13} parent=0
    _
  %s6 = ssub.s32 1, %s4
  %s7 = scalar_select 0, %s6, %s4
  // Predicated region
  $region2: #{gcn_forward.13} parent=0 // pred_check
    _
  $region3: #{gcn_forward.13} parent=0 // pred_check_branch
    %9 = sbr.rel (0) target = $region5
  $region4: #{gcn_forward.13} parent=0 // pred_region
    _
  $region5: #{gcn_forward.13} parent=0 // pred_fallthru
    _
  // Predicated region
  $region6: #{gcn_forward.13} parent=0 // pred_check
    _
  $region7: #{gcn_forward.13} parent=0 // pred_check_branch
    %11 = sbr.rel (0) target = $region9
  $region8: #{gcn_forward.13} parent=0 // pred_region
    _
  $region9: #{gcn_forward.13} parent=0 // pred_fallthru
    _
  // Predicated region
  $region10: #{gcn_forward.13} parent=0 // pred_check
    _
  $region11: #{gcn_forward.13} parent=0 // pred_check_branch
    %13 = sbr.rel (0) target = $region13
  $region12: #{gcn_forward.13} parent=0 // pred_region
    _
  $region13: #{gcn_forward.13} parent=0 // pred_fallthru
    _
  %v14 = vld [vmem:[%s0] sm:$0xff]
  %v15 = vld [vmem:[%s0 + $0x8] sm:$0xff]
  %v16 = vld [vmem:[%s0 + $0x10] sm:$0xff]
  %v17 = vld [vmem:[%s0 + $0x18] sm:$0xff]
  %v18 = vld [vmem:[%s0 + $0x20] sm:$0xff]
  %v19 = vld [vmem:[%s0 + $0x28] sm:$0xff]
  %v20 = vld [vmem:[%s0 + $0x30] sm:$0xff]
  %v21 = vld [vmem:[%s0 + $0x38] sm:$0xff]
  %v22 = vld [vmem:[%s0 + $0x40] sm:$0xff]
  %v23 = vld [vmem:[%s0 + $0x48] sm:$0xff]
  %v24 = vld [vmem:[%s0 + $0x50] sm:$0xff]
  %v25 = vld [vmem:[%s0 + $0x58] sm:$0xff]
  %v26 = vld [vmem:[%s0 + $0x60] sm:$0xff]
  %v27 = vld [vmem:[%s0 + $0x68] sm:$0xff]
  %v28 = vld [vmem:[%s0 + $0x70] sm:$0xff]
  %v29 = vld [vmem:[%s0 + $0x78] sm:$0xff]
  %v30 = vld [vmem:[%s0 + $0x80] sm:$0xff]
  %v31 = vld [vmem:[%s0 + $0x88] sm:$0xff]
  %v32 = vld [vmem:[%s0 + $0x90] sm:$0xff]
  %v33 = vld [vmem:[%s0 + $0x98] sm:$0xff]
  %v34 = vld [vmem:[%s0 + $0xa0] sm:$0xff]
  %v35 = vld [vmem:[%s0 + $0xa8] sm:$0xff]
  %v36 = vld [vmem:[%s0 + $0xb0] sm:$0xff]
  %v37 = vld [vmem:[%s0 + $0xb8] sm:$0xff]
  %v38 = vld [vmem:[%s0 + $0xc0] sm:$0xff]
  %v39 = vld [vmem:[%s0 + $0xc8] sm:$0xff]
  %v40 = vld [vmem:[%s0 + $0xd0] sm:$0xff]
  %v41 = vld [vmem:[%s0 + $0xd8] sm:$0xff]
  %v42 = vld [vmem:[%s0 + $0xe0] sm:$0xff]
  %v43 = vld [vmem:[%s0 + $0xe8] sm:$0xff]
  %v44 = vld [vmem:[%s0 + $0xf0] sm:$0xff]
  %v45 = vld [vmem:[%s0 + $0xf8] sm:$0xff]
  %v46 = vld [vmem:[%s1] sm:$0x1]
  %v48 = vlaneseq
  %v49 = vshrl.u32 %v48, 7
  %v50 = vsub.s32 0, %v49
  %v51 = vrot.slane %v46, %v50
  %v53 = vmul.f32 %v14, %v51
  %v54 = vmul.f32 %v15, %v51
  %v55 = vmul.f32 %v16, %v51
  %v56 = vmul.f32 %v17, %v51
  %v57 = vmul.f32 %v18, %v51
  %v58 = vmul.f32 %v19, %v51
  %v59 = vmul.f32 %v20, %v51
  %v60 = vmul.f32 %v21, %v51
  %v61 = vmul.f32 %v22, %v51
  %v62 = vmul.f32 %v23, %v51
  %v63 = vmul.f32 %v24, %v51
  %v64 = vmul.f32 %v25, %v51
  %v65 = vmul.f32 %v26, %v51
  %v66 = vmul.f32 %v27, %v51
  %v67 = vmul.f32 %v28, %v51
  %v68 = vmul.f32 %v29, %v51
  %v69 = vmul.f32 %v30, %v51
  %v70 = vmul.f32 %v31, %v51
  %v71 = vmul.f32 %v32, %v51
  %v72 = vmul.f32 %v33, %v51
  %v73 = vmul.f32 %v34, %v51
  %v74 = vmul.f32 %v35, %v51
  %v75 = vmul.f32 %v36, %v51
  %v76 = vmul.f32 %v37, %v51
  %v77 = vmul.f32 %v38, %v51
  %v78 = vmul.f32 %v39, %v51
  %v79 = vmul.f32 %v40, %v51
  %v80 = vmul.f32 %v41, %v51
  %v81 = vmul.f32 %v42, %v51
  %v82 = vmul.f32 %v43, %v51
  %v83 = vmul.f32 %v44, %v51
  %v84 = vmul.f32 %v45, %v51
  %v85 = vld [vmem:[%s2] sm:$0x1]
  %v87 = vlaneseq
  %v88 = vshrl.u32 %v87, 7
  %v89 = vsub.s32 0, %v88
  %v90 = vrot.slane %v85, %v89
  %v92 = vadd.f32 %v53, %v90
  %v93 = vadd.f32 %v54, %v90
  %v94 = vadd.f32 %v55, %v90
  %v95 = vadd.f32 %v56, %v90
  %v96 = vadd.f32 %v57, %v90
  %v97 = vadd.f32 %v58, %v90
  %v98 = vadd.f32 %v59, %v90
  %v99 = vadd.f32 %v60, %v90
  %v100 = vadd.f32 %v61, %v90
  %v101 = vadd.f32 %v62, %v90
  %v102 = vadd.f32 %v63, %v90
  %v103 = vadd.f32 %v64, %v90
  %v104 = vadd.f32 %v65, %v90
  %v105 = vadd.f32 %v66, %v90
  %v106 = vadd.f32 %v67, %v90
  %v107 = vadd.f32 %v68, %v90
  %v108 = vadd.f32 %v69, %v90
  %v109 = vadd.f32 %v70, %v90
  %v110 = vadd.f32 %v71, %v90
  %v111 = vadd.f32 %v72, %v90
  %v112 = vadd.f32 %v73, %v90
  %v113 = vadd.f32 %v74, %v90
  %v114 = vadd.f32 %v75, %v90
  %v115 = vadd.f32 %v76, %v90
  %v116 = vadd.f32 %v77, %v90
  %v117 = vadd.f32 %v78, %v90
  %v118 = vadd.f32 %v79, %v90
  %v119 = vadd.f32 %v80, %v90
  %v120 = vadd.f32 %v81, %v90
  %v121 = vadd.f32 %v82, %v90
  %v122 = vadd.f32 %v83, %v90
  %v123 = vadd.f32 %v84, %v90
  %v124 = vmax.f32 %v92, 0.0
  %v125 = vmax.f32 %v93, 0.0
  %v126 = vmax.f32 %v94, 0.0
  %v127 = vmax.f32 %v95, 0.0
  %v128 = vmax.f32 %v96, 0.0
  %v129 = vmax.f32 %v97, 0.0
  %v130 = vmax.f32 %v98, 0.0
  %v131 = vmax.f32 %v99, 0.0
  %v132 = vmax.f32 %v100, 0.0
  %v133 = vmax.f32 %v101, 0.0
  %v134 = vmax.f32 %v102, 0.0
  %v135 = vmax.f32 %v103, 0.0
  %v136 = vmax.f32 %v104, 0.0
  %v137 = vmax.f32 %v105, 0.0
  %v138 = vmax.f32 %v106, 0.0
  %v139 = vmax.f32 %v107, 0.0
  %v140 = vmax.f32 %v108, 0.0
  %v141 = vmax.f32 %v109, 0.0
  %v142 = vmax.f32 %v110, 0.0
  %v143 = vmax.f32 %v111, 0.0
  %v144 = vmax.f32 %v112, 0.0
  %v145 = vmax.f32 %v113, 0.0
  %v146 = vmax.f32 %v114, 0.0
  %v147 = vmax.f32 %v115, 0.0
  %v148 = vmax.f32 %v116, 0.0
  %v149 = vmax.f32 %v117, 0.0
  %v150 = vmax.f32 %v118, 0.0
  %v151 = vmax.f32 %v119, 0.0
  %v152 = vmax.f32 %v120, 0.0
  %v153 = vmax.f32 %v121, 0.0
  %v154 = vmax.f32 %v122, 0.0
  %v155 = vmax.f32 %v123, 0.0
  %156 = vst [vmem:[%s3] sm:$0xff] %v124
  %157 = vst [vmem:[%s3 + $0x8] sm:$0xff] %v125
  %158 = vst [vmem:[%s3 + $0x10] sm:$0xff] %v126
  %159 = vst [vmem:[%s3 + $0x18] sm:$0xff] %v127
  %160 = vst [vmem:[%s3 + $0x20] sm:$0xff] %v128
  %161 = vst [vmem:[%s3 + $0x28] sm:$0xff] %v129
  %162 = vst [vmem:[%s3 + $0x30] sm:$0xff] %v130
  %163 = vst [vmem:[%s3 + $0x38] sm:$0xff] %v131
  %164 = vst [vmem:[%s3 + $0x40] sm:$0xff] %v132
  %165 = vst [vmem:[%s3 + $0x48] sm:$0xff] %v133
  %166 = vst [vmem:[%s3 + $0x50] sm:$0xff] %v134
  %167 = vst [vmem:[%s3 + $0x58] sm:$0xff] %v135
  %168 = vst [vmem:[%s3 + $0x60] sm:$0xff] %v136
  %169 = vst [vmem:[%s3 + $0x68] sm:$0xff] %v137
  %170 = vst [vmem:[%s3 + $0x70] sm:$0xff] %v138
  %171 = vst [vmem:[%s3 + $0x78] sm:$0xff] %v139
  %172 = vst [vmem:[%s3 + $0x80] sm:$0xff] %v140
  %173 = vst [vmem:[%s3 + $0x88] sm:$0xff] %v141
  %174 = vst [vmem:[%s3 + $0x90] sm:$0xff] %v142
  %175 = vst [vmem:[%s3 + $0x98] sm:$0xff] %v143
  %176 = vst [vmem:[%s3 + $0xa0] sm:$0xff] %v144
  %177 = vst [vmem:[%s3 + $0xa8] sm:$0xff] %v145
  %178 = vst [vmem:[%s3 + $0xb0] sm:$0xff] %v146
  %179 = vst [vmem:[%s3 + $0xb8] sm:$0xff] %v147
  %180 = vst [vmem:[%s3 + $0xc0] sm:$0xff] %v148
  %181 = vst [vmem:[%s3 + $0xc8] sm:$0xff] %v149
  %182 = vst [vmem:[%s3 + $0xd0] sm:$0xff] %v150
  %183 = vst [vmem:[%s3 + $0xd8] sm:$0xff] %v151
  %184 = vst [vmem:[%s3 + $0xe0] sm:$0xff] %v152
  %185 = vst [vmem:[%s3 + $0xe8] sm:$0xff] %v153
  %186 = vst [vmem:[%s3 + $0xf0] sm:$0xff] %v154
  %187 = vst [vmem:[%s3 + $0xf8] sm:$0xff] %v155
  // Predicated region
  $region14: #{gcn_forward.13} parent=0 // pred_check
    _
  $region15: #{gcn_forward.13} parent=0 // pred_check_branch
    %189 = sbr.rel (0) target = $region17
  $region16: #{gcn_forward.13} parent=0 // pred_region
    _
  $region17: #{gcn_forward.13} parent=0 // pred_fallthru
    _
  // Predicated region
  $region18: #{gcn_forward.13} parent=0 // pred_check
    _
  $region19: #{gcn_forward.13} parent=0 // pred_check_branch
    %191 = sbr.rel (0) target = $region21
  $region20: #{gcn_forward.13} parent=0 // pred_region
    _
  $region21: #{gcn_forward.13} parent=0 // pred_fallthru
    _

</llo_original>
